<compile_context>
chip_gen: v6e
topology: v6e:2x2x1
jax: 0.10.0
libtpu: 0.0.40
codegen_flags: <defaults>
</compile_context>

<pallas_src>
import jax
import jax.numpy as jnp
from jax import lax
from jax.experimental import pallas as pl
from jax.experimental.pallas import tpu as pltpu

# ----- synthetic config (mirrors the Config fields MultiSpecExtModel reads) --
NUM_SPECS    = 2            # len(cfg.dataset.specs)
NUM_FRAMES   = 2            # cfg.dataset.spec_frames.num_frames
IN_CH        = 4            # spectrogram image channels
HSPEC        = 16           # spatial H
WSPEC        = 16           # spatial W
NUM_FEATURES = 32           # backbone.num_features (stand-in backbone)
POOL_TYPE    = "catavgmax"  # cfg.model.multi_spec.pool_type
ATTEN        = True         # cfg.model.multi_spec.atten
NUM_HEADS    = 8
NUM_DATASET  = 4            # get_dataset_num(cfg)
NUM_CLASSES  = 1            # cfg.model.multi_spec.num_classes
EMBED        = NUM_FEATURES * 2              # catavgmax doubles channels
HEAD_DIM     = EMBED // NUM_HEADS
FC_IN        = EMBED * 2 + NUM_DATASET       # atten doubles again, + domain id
BATCH        = 2

_SC   = NUM_SPECS * IN_CH                    # 8  : specs folded into channels
_SF   = NUM_SPECS * NUM_FEATURES             # 64 : both spec backbones side by side
_K72  = 9 * _SC                              # 72 : im2col contraction depth
SEQ   = HSPEC                                # attention sequence length (= H)
_GRP  = NUM_FRAMES * WSPEC                   # 32 : pooling group (frames x width)


# ---------------------------------------------------------------------------
# Fused kernel: conv (one matmul) + ReLU + folded spec-weighted sum +
# catavgmax pooling + multi-head attention + mean/max fusion + final Linear,
# for the WHOLE batch in a single invocation.
# ---------------------------------------------------------------------------
def fused_kernel(p_ref, w_ref, bconv_ref, win_ref, bin_ref,
                 wout_ref, bout_ref, d_ref, wfc_ref, bfc_ref, o_ref):
    b = d_ref.shape[0]
    scale = 1.0 / (float(HEAD_DIM) ** 0.5)

    # ---- backbone: both specs / frames / batch elements in ONE matmul ------
    conv = jnp.dot(p_ref[...], w_ref[...],
                   preferred_element_type=jnp.float32)            # (B*H*FR*W, 2F)
    conv = jnp.maximum(conv + bconv_ref[...], 0.0)                 # ReLU (spec_w folded)
    feat = conv[:, :NUM_FEATURES] + conv[:, NUM_FEATURES:]         # spec-weighted sum

    # ---- catavgmax over (frames x width); rows are grouped by (b, h) -------
    feat3 = feat.reshape(b * SEQ, _GRP, NUM_FEATURES)              # (B*S, 32, F)
    avg = jnp.mean(feat3, axis=1)
    mx = jnp.max(feat3, axis=1)
    xt = jnp.concatenate([avg, mx], axis=-1)                       # (B*S, E)

    # ---- multi-head self-attention (eval; dropout identity), batched heads --
    qkv = jnp.dot(xt, win_ref[...],
                  preferred_element_type=jnp.float32) + bin_ref[...]   # (B*S, 3E)

    def heads(off):        # -> (NH*B, S, D) using static lane slices only
        return jnp.stack(
            [qkv[:, off + h * HEAD_DIM: off + (h + 1) * HEAD_DIM]
             .reshape(b, SEQ, HEAD_DIM) for h in range(NUM_HEADS)],
            axis=0).reshape(NUM_HEADS * b, SEQ, HEAD_DIM)

    qh, kh, vh = heads(0), heads(EMBED), heads(2 * EMBED)
    s = jnp.einsum("hsd,htd->hst", qh, kh,
                   preferred_element_type=jnp.float32) * scale     # (NH*B, S, S)
    s = s - jnp.max(s, axis=-1, keepdims=True)
    p = jnp.exp(s)
    # NOTE: approx reciprocal (EUP slot) -> softmax rows sum to 1 only up to
    # ~2^-14 relative error; deliberate deviation from the exact reference.
    p = p * pl.reciprocal(jnp.sum(p, axis=-1, keepdims=True), approx=True)
    ao = jnp.einsum("hst,htd->hsd", p, vh,
                    preferred_element_type=jnp.float32)            # (NH*B, S, D)
    ao = jnp.concatenate(
        [ao[h * b:(h + 1) * b].reshape(b * SEQ, HEAD_DIM)
         for h in range(NUM_HEADS)], axis=-1)                      # (B*S, E)
    y = jnp.dot(ao, wout_ref[...],
                preferred_element_type=jnp.float32) + bout_ref[...]

    # ---- mean(y over seq) cat max(xt over seq) cat domain id -> final FC ---
    y_mean = jnp.mean(y.reshape(b, SEQ, EMBED), axis=1)            # (B, E)
    x_max = jnp.max(xt.reshape(b, SEQ, EMBED), axis=1)             # (B, E)
    z = jnp.concatenate([y_mean, x_max, d_ref[...]], axis=-1)      # (B, FC_IN)
    # NUM_CLASSES == 1: elementwise multiply + lane reduce, not an N=1 matmul.
    o_ref[...] = jnp.sum(z * wfc_ref[...], axis=-1, keepdims=True) + bfc_ref[...]


# ---------------------------------------------------------------------------
# Parameters (deterministic, synthetic — no checkpoint loading).
# ---------------------------------------------------------------------------
def init_params(key):
    ks = jax.random.split(key, 10)
    return {
        "conv_w": 0.1 * jax.random.normal(ks[0], (NUM_SPECS, NUM_FEATURES, IN_CH, 3, 3), jnp.float32),
        "conv_b": 0.1 * jax.random.normal(ks[1], (NUM_SPECS, NUM_FEATURES), jnp.float32),
        "spec_w": jax.nn.softmax(jax.random.normal(ks[2], (NUM_SPECS,), jnp.float32)),
        "in_proj_w": 0.1 * jax.random.normal(ks[3], (3 * EMBED, EMBED), jnp.float32),
        "in_proj_b": 0.1 * jax.random.normal(ks[4], (3 * EMBED,), jnp.float32),
        "out_proj_w": 0.1 * jax.random.normal(ks[5], (EMBED, EMBED), jnp.float32),
        "out_proj_b": 0.1 * jax.random.normal(ks[6], (EMBED,), jnp.float32),
        "fc_w": 0.1 * jax.random.normal(ks[7], (NUM_CLASSES, FC_IN), jnp.float32),
        "fc_b": 0.1 * jax.random.normal(ks[8], (NUM_CLASSES,), jnp.float32),
    }


# ---------------------------------------------------------------------------
# Full forward: layout glue (im2col, weight folding) in JAX; everything else
# in the single fused kernel.
# ---------------------------------------------------------------------------
def multi_spec_ext_forward(x, d, params):
    b = x.shape[0]

    # channels-last, specs folded into channels, SAME zero-pad, wrapper-side
    # im2col -> lane-dense (B*H*frames*W, 72) patch matrix.  Rows are ordered
    # (b, h, frame, w) so the in-kernel catavgmax pooling groups are contiguous.
    x6 = x.reshape(b, NUM_FRAMES, NUM_SPECS, IN_CH, HSPEC, WSPEC)
    x6 = jnp.transpose(x6, (0, 1, 4, 5, 2, 3)).reshape(
        b, NUM_FRAMES, HSPEC, WSPEC, _SC)
    xp = jnp.pad(x6, ((0, 0), (0, 0), (1, 1), (1, 1), (0, 0)))
    taps = [xp[:, :, kr:kr + HSPEC, kc:kc + WSPEC, :]
            for kr in range(3) for kc in range(3)]
    patches = jnp.concatenate(taps, axis=-1)                       # (B,FR,H,W,72)
    patches = jnp.transpose(patches, (0, 2, 1, 3, 4)).reshape(
        b * HSPEC * NUM_FRAMES * WSPEC, _K72)                      # (B*H*FR*W, 72)

    # Block-diagonal conv weights with the softmax spec weights folded in.
    # Valid because softmax weights are strictly positive:
    #   ReLU(x + b) * w == ReLU(w*x + w*b)   for w > 0.
    wsc = params["conv_w"] * params["spec_w"][:, None, None, None, None]
    wt = jnp.transpose(wsc, (3, 4, 0, 2, 1)).reshape(
        9, NUM_SPECS, IN_CH, NUM_FEATURES)                         # (tap, spec, c, f)
    w_blk = jnp.zeros((9, _SC, _SF), jnp.float32)
    for j in range(NUM_SPECS):
        w_blk = w_blk.at[:, j * IN_CH:(j + 1) * IN_CH,
                         j * NUM_FEATURES:(j + 1) * NUM_FEATURES].set(wt[:, j])
    w72 = w_blk.reshape(_K72, _SF)                                 # (72, 64)
    bconv = (params["conv_b"] * params["spec_w"][:, None]).reshape(1, _SF)

    win = params["in_proj_w"].T                                    # (E, 3E)
    bin_ = params["in_proj_b"][None, :]
    wout = params["out_proj_w"].T                                  # (E, E)
    bout = params["out_proj_b"][None, :]
    wfc = params["fc_w"]                                           # (NC, FC_IN)
    bfc = params["fc_b"][None, :]

    # Single kernel invocation (no grid): whole batch, all weights and
    # activations resident in VMEM (<1 MiB total); only (B, NC) hits HBM.
    return pl.pallas_call(
        fused_kernel,
        out_shape=jax.ShapeDtypeStruct((b, NUM_CLASSES), jnp.float32),
    )(patches, w72, bconv, win, bin_, wout, bout, d, wfc, bfc)


# ---------------------------------------------------------------------------
# Pure-JAX reference of the same math (unfused, for a sanity check).
# ---------------------------------------------------------------------------
def reference_forward(x, d, params):
    b = x.shape[0]
    outs = []
    for i in range(NUM_FRAMES * NUM_SPECS):
        j = i % NUM_SPECS
        o = lax.conv_general_dilated(x[:, i], params["conv_w"][j], (1, 1), "SAME",
                                     dimension_numbers=("NCHW", "OIHW", "NCHW"))
        outs.append(jnp.maximum(o + params["conv_b"][j][None, :, None, None], 0.0))
    frames = [sum(outs[f * NUM_SPECS + j] * params["spec_w"][j] for j in range(NUM_SPECS))
              for f in range(NUM_FRAMES)]
    xc = jnp.concatenate(frames, axis=3)                              # (B, F, H, Wt)
    xp = jnp.concatenate([jnp.mean(xc, axis=3), jnp.max(xc, axis=3)], axis=1)  # (B,2F,H)
    xt = jnp.transpose(xp, (0, 2, 1))                                 # (B, H, E)

    qkv = xt @ params["in_proj_w"].T + params["in_proj_b"]
    q, k, v = jnp.split(qkv, 3, axis=-1)

    def heads(t):
        return t.reshape(b, -1, NUM_HEADS, HEAD_DIM).transpose(0, 2, 1, 3)

    qh, kh, vh = heads(q), heads(k), heads(v)
    s = jnp.einsum("bnsh,bnth->bnst", qh, kh) / jnp.sqrt(float(HEAD_DIM))
    p = jax.nn.softmax(s, axis=-1)
    y = jnp.einsum("bnst,bnth->bnsh", p, vh).transpose(0, 2, 1, 3).reshape(b, -1, EMBED)
    y = y @ params["out_proj_w"].T + params["out_proj_b"]

    feat = jnp.concatenate([jnp.mean(y, axis=1), jnp.max(xp, axis=2)], axis=1)
    z = jnp.concatenate([feat, d], axis=1)
    return z @ params["fc_w"].T + params["fc_b"]


if __name__ == "__main__":
    key = jax.random.PRNGKey(0)
    kx, kp = jax.random.split(key, 2)
    x = jax.random.normal(kx, (BATCH, NUM_FRAMES * NUM_SPECS, IN_CH, HSPEC, WSPEC), jnp.float32)
    d = jax.nn.one_hot(jnp.array([0, 2]), NUM_DATASET, dtype=jnp.float32)
    params = init_params(kp)

    out = jax.jit(multi_spec_ext_forward)(x, d, params)
    out = jax.block_until_ready(out)
    ref = jax.block_until_ready(reference_forward(x, d, params))

    assert out.shape == (BATCH, NUM_CLASSES)
    if not bool(jnp.allclose(out, ref, rtol=1e-2, atol=1e-2)):
        raise AssertionError(f"kernel/reference mismatch:\nkernel={out}\nref={ref}")
    print("KERNEL_OK")
</pallas_src>

<mosaic_0001>
module attributes {stable_mosaic.version = 11 : i64} {
  func.func @fused_kernel(%arg0: memref<1024x72xf32, #tpu.memory_space<vmem>>, %arg1: memref<72x64xf32, #tpu.memory_space<vmem>>, %arg2: memref<1x64xf32, #tpu.memory_space<vmem>>, %arg3: memref<64x192xf32, #tpu.memory_space<vmem>>, %arg4: memref<1x192xf32, #tpu.memory_space<vmem>>, %arg5: memref<64x64xf32, #tpu.memory_space<vmem>>, %arg6: memref<1x64xf32, #tpu.memory_space<vmem>>, %arg7: memref<2x4xf32, #tpu.memory_space<vmem>>, %arg8: memref<1x132xf32, #tpu.memory_space<vmem>>, %arg9: memref<1x1xf32, #tpu.memory_space<vmem>>, %arg10: memref<2x1xf32, #tpu.memory_space<vmem>>) attributes {dimension_semantics = [], scalar_prefetch = 0 : i64, scratch_operands = 0 : i64, tpu.core_type = #tpu.core_type<tc>} {
    %c0 = arith.constant 0 : index
    %c0_0 = arith.constant 0 : index
    %0 = vector.load %arg0[%c0, %c0_0] : memref<1024x72xf32, #tpu.memory_space<vmem>>, vector<1024x72xf32>
    %c0_1 = arith.constant 0 : index
    %c0_2 = arith.constant 0 : index
    %1 = vector.load %arg1[%c0_1, %c0_2] : memref<72x64xf32, #tpu.memory_space<vmem>>, vector<72x64xf32>
    %cst = arith.constant dense<0.000000e+00> : vector<1024x64xf32>
    %2 = tpu.matmul %0, %1, %cst {dimension_numbers = #tpu.dot_dimension_numbers<[1], [0], [0], [1], [0, 0, 1, 1], [], []>} : vector<1024x72xf32>, vector<72x64xf32>, vector<1024x64xf32> -> vector<1024x64xf32>
    %c0_3 = arith.constant 0 : index
    %c0_4 = arith.constant 0 : index
    %3 = vector.load %arg2[%c0_3, %c0_4] : memref<1x64xf32, #tpu.memory_space<vmem>>, vector<1x64xf32>
    %4 = vector.broadcast %3 : vector<1x64xf32> to vector<1024x64xf32>
    %5 = arith.addf %2, %4 : vector<1024x64xf32>
    %cst_5 = arith.constant 0.000000e+00 : f32
    %6 = vector.broadcast %cst_5 : f32 to vector<1024x64xf32>
    %7 = arith.maximumf %5, %6 : vector<1024x64xf32>
    %8 = vector.extract_strided_slice %7 {offsets = [0, 0], sizes = [1024, 32], strides = [1, 1]} : vector<1024x64xf32> to vector<1024x32xf32>
    %9 = vector.extract_strided_slice %7 {offsets = [0, 32], sizes = [1024, 32], strides = [1, 1]} : vector<1024x64xf32> to vector<1024x32xf32>
    %10 = arith.addf %8, %9 : vector<1024x32xf32>
    %11 = vector.shape_cast %10 : vector<1024x32xf32> to vector<32x32x32xf32>
    %cst_6 = arith.constant dense<0.000000e+00> : vector<32x32xf32>
    %12 = vector.multi_reduction <add>, %11, %cst_6 [1] : vector<32x32x32xf32> to vector<32x32xf32>
    %cst_7 = arith.constant 3.200000e+01 : f32
    %13 = vector.broadcast %cst_7 : f32 to vector<32x32xf32>
    %14 = arith.divf %12, %13 : vector<32x32xf32>
    %cst_8 = arith.constant dense<0xFF800000> : vector<32x32xf32>
    %15 = vector.multi_reduction <maximumf>, %11, %cst_8 [1] : vector<32x32x32xf32> to vector<32x32xf32>
    %16 = tpu.concatenate %14, %15 in 1 : vector<32x32xf32>, vector<32x32xf32> -> vector<32x64xf32>
    %c0_9 = arith.constant 0 : index
    %c0_10 = arith.constant 0 : index
    %17 = vector.load %arg3[%c0_9, %c0_10] : memref<64x192xf32, #tpu.memory_space<vmem>>, vector<64x192xf32>
    %cst_11 = arith.constant dense<0.000000e+00> : vector<32x192xf32>
    %18 = tpu.matmul %16, %17, %cst_11 {dimension_numbers = #tpu.dot_dimension_numbers<[1], [0], [0], [1], [0, 0, 1, 1], [], []>} : vector<32x64xf32>, vector<64x192xf32>, vector<32x192xf32> -> vector<32x192xf32>
    %c0_12 = arith.constant 0 : index
    %c0_13 = arith.constant 0 : index
    %19 = vector.load %arg4[%c0_12, %c0_13] : memref<1x192xf32, #tpu.memory_space<vmem>>, vector<1x192xf32>
    %20 = vector.broadcast %19 : vector<1x192xf32> to vector<32x192xf32>
    %21 = arith.addf %18, %20 : vector<32x192xf32>
    %22 = vector.extract_strided_slice %21 {offsets = [0, 0], sizes = [32, 8], strides = [1, 1]} : vector<32x192xf32> to vector<32x8xf32>
    %23 = vector.shape_cast %22 : vector<32x8xf32> to vector<2x16x8xf32>
    %24 = vector.extract_strided_slice %21 {offsets = [0, 8], sizes = [32, 8], strides = [1, 1]} : vector<32x192xf32> to vector<32x8xf32>
    %25 = vector.shape_cast %24 : vector<32x8xf32> to vector<2x16x8xf32>
    %26 = vector.extract_strided_slice %21 {offsets = [0, 16], sizes = [32, 8], strides = [1, 1]} : vector<32x192xf32> to vector<32x8xf32>
    %27 = vector.shape_cast %26 : vector<32x8xf32> to vector<2x16x8xf32>
    %28 = vector.extract_strided_slice %21 {offsets = [0, 24], sizes = [32, 8], strides = [1, 1]} : vector<32x192xf32> to vector<32x8xf32>
    %29 = vector.shape_cast %28 : vector<32x8xf32> to vector<2x16x8xf32>
    %30 = vector.extract_strided_slice %21 {offsets = [0, 32], sizes = [32, 8], strides = [1, 1]} : vector<32x192xf32> to vector<32x8xf32>
    %31 = vector.shape_cast %30 : vector<32x8xf32> to vector<2x16x8xf32>
    %32 = vector.extract_strided_slice %21 {offsets = [0, 40], sizes = [32, 8], strides = [1, 1]} : vector<32x192xf32> to vector<32x8xf32>
    %33 = vector.shape_cast %32 : vector<32x8xf32> to vector<2x16x8xf32>
    %34 = vector.extract_strided_slice %21 {offsets = [0, 48], sizes = [32, 8], strides = [1, 1]} : vector<32x192xf32> to vector<32x8xf32>
    %35 = vector.shape_cast %34 : vector<32x8xf32> to vector<2x16x8xf32>
    %36 = vector.extract_strided_slice %21 {offsets = [0, 56], sizes = [32, 8], strides = [1, 1]} : vector<32x192xf32> to vector<32x8xf32>
    %37 = vector.shape_cast %36 : vector<32x8xf32> to vector<2x16x8xf32>
    %38 = vector.shape_cast %23 : vector<2x16x8xf32> to vector<1x2x16x8xf32>
    %39 = vector.shape_cast %25 : vector<2x16x8xf32> to vector<1x2x16x8xf32>
    %40 = vector.shape_cast %27 : vector<2x16x8xf32> to vector<1x2x16x8xf32>
    %41 = vector.shape_cast %29 : vector<2x16x8xf32> to vector<1x2x16x8xf32>
    %42 = vector.shape_cast %31 : vector<2x16x8xf32> to vector<1x2x16x8xf32>
    %43 = vector.shape_cast %33 : vector<2x16x8xf32> to vector<1x2x16x8xf32>
    %44 = vector.shape_cast %35 : vector<2x16x8xf32> to vector<1x2x16x8xf32>
    %45 = vector.shape_cast %37 : vector<2x16x8xf32> to vector<1x2x16x8xf32>
    %46 = tpu.concatenate %38, %39, %40, %41, %42, %43, %44, %45 in 0 : vector<1x2x16x8xf32>, vector<1x2x16x8xf32>, vector<1x2x16x8xf32>, vector<1x2x16x8xf32>, vector<1x2x16x8xf32>, vector<1x2x16x8xf32>, vector<1x2x16x8xf32>, vector<1x2x16x8xf32> -> vector<8x2x16x8xf32>
    %47 = vector.shape_cast %46 : vector<8x2x16x8xf32> to vector<16x16x8xf32>
    %48 = vector.extract_strided_slice %21 {offsets = [0, 64], sizes = [32, 8], strides = [1, 1]} : vector<32x192xf32> to vector<32x8xf32>
    %49 = vector.shape_cast %48 : vector<32x8xf32> to vector<2x16x8xf32>
    %50 = vector.extract_strided_slice %21 {offsets = [0, 72], sizes = [32, 8], strides = [1, 1]} : vector<32x192xf32> to vector<32x8xf32>
    %51 = vector.shape_cast %50 : vector<32x8xf32> to vector<2x16x8xf32>
    %52 = vector.extract_strided_slice %21 {offsets = [0, 80], sizes = [32, 8], strides = [1, 1]} : vector<32x192xf32> to vector<32x8xf32>
    %53 = vector.shape_cast %52 : vector<32x8xf32> to vector<2x16x8xf32>
    %54 = vector.extract_strided_slice %21 {offsets = [0, 88], sizes = [32, 8], strides = [1, 1]} : vector<32x192xf32> to vector<32x8xf32>
    %55 = vector.shape_cast %54 : vector<32x8xf32> to vector<2x16x8xf32>
    %56 = vector.extract_strided_slice %21 {offsets = [0, 96], sizes = [32, 8], strides = [1, 1]} : vector<32x192xf32> to vector<32x8xf32>
    %57 = vector.shape_cast %56 : vector<32x8xf32> to vector<2x16x8xf32>
    %58 = vector.extract_strided_slice %21 {offsets = [0, 104], sizes = [32, 8], strides = [1, 1]} : vector<32x192xf32> to vector<32x8xf32>
    %59 = vector.shape_cast %58 : vector<32x8xf32> to vector<2x16x8xf32>
    %60 = vector.extract_strided_slice %21 {offsets = [0, 112], sizes = [32, 8], strides = [1, 1]} : vector<32x192xf32> to vector<32x8xf32>
    %61 = vector.shape_cast %60 : vector<32x8xf32> to vector<2x16x8xf32>
    %62 = vector.extract_strided_slice %21 {offsets = [0, 120], sizes = [32, 8], strides = [1, 1]} : vector<32x192xf32> to vector<32x8xf32>
    %63 = vector.shape_cast %62 : vector<32x8xf32> to vector<2x16x8xf32>
    %64 = vector.shape_cast %49 : vector<2x16x8xf32> to vector<1x2x16x8xf32>
    %65 = vector.shape_cast %51 : vector<2x16x8xf32> to vector<1x2x16x8xf32>
    %66 = vector.shape_cast %53 : vector<2x16x8xf32> to vector<1x2x16x8xf32>
    %67 = vector.shape_cast %55 : vector<2x16x8xf32> to vector<1x2x16x8xf32>
    %68 = vector.shape_cast %57 : vector<2x16x8xf32> to vector<1x2x16x8xf32>
    %69 = vector.shape_cast %59 : vector<2x16x8xf32> to vector<1x2x16x8xf32>
    %70 = vector.shape_cast %61 : vector<2x16x8xf32> to vector<1x2x16x8xf32>
    %71 = vector.shape_cast %63 : vector<2x16x8xf32> to vector<1x2x16x8xf32>
    %72 = tpu.concatenate %64, %65, %66, %67, %68, %69, %70, %71 in 0 : vector<1x2x16x8xf32>, vector<1x2x16x8xf32>, vector<1x2x16x8xf32>, vector<1x2x16x8xf32>, vector<1x2x16x8xf32>, vector<1x2x16x8xf32>, vector<1x2x16x8xf32>, vector<1x2x16x8xf32> -> vector<8x2x16x8xf32>
    %73 = vector.shape_cast %72 : vector<8x2x16x8xf32> to vector<16x16x8xf32>
    %74 = vector.extract_strided_slice %21 {offsets = [0, 128], sizes = [32, 8], strides = [1, 1]} : vector<32x192xf32> to vector<32x8xf32>
    %75 = vector.shape_cast %74 : vector<32x8xf32> to vector<2x16x8xf32>
    %76 = vector.extract_strided_slice %21 {offsets = [0, 136], sizes = [32, 8], strides = [1, 1]} : vector<32x192xf32> to vector<32x8xf32>
    %77 = vector.shape_cast %76 : vector<32x8xf32> to vector<2x16x8xf32>
    %78 = vector.extract_strided_slice %21 {offsets = [0, 144], sizes = [32, 8], strides = [1, 1]} : vector<32x192xf32> to vector<32x8xf32>
    %79 = vector.shape_cast %78 : vector<32x8xf32> to vector<2x16x8xf32>
    %80 = vector.extract_strided_slice %21 {offsets = [0, 152], sizes = [32, 8], strides = [1, 1]} : vector<32x192xf32> to vector<32x8xf32>
    %81 = vector.shape_cast %80 : vector<32x8xf32> to vector<2x16x8xf32>
    %82 = vector.extract_strided_slice %21 {offsets = [0, 160], sizes = [32, 8], strides = [1, 1]} : vector<32x192xf32> to vector<32x8xf32>
    %83 = vector.shape_cast %82 : vector<32x8xf32> to vector<2x16x8xf32>
    %84 = vector.extract_strided_slice %21 {offsets = [0, 168], sizes = [32, 8], strides = [1, 1]} : vector<32x192xf32> to vector<32x8xf32>
    %85 = vector.shape_cast %84 : vector<32x8xf32> to vector<2x16x8xf32>
    %86 = vector.extract_strided_slice %21 {offsets = [0, 176], sizes = [32, 8], strides = [1, 1]} : vector<32x192xf32> to vector<32x8xf32>
    %87 = vector.shape_cast %86 : vector<32x8xf32> to vector<2x16x8xf32>
    %88 = vector.extract_strided_slice %21 {offsets = [0, 184], sizes = [32, 8], strides = [1, 1]} : vector<32x192xf32> to vector<32x8xf32>
    %89 = vector.shape_cast %88 : vector<32x8xf32> to vector<2x16x8xf32>
    %90 = vector.shape_cast %75 : vector<2x16x8xf32> to vector<1x2x16x8xf32>
    %91 = vector.shape_cast %77 : vector<2x16x8xf32> to vector<1x2x16x8xf32>
    %92 = vector.shape_cast %79 : vector<2x16x8xf32> to vector<1x2x16x8xf32>
    %93 = vector.shape_cast %81 : vector<2x16x8xf32> to vector<1x2x16x8xf32>
    %94 = vector.shape_cast %83 : vector<2x16x8xf32> to vector<1x2x16x8xf32>
    %95 = vector.shape_cast %85 : vector<2x16x8xf32> to vector<1x2x16x8xf32>
    %96 = vector.shape_cast %87 : vector<2x16x8xf32> to vector<1x2x16x8xf32>
    %97 = vector.shape_cast %89 : vector<2x16x8xf32> to vector<1x2x16x8xf32>
    %98 = tpu.concatenate %90, %91, %92, %93, %94, %95, %96, %97 in 0 : vector<1x2x16x8xf32>, vector<1x2x16x8xf32>, vector<1x2x16x8xf32>, vector<1x2x16x8xf32>, vector<1x2x16x8xf32>, vector<1x2x16x8xf32>, vector<1x2x16x8xf32>, vector<1x2x16x8xf32> -> vector<8x2x16x8xf32>
    %99 = vector.shape_cast %98 : vector<8x2x16x8xf32> to vector<16x16x8xf32>
    "tpu.trace_start"() <{level = 10 : i32, message = "hsd,htd->hst"}> : () -> ()
    %cst_14 = arith.constant dense<0.000000e+00> : vector<16x16x16xf32>
    %100 = tpu.matmul %47, %73, %cst_14 {dimension_numbers = #tpu.dot_dimension_numbers<[2], [2], [1], [1], [0, 0, 0, 1, 1, 1], [0], [0]>} : vector<16x16x8xf32>, vector<16x16x8xf32>, vector<16x16x16xf32> -> vector<16x16x16xf32>
    "tpu.trace_stop"() : () -> ()
    %cst_15 = arith.constant 0.353553385 : f32
    %101 = vector.broadcast %cst_15 : f32 to vector<16x16x16xf32>
    %102 = arith.mulf %100, %101 : vector<16x16x16xf32>
    %cst_16 = arith.constant dense<0xFF800000> : vector<16x16xf32>
    %103 = vector.multi_reduction <maximumf>, %102, %cst_16 [2] : vector<16x16x16xf32> to vector<16x16xf32>
    %104 = vector.shape_cast %103 : vector<16x16xf32> to vector<16x16x1xf32>
    %105 = vector.broadcast %104 : vector<16x16x1xf32> to vector<16x16x16xf32>
    %106 = arith.subf %102, %105 : vector<16x16x16xf32>
    %107 = math.exp %106 : vector<16x16x16xf32>
    %cst_17 = arith.constant dense<0.000000e+00> : vector<16x16xf32>
    %108 = vector.multi_reduction <add>, %107, %cst_17 [2] : vector<16x16x16xf32> to vector<16x16xf32>
    %109 = vector.shape_cast %108 : vector<16x16xf32> to vector<16x16x1xf32>
    %110 = tpu.reciprocal %109 {approx = true} : vector<16x16x1xf32> -> vector<16x16x1xf32>
    %111 = vector.broadcast %110 : vector<16x16x1xf32> to vector<16x16x16xf32>
    %112 = arith.mulf %107, %111 : vector<16x16x16xf32>
    "tpu.trace_start"() <{level = 10 : i32, message = "hst,htd->hsd"}> : () -> ()
    %cst_18 = arith.constant dense<0.000000e+00> : vector<16x16x8xf32>
    %113 = tpu.matmul %112, %99, %cst_18 {dimension_numbers = #tpu.dot_dimension_numbers<[2], [1], [1], [2], [0, 0, 0, 1, 1, 2], [0], [0]>} : vector<16x16x16xf32>, vector<16x16x8xf32>, vector<16x16x8xf32> -> vector<16x16x8xf32>
    "tpu.trace_stop"() : () -> ()
    %114 = vector.extract_strided_slice %113 {offsets = [0, 0, 0], sizes = [2, 16, 8], strides = [1, 1, 1]} : vector<16x16x8xf32> to vector<2x16x8xf32>
    %115 = vector.shape_cast %114 : vector<2x16x8xf32> to vector<32x8xf32>
    %116 = vector.extract_strided_slice %113 {offsets = [2, 0, 0], sizes = [2, 16, 8], strides = [1, 1, 1]} : vector<16x16x8xf32> to vector<2x16x8xf32>
    %117 = vector.shape_cast %116 : vector<2x16x8xf32> to vector<32x8xf32>
    %118 = vector.extract_strided_slice %113 {offsets = [4, 0, 0], sizes = [2, 16, 8], strides = [1, 1, 1]} : vector<16x16x8xf32> to vector<2x16x8xf32>
    %119 = vector.shape_cast %118 : vector<2x16x8xf32> to vector<32x8xf32>
    %120 = vector.extract_strided_slice %113 {offsets = [6, 0, 0], sizes = [2, 16, 8], strides = [1, 1, 1]} : vector<16x16x8xf32> to vector<2x16x8xf32>
    %121 = vector.shape_cast %120 : vector<2x16x8xf32> to vector<32x8xf32>
    %122 = vector.extract_strided_slice %113 {offsets = [8, 0, 0], sizes = [2, 16, 8], strides = [1, 1, 1]} : vector<16x16x8xf32> to vector<2x16x8xf32>
    %123 = vector.shape_cast %122 : vector<2x16x8xf32> to vector<32x8xf32>
    %124 = vector.extract_strided_slice %113 {offsets = [10, 0, 0], sizes = [2, 16, 8], strides = [1, 1, 1]} : vector<16x16x8xf32> to vector<2x16x8xf32>
    %125 = vector.shape_cast %124 : vector<2x16x8xf32> to vector<32x8xf32>
    %126 = vector.extract_strided_slice %113 {offsets = [12, 0, 0], sizes = [2, 16, 8], strides = [1, 1, 1]} : vector<16x16x8xf32> to vector<2x16x8xf32>
    %127 = vector.shape_cast %126 : vector<2x16x8xf32> to vector<32x8xf32>
    %128 = vector.extract_strided_slice %113 {offsets = [14, 0, 0], sizes = [2, 16, 8], strides = [1, 1, 1]} : vector<16x16x8xf32> to vector<2x16x8xf32>
    %129 = vector.shape_cast %128 : vector<2x16x8xf32> to vector<32x8xf32>
    %130 = tpu.concatenate %115, %117, %119, %121, %123, %125, %127, %129 in 1 : vector<32x8xf32>, vector<32x8xf32>, vector<32x8xf32>, vector<32x8xf32>, vector<32x8xf32>, vector<32x8xf32>, vector<32x8xf32>, vector<32x8xf32> -> vector<32x64xf32>
    %c0_19 = arith.constant 0 : index
    %c0_20 = arith.constant 0 : index
    %131 = vector.load %arg5[%c0_19, %c0_20] : memref<64x64xf32, #tpu.memory_space<vmem>>, vector<64x64xf32>
    %cst_21 = arith.constant dense<0.000000e+00> : vector<32x64xf32>
    %132 = tpu.matmul %130, %131, %cst_21 {dimension_numbers = #tpu.dot_dimension_numbers<[1], [0], [0], [1], [0, 0, 1, 1], [], []>} : vector<32x64xf32>, vector<64x64xf32>, vector<32x64xf32> -> vector<32x64xf32>
    %c0_22 = arith.constant 0 : index
    %c0_23 = arith.constant 0 : index
    %133 = vector.load %arg6[%c0_22, %c0_23] : memref<1x64xf32, #tpu.memory_space<vmem>>, vector<1x64xf32>
    %134 = vector.broadcast %133 : vector<1x64xf32> to vector<32x64xf32>
    %135 = arith.addf %132, %134 : vector<32x64xf32>
    %136 = vector.shape_cast %135 : vector<32x64xf32> to vector<2x16x64xf32>
    %cst_24 = arith.constant dense<0.000000e+00> : vector<2x64xf32>
    %137 = vector.multi_reduction <add>, %136, %cst_24 [1] : vector<2x16x64xf32> to vector<2x64xf32>
    %cst_25 = arith.constant 1.600000e+01 : f32
    %138 = vector.broadcast %cst_25 : f32 to vector<2x64xf32>
    %139 = arith.divf %137, %138 : vector<2x64xf32>
    %140 = vector.shape_cast %16 : vector<32x64xf32> to vector<2x16x64xf32>
    %cst_26 = arith.constant dense<0xFF800000> : vector<2x64xf32>
    %141 = vector.multi_reduction <maximumf>, %140, %cst_26 [1] : vector<2x16x64xf32> to vector<2x64xf32>
    %c0_27 = arith.constant 0 : index
    %c0_28 = arith.constant 0 : index
    %142 = vector.load %arg7[%c0_27, %c0_28] : memref<2x4xf32, #tpu.memory_space<vmem>>, vector<2x4xf32>
    %143 = tpu.concatenate %139, %141, %142 in 1 : vector<2x64xf32>, vector<2x64xf32>, vector<2x4xf32> -> vector<2x132xf32>
    %c0_29 = arith.constant 0 : index
    %c0_30 = arith.constant 0 : index
    %144 = vector.load %arg8[%c0_29, %c0_30] : memref<1x132xf32, #tpu.memory_space<vmem>>, vector<1x132xf32>
    %145 = vector.broadcast %144 : vector<1x132xf32> to vector<2x132xf32>
    %146 = arith.mulf %143, %145 : vector<2x132xf32>
    %cst_31 = arith.constant dense<0.000000e+00> : vector<2xf32>
    %147 = vector.multi_reduction <add>, %146, %cst_31 [1] : vector<2x132xf32> to vector<2xf32>
    %148 = vector.shape_cast %147 : vector<2xf32> to vector<2x1xf32>
    %c0_32 = arith.constant 0 : index
    %c0_33 = arith.constant 0 : index
    %149 = vector.load %arg9[%c0_32, %c0_33] : memref<1x1xf32, #tpu.memory_space<vmem>>, vector<1x1xf32>
    %150 = vector.broadcast %149 : vector<1x1xf32> to vector<2x1xf32>
    %151 = arith.addf %148, %150 : vector<2x1xf32>
    %c0_34 = arith.constant 0 : index
    %c0_35 = arith.constant 0 : index
    %152 = vector.load %arg10[%c0_34, %c0_35] : memref<2x1xf32, #tpu.memory_space<vmem>>, vector<2x1xf32>
    tpu.vector_store %arg10[%c0_34, %c0_35], %151 {strides = array<i32>} : memref<2x1xf32, #tpu.memory_space<vmem>>, vector<2x1xf32>,
    return
  }
}

</mosaic_0001>

<llo_original>
// kernel: multi_spec_ext_forward.1
$region0: #{multi_spec_ext_forward.1}
  #allocation0 [shape = 'u32[]', space=smem, size = 0x4, offset = 0x4, fixed_abs, tag = 'smem constant byte address 0x4 - core index']
  #allocation1 [shape = 'u32[144,128]{1,0:T(1,128)}', space=vmem, size = 0x12000, scoped, tag = 'internal scratch']
  #allocation2 [shape = 'f32[1,1]{1,0:T(1,128)S(1)}', space=vmem, size = 0x200, scoped, tag = 'scoped memory for multi_spec_ext_forward.1']
  %s0 = inlined_call_operand.vmem [shape: f32[1024,72], index: 0, kind: input, shape index: {}]
  %s1 = inlined_call_operand.vmem [shape: f32[72,64], index: 1, kind: input, shape index: {}]
  %s2 = inlined_call_operand.vmem [shape: f32[1,64], index: 2, kind: input, shape index: {}]
  %s3 = inlined_call_operand.vmem [shape: f32[64,192], index: 3, kind: input, shape index: {}]
  %s4 = inlined_call_operand.vmem [shape: f32[1,192], index: 4, kind: input, shape index: {}]
  %s5 = inlined_call_operand.vmem [shape: f32[64,64], index: 5, kind: input, shape index: {}]
  %s6 = inlined_call_operand.vmem [shape: f32[1,64], index: 6, kind: input, shape index: {}]
  %s7 = inlined_call_operand.vmem [shape: f32[2,4], index: 7, kind: input, shape index: {}]
  %s8 = inlined_call_operand.vmem [shape: f32[1,132], index: 8, kind: input, shape index: {}]
  %s9 = inlined_call_operand.<no memory space> [shape: f32[1,1], index: 9, kind: input, shape index: {}]
  %s10 = inlined_call_operand.vmem [shape: f32[2,1], index: 10, kind: output, shape index: {}]
  %s11 = sld [smem:[#allocation0]]
  $region50: #{multi_spec_ext_forward.1} parent=0
    _
  %s13 = ssub.s32 1, %s11
  %s14 = scalar_select 0, %s13, %s11
  %v15 = vstv %s9
  %16 = vst [vmem:[#allocation2] sm:$0x1] %v15
  // Predicated region
  $region2: #{multi_spec_ext_forward.1} parent=0 // pred_check
    _
  $region3: #{multi_spec_ext_forward.1} parent=0 // pred_check_branch
    %18 = sbr.rel (0) target = $region5
  $region4: #{multi_spec_ext_forward.1} parent=0 // pred_region
    _
  $region5: #{multi_spec_ext_forward.1} parent=0 // pred_fallthru
    _
  // Predicated region
  $region6: #{multi_spec_ext_forward.1} parent=0 // pred_check
    _
  $region7: #{multi_spec_ext_forward.1} parent=0 // pred_check_branch
    %20 = sbr.rel (0) target = $region9
  $region8: #{multi_spec_ext_forward.1} parent=0 // pred_region
    _
  $region9: #{multi_spec_ext_forward.1} parent=0 // pred_fallthru
    _
  // Predicated region
  $region10: #{multi_spec_ext_forward.1} parent=0 // pred_check
    _
  $region11: #{multi_spec_ext_forward.1} parent=0 // pred_check_branch
    %22 = sbr.rel (0) target = $region13
  $region12: #{multi_spec_ext_forward.1} parent=0 // pred_region
    _
  $region13: #{multi_spec_ext_forward.1} parent=0 // pred_fallthru
    _
  // Predicated region
  $region14: #{multi_spec_ext_forward.1} parent=0 // pred_check
    _
  $region15: #{multi_spec_ext_forward.1} parent=0 // pred_check_branch
    %24 = sbr.rel (0) target = $region17
  $region16: #{multi_spec_ext_forward.1} parent=0 // pred_region
    _
  $region17: #{multi_spec_ext_forward.1} parent=0 // pred_fallthru
    _
  // Predicated region
  $region18: #{multi_spec_ext_forward.1} parent=0 // pred_check
    _
  $region19: #{multi_spec_ext_forward.1} parent=0 // pred_check_branch
    %26 = sbr.rel (0) target = $region21
  $region20: #{multi_spec_ext_forward.1} parent=0 // pred_region
    _
  $region21: #{multi_spec_ext_forward.1} parent=0 // pred_fallthru
    _
  // Predicated region
  $region22: #{multi_spec_ext_forward.1} parent=0 // pred_check
    _
  $region23: #{multi_spec_ext_forward.1} parent=0 // pred_check_branch
    %28 = sbr.rel (0) target = $region25
  $region24: #{multi_spec_ext_forward.1} parent=0 // pred_region
    _
  $region25: #{multi_spec_ext_forward.1} parent=0 // pred_fallthru
    _
  // Predicated region
  $region26: #{multi_spec_ext_forward.1} parent=0 // pred_check
    _
  $region27: #{multi_spec_ext_forward.1} parent=0 // pred_check_branch
    %30 = sbr.rel (0) target = $region29
  $region28: #{multi_spec_ext_forward.1} parent=0 // pred_region
    _
  $region29: #{multi_spec_ext_forward.1} parent=0 // pred_fallthru
    _
  // Predicated region
  $region30: #{multi_spec_ext_forward.1} parent=0 // pred_check
    _
  $region31: #{multi_spec_ext_forward.1} parent=0 // pred_check_branch
    %32 = sbr.rel (0) target = $region33
  $region32: #{multi_spec_ext_forward.1} parent=0 // pred_region
    _
  $region33: #{multi_spec_ext_forward.1} parent=0 // pred_fallthru
    _
  // Predicated region
  $region34: #{multi_spec_ext_forward.1} parent=0 // pred_check
    _
  $region35: #{multi_spec_ext_forward.1} parent=0 // pred_check_branch
    %34 = sbr.rel (0) target = $region37
  $region36: #{multi_spec_ext_forward.1} parent=0 // pred_region
    _
  $region37: #{multi_spec_ext_forward.1} parent=0 // pred_fallthru
    _
  // Predicated region
  $region38: #{multi_spec_ext_forward.1} parent=0 // pred_check
    _
  $region39: #{multi_spec_ext_forward.1} parent=0 // pred_check_branch
    %36 = sbr.rel (0) target = $region41
  $region40: #{multi_spec_ext_forward.1} parent=0 // pred_region
    _
  $region41: #{multi_spec_ext_forward.1} parent=0 // pred_fallthru
    _
  %v37 = vld [vmem:[%s0] sm:$0xff]
  %v38 = vld [vmem:[%s0 + $0x8] sm:$0xff]
  %v39 = vld [vmem:[%s0 + $0x10] sm:$0xff]
  %v40 = vld [vmem:[%s0 + $0x18] sm:$0xff]
  %v41 = vld [vmem:[%s0 + $0x20] sm:$0xff]
  %v42 = vld [vmem:[%s0 + $0x28] sm:$0xff]
  %v43 = vld [vmem:[%s0 + $0x30] sm:$0xff]
  %v44 = vld [vmem:[%s0 + $0x38] sm:$0xff]
  %v45 = vld [vmem:[%s0 + $0x40] sm:$0xff]
  %v46 = vld [vmem:[%s0 + $0x48] sm:$0xff]
  %v47 = vld [vmem:[%s0 + $0x50] sm:$0xff]
  %v48 = vld [vmem:[%s0 + $0x58] sm:$0xff]
  %v49 = vld [vmem:[%s0 + $0x60] sm:$0xff]
  %v50 = vld [vmem:[%s0 + $0x68] sm:$0xff]
  %v51 = vld [vmem:[%s0 + $0x70] sm:$0xff]
  %v52 = vld [vmem:[%s0 + $0x78] sm:$0xff]
  %v53 = vld [vmem:[%s0 + $0x80] sm:$0xff]
  %v54 = vld [vmem:[%s0 + $0x88] sm:$0xff]
  %v55 = vld [vmem:[%s0 + $0x90] sm:$0xff]
  %v56 = vld [vmem:[%s0 + $0x98] sm:$0xff]
  %v57 = vld [vmem:[%s0 + $0xa0] sm:$0xff]
  %v58 = vld [vmem:[%s0 + $0xa8] sm:$0xff]
  %v59 = vld [vmem:[%s0 + $0xb0] sm:$0xff]
  %v60 = vld [vmem:[%s0 + $0xb8] sm:$0xff]
  %v61 = vld [vmem:[%s0 + $0xc0] sm:$0xff]
  %v62 = vld [vmem:[%s0 + $0xc8] sm:$0xff]
  %v63 = vld [vmem:[%s0 + $0xd0] sm:$0xff]
  %v64 = vld [vmem:[%s0 + $0xd8] sm:$0xff]
  %v65 = vld [vmem:[%s0 + $0xe0] sm:$0xff]
  %v66 = vld [vmem:[%s0 + $0xe8] sm:$0xff]
  %v67 = vld [vmem:[%s0 + $0xf0] sm:$0xff]
  %v68 = vld [vmem:[%s0 + $0xf8] sm:$0xff]
  %v69 = vld [vmem:[%s0 + $0x100] sm:$0xff]
  %v70 = vld [vmem:[%s0 + $0x108] sm:$0xff]
  %v71 = vld [vmem:[%s0 + $0x110] sm:$0xff]
  %v72 = vld [vmem:[%s0 + $0x118] sm:$0xff]
  %v73 = vld [vmem:[%s0 + $0x120] sm:$0xff]
  %v74 = vld [vmem:[%s0 + $0x128] sm:$0xff]
  %v75 = vld [vmem:[%s0 + $0x130] sm:$0xff]
  %v76 = vld [vmem:[%s0 + $0x138] sm:$0xff]
  %v77 = vld [vmem:[%s0 + $0x140] sm:$0xff]
  %v78 = vld [vmem:[%s0 + $0x148] sm:$0xff]
  %v79 = vld [vmem:[%s0 + $0x150] sm:$0xff]
  %v80 = vld [vmem:[%s0 + $0x158] sm:$0xff]
  %v81 = vld [vmem:[%s0 + $0x160] sm:$0xff]
  %v82 = vld [vmem:[%s0 + $0x168] sm:$0xff]
  %v83 = vld [vmem:[%s0 + $0x170] sm:$0xff]
  %v84 = vld [vmem:[%s0 + $0x178] sm:$0xff]
  %v85 = vld [vmem:[%s0 + $0x180] sm:$0xff]
  %v86 = vld [vmem:[%s0 + $0x188] sm:$0xff]
  %v87 = vld [vmem:[%s0 + $0x190] sm:$0xff]
  %v88 = vld [vmem:[%s0 + $0x198] sm:$0xff]
  %v89 = vld [vmem:[%s0 + $0x1a0] sm:$0xff]
  %v90 = vld [vmem:[%s0 + $0x1a8] sm:$0xff]
  %v91 = vld [vmem:[%s0 + $0x1b0] sm:$0xff]
  %v92 = vld [vmem:[%s0 + $0x1b8] sm:$0xff]
  %v93 = vld [vmem:[%s0 + $0x1c0] sm:$0xff]
  %v94 = vld [vmem:[%s0 + $0x1c8] sm:$0xff]
  %v95 = vld [vmem:[%s0 + $0x1d0] sm:$0xff]
  %v96 = vld [vmem:[%s0 + $0x1d8] sm:$0xff]
  %v97 = vld [vmem:[%s0 + $0x1e0] sm:$0xff]
  %v98 = vld [vmem:[%s0 + $0x1e8] sm:$0xff]
  %v99 = vld [vmem:[%s0 + $0x1f0] sm:$0xff]
  %v100 = vld [vmem:[%s0 + $0x1f8] sm:$0xff]
  %v101 = vld [vmem:[%s0 + $0x200] sm:$0xff]
  %v102 = vld [vmem:[%s0 + $0x208] sm:$0xff]
  %v103 = vld [vmem:[%s0 + $0x210] sm:$0xff]
  %v104 = vld [vmem:[%s0 + $0x218] sm:$0xff]
  %v105 = vld [vmem:[%s0 + $0x220] sm:$0xff]
  %v106 = vld [vmem:[%s0 + $0x228] sm:$0xff]
  %v107 = vld [vmem:[%s0 + $0x230] sm:$0xff]
  %v108 = vld [vmem:[%s0 + $0x238] sm:$0xff]
  %v109 = vld [vmem:[%s0 + $0x240] sm:$0xff]
  %v110 = vld [vmem:[%s0 + $0x248] sm:$0xff]
  %v111 = vld [vmem:[%s0 + $0x250] sm:$0xff]
  %v112 = vld [vmem:[%s0 + $0x258] sm:$0xff]
  %v113 = vld [vmem:[%s0 + $0x260] sm:$0xff]
  %v114 = vld [vmem:[%s0 + $0x268] sm:$0xff]
  %v115 = vld [vmem:[%s0 + $0x270] sm:$0xff]
  %v116 = vld [vmem:[%s0 + $0x278] sm:$0xff]
  %v117 = vld [vmem:[%s0 + $0x280] sm:$0xff]
  %v118 = vld [vmem:[%s0 + $0x288] sm:$0xff]
  %v119 = vld [vmem:[%s0 + $0x290] sm:$0xff]
  %v120 = vld [vmem:[%s0 + $0x298] sm:$0xff]
  %v121 = vld [vmem:[%s0 + $0x2a0] sm:$0xff]
  %v122 = vld [vmem:[%s0 + $0x2a8] sm:$0xff]
  %v123 = vld [vmem:[%s0 + $0x2b0] sm:$0xff]
  %v124 = vld [vmem:[%s0 + $0x2b8] sm:$0xff]
  %v125 = vld [vmem:[%s0 + $0x2c0] sm:$0xff]
  %v126 = vld [vmem:[%s0 + $0x2c8] sm:$0xff]
  %v127 = vld [vmem:[%s0 + $0x2d0] sm:$0xff]
  %v128 = vld [vmem:[%s0 + $0x2d8] sm:$0xff]
  %v129 = vld [vmem:[%s0 + $0x2e0] sm:$0xff]
  %v130 = vld [vmem:[%s0 + $0x2e8] sm:$0xff]
  %v131 = vld [vmem:[%s0 + $0x2f0] sm:$0xff]
  %v132 = vld [vmem:[%s0 + $0x2f8] sm:$0xff]
  %v133 = vld [vmem:[%s0 + $0x300] sm:$0xff]
  %v134 = vld [vmem:[%s0 + $0x308] sm:$0xff]
  %v135 = vld [vmem:[%s0 + $0x310] sm:$0xff]
  %v136 = vld [vmem:[%s0 + $0x318] sm:$0xff]
  %v137 = vld [vmem:[%s0 + $0x320] sm:$0xff]
  %v138 = vld [vmem:[%s0 + $0x328] sm:$0xff]
  %v139 = vld [vmem:[%s0 + $0x330] sm:$0xff]
  %v140 = vld [vmem:[%s0 + $0x338] sm:$0xff]
  %v141 = vld [vmem:[%s0 + $0x340] sm:$0xff]
  %v142 = vld [vmem:[%s0 + $0x348] sm:$0xff]
  %v143 = vld [vmem:[%s0 + $0x350] sm:$0xff]
  %v144 = vld [vmem:[%s0 + $0x358] sm:$0xff]
  %v145 = vld [vmem:[%s0 + $0x360] sm:$0xff]
  %v146 = vld [vmem:[%s0 + $0x368] sm:$0xff]
  %v147 = vld [vmem:[%s0 + $0x370] sm:$0xff]
  %v148 = vld [vmem:[%s0 + $0x378] sm:$0xff]
  %v149 = vld [vmem:[%s0 + $0x380] sm:$0xff]
  %v150 = vld [vmem:[%s0 + $0x388] sm:$0xff]
  %v151 = vld [vmem:[%s0 + $0x390] sm:$0xff]
  %v152 = vld [vmem:[%s0 + $0x398] sm:$0xff]
  %v153 = vld [vmem:[%s0 + $0x3a0] sm:$0xff]
  %v154 = vld [vmem:[%s0 + $0x3a8] sm:$0xff]
  %v155 = vld [vmem:[%s0 + $0x3b0] sm:$0xff]
  %v156 = vld [vmem:[%s0 + $0x3b8] sm:$0xff]
  %v157 = vld [vmem:[%s0 + $0x3c0] sm:$0xff]
  %v158 = vld [vmem:[%s0 + $0x3c8] sm:$0xff]
  %v159 = vld [vmem:[%s0 + $0x3d0] sm:$0xff]
  %v160 = vld [vmem:[%s0 + $0x3d8] sm:$0xff]
  %v161 = vld [vmem:[%s0 + $0x3e0] sm:$0xff]
  %v162 = vld [vmem:[%s0 + $0x3e8] sm:$0xff]
  %v163 = vld [vmem:[%s0 + $0x3f0] sm:$0xff]
  %v164 = vld [vmem:[%s0 + $0x3f8] sm:$0xff]
  %v165 = vld [vmem:[%s1] sm:$0xff]
  %v166 = vld [vmem:[%s1 + $0x8] sm:$0xff]
  %v167 = vld [vmem:[%s1 + $0x10] sm:$0xff]
  %v168 = vld [vmem:[%s1 + $0x18] sm:$0xff]
  %v169 = vld [vmem:[%s1 + $0x20] sm:$0xff]
  %v170 = vld [vmem:[%s1 + $0x28] sm:$0xff]
  %v171 = vld [vmem:[%s1 + $0x30] sm:$0xff]
  %v172 = vld [vmem:[%s1 + $0x38] sm:$0xff]
  %v173 = vld [vmem:[%s1 + $0x40] sm:$0xff]
  %v174 = vld [vmem:[%s2] sm:$0x1]
  %v176 = vlaneseq
  %v177 = vshrl.u32 %v176, 7
  %v178 = vsub.s32 0, %v177
  %v179 = vrot.slane %v174, %v178
  %vm181 = vcmask 588800
  %v183 = vsel %vm181, %v37, 0
  %v186 = vsel %vm181, %v38, 0
  %v189 = vsel %vm181, %v39, 0
  %v192 = vsel %vm181, %v40, 0
  %v195 = vsel %vm181, %v41, 0
  %v198 = vsel %vm181, %v42, 0
  %v201 = vsel %vm181, %v43, 0
  %v204 = vsel %vm181, %v44, 0
  %v207 = vsel %vm181, %v45, 0
  %v210 = vsel %vm181, %v46, 0
  %v213 = vsel %vm181, %v47, 0
  %v216 = vsel %vm181, %v48, 0
  %v219 = vsel %vm181, %v49, 0
  %v222 = vsel %vm181, %v50, 0
  %v225 = vsel %vm181, %v51, 0
  %v228 = vsel %vm181, %v52, 0
  %v231 = vsel %vm181, %v53, 0
  %v234 = vsel %vm181, %v54, 0
  %v237 = vsel %vm181, %v55, 0
  %v240 = vsel %vm181, %v56, 0
  %v243 = vsel %vm181, %v57, 0
  %v246 = vsel %vm181, %v58, 0
  %v249 = vsel %vm181, %v59, 0
  %v252 = vsel %vm181, %v60, 0
  %v255 = vsel %vm181, %v61, 0
  %v258 = vsel %vm181, %v62, 0
  %v261 = vsel %vm181, %v63, 0
  %v264 = vsel %vm181, %v64, 0
  %v267 = vsel %vm181, %v65, 0
  %v270 = vsel %vm181, %v66, 0
  %v273 = vsel %vm181, %v67, 0
  %v276 = vsel %vm181, %v68, 0
  %v279 = vsel %vm181, %v69, 0
  %v282 = vsel %vm181, %v70, 0
  %v285 = vsel %vm181, %v71, 0
  %v288 = vsel %vm181, %v72, 0
  %v291 = vsel %vm181, %v73, 0
  %v294 = vsel %vm181, %v74, 0
  %v297 = vsel %vm181, %v75, 0
  %v300 = vsel %vm181, %v76, 0
  %v303 = vsel %vm181, %v77, 0
  %v306 = vsel %vm181, %v78, 0
  %v309 = vsel %vm181, %v79, 0
  %v312 = vsel %vm181, %v80, 0
  %v315 = vsel %vm181, %v81, 0
  %v318 = vsel %vm181, %v82, 0
  %v321 = vsel %vm181, %v83, 0
  %v324 = vsel %vm181, %v84, 0
  %v327 = vsel %vm181, %v85, 0
  %v330 = vsel %vm181, %v86, 0
  %v333 = vsel %vm181, %v87, 0
  %v336 = vsel %vm181, %v88, 0
  %v339 = vsel %vm181, %v89, 0
  %v342 = vsel %vm181, %v90, 0
  %v345 = vsel %vm181, %v91, 0
  %v348 = vsel %vm181, %v92, 0
  %v351 = vsel %vm181, %v93, 0
  %v354 = vsel %vm181, %v94, 0
  %v357 = vsel %vm181, %v95, 0
  %v360 = vsel %vm181, %v96, 0
  %v363 = vsel %vm181, %v97, 0
  %v366 = vsel %vm181, %v98, 0
  %v369 = vsel %vm181, %v99, 0
  %v372 = vsel %vm181, %v100, 0
  %v375 = vsel %vm181, %v101, 0
  %v378 = vsel %vm181, %v102, 0
  %v381 = vsel %vm181, %v103, 0
  %v384 = vsel %vm181, %v104, 0
  %v387 = vsel %vm181, %v105, 0
  %v390 = vsel %vm181, %v106, 0
  %v393 = vsel %vm181, %v107, 0
  %v396 = vsel %vm181, %v108, 0
  %v399 = vsel %vm181, %v109, 0
  %v402 = vsel %vm181, %v110, 0
  %v405 = vsel %vm181, %v111, 0
  %v408 = vsel %vm181, %v112, 0
  %v411 = vsel %vm181, %v113, 0
  %v414 = vsel %vm181, %v114, 0
  %v417 = vsel %vm181, %v115, 0
  %v420 = vsel %vm181, %v116, 0
  %v423 = vsel %vm181, %v117, 0
  %v426 = vsel %vm181, %v118, 0
  %v429 = vsel %vm181, %v119, 0
  %v432 = vsel %vm181, %v120, 0
  %v435 = vsel %vm181, %v121, 0
  %v438 = vsel %vm181, %v122, 0
  %v441 = vsel %vm181, %v123, 0
  %v444 = vsel %vm181, %v124, 0
  %v447 = vsel %vm181, %v125, 0
  %v450 = vsel %vm181, %v126, 0
  %v453 = vsel %vm181, %v127, 0
  %v456 = vsel %vm181, %v128, 0
  %v459 = vsel %vm181, %v129, 0
  %v462 = vsel %vm181, %v130, 0
  %v465 = vsel %vm181, %v131, 0
  %v468 = vsel %vm181, %v132, 0
  %v471 = vsel %vm181, %v133, 0
  %v474 = vsel %vm181, %v134, 0
  %v477 = vsel %vm181, %v135, 0
  %v480 = vsel %vm181, %v136, 0
  %v483 = vsel %vm181, %v137, 0
  %v486 = vsel %vm181, %v138, 0
  %v489 = vsel %vm181, %v139, 0
  %v492 = vsel %vm181, %v140, 0
  %v495 = vsel %vm181, %v141, 0
  %v498 = vsel %vm181, %v142, 0
  %v501 = vsel %vm181, %v143, 0
  %v504 = vsel %vm181, %v144, 0
  %v507 = vsel %vm181, %v145, 0
  %v510 = vsel %vm181, %v146, 0
  %v513 = vsel %vm181, %v147, 0
  %v516 = vsel %vm181, %v148, 0
  %v519 = vsel %vm181, %v149, 0
  %v522 = vsel %vm181, %v150, 0
  %v525 = vsel %vm181, %v151, 0
  %v528 = vsel %vm181, %v152, 0
  %v531 = vsel %vm181, %v153, 0
  %v534 = vsel %vm181, %v154, 0
  %v537 = vsel %vm181, %v155, 0
  %v540 = vsel %vm181, %v156, 0
  %v543 = vsel %vm181, %v157, 0
  %v546 = vsel %vm181, %v158, 0
  %v549 = vsel %vm181, %v159, 0
  %v552 = vsel %vm181, %v160, 0
  %v555 = vsel %vm181, %v161, 0
  %v558 = vsel %vm181, %v162, 0
  %v561 = vsel %vm181, %v163, 0
  %v564 = vsel %vm181, %v164, 0
  %566 = vmatprep.subr.mxu0 0.0
  %567 = vmatpush1.msra.mxu0 0.0
  %568 = vmatprep.subr.mxu0 0.0
  %569 = vmatpush1.msra.mxu0 0.0
  %570 = vmatprep.subr.mxu0 0.0
  %571 = vmatpush1.msra.mxu0 0.0
  %572 = vmatprep.subr.mxu0 0.0
  %573 = vmatpush1.msra.mxu0 0.0
  %574 = vmatprep.subr.mxu0 0.0
  %575 = vmatpush1.msra.mxu0 0.0
  %576 = vmatprep.subr.mxu0 0.0
  %577 = vmatpush1.msra.mxu0 0.0
  %578 = vmatprep.subr.mxu0 0.0
  %579 = vmatpush1.msra.mxu0 0.0
  %580 = vmatprep.subr.mxu0 0.0
  %581 = vmatpush1.msra.mxu0 %v173
  %582 = vmatprep.subr.mxu0 0.0
  %583 = vmatpush1.msra.mxu0 %v172
  %584 = vmatprep.subr.mxu0 0.0
  %585 = vmatpush1.msra.mxu0 %v171
  %586 = vmatprep.subr.mxu0 0.0
  %587 = vmatpush1.msra.mxu0 %v170
  %588 = vmatprep.subr.mxu0 0.0
  %589 = vmatpush1.msra.mxu0 %v169
  %590 = vmatprep.subr.mxu0 0.0
  %591 = vmatpush1.msra.mxu0 %v168
  %592 = vmatprep.subr.mxu0 0.0
  %593 = vmatpush1.msra.mxu0 %v167
  %594 = vmatprep.subr.mxu0 0.0
  %595 = vmatpush1.msra.mxu0 %v166
  %596 = vmatprep.subr.mxu0 0.0
  %597 = vmatpush1.msra.mxu0 %v165
  %598 = vmatprep.subr.mxu0 0.0
  %599 = vmatpush2.msra.mxu0 0.0
  %600 = vmatprep.subr.mxu0 0.0
  %601 = vmatpush2.msra.mxu0 0.0
  %602 = vmatprep.subr.mxu0 0.0
  %603 = vmatpush2.msra.mxu0 0.0
  %604 = vmatprep.subr.mxu0 0.0
  %605 = vmatpush2.msra.mxu0 0.0
  %606 = vmatprep.subr.mxu0 0.0
  %607 = vmatpush2.msra.mxu0 0.0
  %608 = vmatprep.subr.mxu0 0.0
  %609 = vmatpush2.msra.mxu0 0.0
  %610 = vmatprep.subr.mxu0 0.0
  %611 = vmatpush2.msra.mxu0 0.0
  %612 = vmatprep.subr.mxu0 0.0
  %613 = vmatpush2.msra.mxu0 0.0
  %614 = vmatprep.subr.mxu0 0.0
  %615 = vmatpush2.msra.mxu0 0.0
  %616 = vmatprep.subr.mxu0 0.0
  %617 = vmatpush2.msra.mxu0 0.0
  %618 = vmatprep.subr.mxu0 0.0
  %619 = vmatpush2.msra.mxu0 0.0
  %620 = vmatprep.subr.mxu0 0.0
  %621 = vmatpush2.msra.mxu0 0.0
  %622 = vmatprep.subr.mxu0 0.0
  %623 = vmatpush2.msra.mxu0 0.0
  %624 = vmatprep.subr.mxu0 0.0
  %625 = vmatpush2.msra.mxu0 0.0
  %626 = vmatprep.subr.mxu0 0.0
  %627 = vmatpush2.msra.mxu0 0.0
  %628 = vmatprep.subr.mxu0 0.0
  %629 = vmatpush2.msra.mxu0 0.0
  %630 = vmatprep.mubr.f32.mxu0 0.0
  %631 = vmatmul.mubr.f32.gmra.mxu0 %v183
  %v632 = vpop.f32.mrf.mxu0
  %v633 = vadd.f32 %v179, %v632
  %v634 = vpop.f32.mrf.mxu0
  %635 = vmatprep.mubr.f32.mxu0 0.0
  %636 = vmatmul.mubr.f32.gmra.mxu0 %v186
  %v637 = vpop.f32.mrf.mxu0
  %v638 = vadd.f32 %v179, %v637
  %v639 = vpop.f32.mrf.mxu0
  %640 = vmatprep.mubr.f32.mxu0 0.0
  %641 = vmatmul.mubr.f32.gmra.mxu0 %v189
  %v642 = vpop.f32.mrf.mxu0
  %v643 = vadd.f32 %v179, %v642
  %v644 = vpop.f32.mrf.mxu0
  %645 = vmatprep.mubr.f32.mxu0 0.0
  %646 = vmatmul.mubr.f32.gmra.mxu0 %v192
  %v647 = vpop.f32.mrf.mxu0
  %v648 = vadd.f32 %v179, %v647
  %v649 = vpop.f32.mrf.mxu0
  %650 = vmatprep.mubr.f32.mxu0 0.0
  %651 = vmatmul.mubr.f32.gmra.mxu0 %v195
  %v652 = vpop.f32.mrf.mxu0
  %v653 = vadd.f32 %v179, %v652
  %v654 = vpop.f32.mrf.mxu0
  %655 = vmatprep.mubr.f32.mxu0 0.0
  %656 = vmatmul.mubr.f32.gmra.mxu0 %v198
  %v657 = vpop.f32.mrf.mxu0
  %v658 = vadd.f32 %v179, %v657
  %v659 = vpop.f32.mrf.mxu0
  %660 = vmatprep.mubr.f32.mxu0 0.0
  %661 = vmatmul.mubr.f32.gmra.mxu0 %v201
  %v662 = vpop.f32.mrf.mxu0
  %v663 = vadd.f32 %v179, %v662
  %v664 = vpop.f32.mrf.mxu0
  %665 = vmatprep.mubr.f32.mxu0 0.0
  %666 = vmatmul.mubr.f32.gmra.mxu0 %v204
  %v667 = vpop.f32.mrf.mxu0
  %v668 = vadd.f32 %v179, %v667
  %v669 = vpop.f32.mrf.mxu0
  %670 = vmatprep.mubr.f32.mxu0 0.0
  %671 = vmatmul.mubr.f32.gmra.mxu0 %v207
  %v672 = vpop.f32.mrf.mxu0
  %v673 = vadd.f32 %v179, %v672
  %v674 = vpop.f32.mrf.mxu0
  %675 = vmatprep.mubr.f32.mxu0 0.0
  %676 = vmatmul.mubr.f32.gmra.mxu0 %v210
  %v677 = vpop.f32.mrf.mxu0
  %v678 = vadd.f32 %v179, %v677
  %v679 = vpop.f32.mrf.mxu0
  %680 = vmatprep.mubr.f32.mxu0 0.0
  %681 = vmatmul.mubr.f32.gmra.mxu0 %v213
  %v682 = vpop.f32.mrf.mxu0
  %v683 = vadd.f32 %v179, %v682
  %v684 = vpop.f32.mrf.mxu0
  %685 = vmatprep.mubr.f32.mxu0 0.0
  %686 = vmatmul.mubr.f32.gmra.mxu0 %v216
  %v687 = vpop.f32.mrf.mxu0
  %v688 = vadd.f32 %v179, %v687
  %v689 = vpop.f32.mrf.mxu0
  %690 = vmatprep.mubr.f32.mxu0 0.0
  %691 = vmatmul.mubr.f32.gmra.mxu0 %v219
  %v692 = vpop.f32.mrf.mxu0
  %v693 = vadd.f32 %v179, %v692
  %v694 = vpop.f32.mrf.mxu0
  %695 = vmatprep.mubr.f32.mxu0 0.0
  %696 = vmatmul.mubr.f32.gmra.mxu0 %v222
  %v697 = vpop.f32.mrf.mxu0
  %v698 = vadd.f32 %v179, %v697
  %v699 = vpop.f32.mrf.mxu0
  %700 = vmatprep.mubr.f32.mxu0 0.0
  %701 = vmatmul.mubr.f32.gmra.mxu0 %v225
  %v702 = vpop.f32.mrf.mxu0
  %v703 = vadd.f32 %v179, %v702
  %v704 = vpop.f32.mrf.mxu0
  %705 = vmatprep.mubr.f32.mxu0 0.0
  %706 = vmatmul.mubr.f32.gmra.mxu0 %v228
  %v707 = vpop.f32.mrf.mxu0
  %v708 = vadd.f32 %v179, %v707
  %v709 = vpop.f32.mrf.mxu0
  %710 = vmatprep.mubr.f32.mxu0 0.0
  %711 = vmatmul.mubr.f32.gmra.mxu0 %v231
  %v712 = vpop.f32.mrf.mxu0
  %v713 = vadd.f32 %v179, %v712
  %v714 = vpop.f32.mrf.mxu0
  %715 = vmatprep.mubr.f32.mxu0 0.0
  %716 = vmatmul.mubr.f32.gmra.mxu0 %v234
  %v717 = vpop.f32.mrf.mxu0
  %v718 = vadd.f32 %v179, %v717
  %v719 = vpop.f32.mrf.mxu0
  %720 = vmatprep.mubr.f32.mxu0 0.0
  %721 = vmatmul.mubr.f32.gmra.mxu0 %v237
  %v722 = vpop.f32.mrf.mxu0
  %v723 = vadd.f32 %v179, %v722
  %v724 = vpop.f32.mrf.mxu0
  %725 = vmatprep.mubr.f32.mxu0 0.0
  %726 = vmatmul.mubr.f32.gmra.mxu0 %v240
  %v727 = vpop.f32.mrf.mxu0
  %v728 = vadd.f32 %v179, %v727
  %v729 = vpop.f32.mrf.mxu0
  %730 = vmatprep.mubr.f32.mxu0 0.0
  %731 = vmatmul.mubr.f32.gmra.mxu0 %v243
  %v732 = vpop.f32.mrf.mxu0
  %v733 = vadd.f32 %v179, %v732
  %v734 = vpop.f32.mrf.mxu0
  %735 = vmatprep.mubr.f32.mxu0 0.0
  %736 = vmatmul.mubr.f32.gmra.mxu0 %v246
  %v737 = vpop.f32.mrf.mxu0
  %v738 = vadd.f32 %v179, %v737
  %v739 = vpop.f32.mrf.mxu0
  %740 = vmatprep.mubr.f32.mxu0 0.0
  %741 = vmatmul.mubr.f32.gmra.mxu0 %v249
  %v742 = vpop.f32.mrf.mxu0
  %v743 = vadd.f32 %v179, %v742
  %v744 = vpop.f32.mrf.mxu0
  %745 = vmatprep.mubr.f32.mxu0 0.0
  %746 = vmatmul.mubr.f32.gmra.mxu0 %v252
  %v747 = vpop.f32.mrf.mxu0
  %v748 = vadd.f32 %v179, %v747
  %v749 = vpop.f32.mrf.mxu0
  %750 = vmatprep.mubr.f32.mxu0 0.0
  %751 = vmatmul.mubr.f32.gmra.mxu0 %v255
  %v752 = vpop.f32.mrf.mxu0
  %v753 = vadd.f32 %v179, %v752
  %v754 = vpop.f32.mrf.mxu0
  %755 = vmatprep.mubr.f32.mxu0 0.0
  %756 = vmatmul.mubr.f32.gmra.mxu0 %v258
  %v757 = vpop.f32.mrf.mxu0
  %v758 = vadd.f32 %v179, %v757
  %v759 = vpop.f32.mrf.mxu0
  %760 = vmatprep.mubr.f32.mxu0 0.0
  %761 = vmatmul.mubr.f32.gmra.mxu0 %v261
  %v762 = vpop.f32.mrf.mxu0
  %v763 = vadd.f32 %v179, %v762
  %v764 = vpop.f32.mrf.mxu0
  %765 = vmatprep.mubr.f32.mxu0 0.0
  %766 = vmatmul.mubr.f32.gmra.mxu0 %v264
  %v767 = vpop.f32.mrf.mxu0
  %v768 = vadd.f32 %v179, %v767
  %v769 = vpop.f32.mrf.mxu0
  %770 = vmatprep.mubr.f32.mxu0 0.0
  %771 = vmatmul.mubr.f32.gmra.mxu0 %v267
  %v772 = vpop.f32.mrf.mxu0
  %v773 = vadd.f32 %v179, %v772
  %v774 = vpop.f32.mrf.mxu0
  %775 = vmatprep.mubr.f32.mxu0 0.0
  %776 = vmatmul.mubr.f32.gmra.mxu0 %v270
  %v777 = vpop.f32.mrf.mxu0
  %v778 = vadd.f32 %v179, %v777
  %v779 = vpop.f32.mrf.mxu0
  %780 = vmatprep.mubr.f32.mxu0 0.0
  %781 = vmatmul.mubr.f32.gmra.mxu0 %v273
  %v782 = vpop.f32.mrf.mxu0
  %v783 = vadd.f32 %v179, %v782
  %v784 = vpop.f32.mrf.mxu0
  %785 = vmatprep.mubr.f32.mxu0 0.0
  %786 = vmatmul.mubr.f32.gmra.mxu0 %v276
  %v787 = vpop.f32.mrf.mxu0
  %v788 = vadd.f32 %v179, %v787
  %v789 = vpop.f32.mrf.mxu0
  %790 = vmatprep.mubr.f32.mxu0 0.0
  %791 = vmatmul.mubr.f32.gmra.mxu0 %v279
  %v792 = vpop.f32.mrf.mxu0
  %v793 = vadd.f32 %v179, %v792
  %v794 = vpop.f32.mrf.mxu0
  %795 = vmatprep.mubr.f32.mxu0 0.0
  %796 = vmatmul.mubr.f32.gmra.mxu0 %v282
  %v797 = vpop.f32.mrf.mxu0
  %v798 = vadd.f32 %v179, %v797
  %v799 = vpop.f32.mrf.mxu0
  %800 = vmatprep.mubr.f32.mxu0 0.0
  %801 = vmatmul.mubr.f32.gmra.mxu0 %v285
  %v802 = vpop.f32.mrf.mxu0
  %v803 = vadd.f32 %v179, %v802
  %v804 = vpop.f32.mrf.mxu0
  %805 = vmatprep.mubr.f32.mxu0 0.0
  %806 = vmatmul.mubr.f32.gmra.mxu0 %v288
  %v807 = vpop.f32.mrf.mxu0
  %v808 = vadd.f32 %v179, %v807
  %v809 = vpop.f32.mrf.mxu0
  %810 = vmatprep.mubr.f32.mxu0 0.0
  %811 = vmatmul.mubr.f32.gmra.mxu0 %v291
  %v812 = vpop.f32.mrf.mxu0
  %v813 = vadd.f32 %v179, %v812
  %v814 = vpop.f32.mrf.mxu0
  %815 = vmatprep.mubr.f32.mxu0 0.0
  %816 = vmatmul.mubr.f32.gmra.mxu0 %v294
  %v817 = vpop.f32.mrf.mxu0
  %v818 = vadd.f32 %v179, %v817
  %v819 = vpop.f32.mrf.mxu0
  %820 = vmatprep.mubr.f32.mxu0 0.0
  %821 = vmatmul.mubr.f32.gmra.mxu0 %v297
  %v822 = vpop.f32.mrf.mxu0
  %v823 = vadd.f32 %v179, %v822
  %v824 = vpop.f32.mrf.mxu0
  %825 = vmatprep.mubr.f32.mxu0 0.0
  %826 = vmatmul.mubr.f32.gmra.mxu0 %v300
  %v827 = vpop.f32.mrf.mxu0
  %v828 = vadd.f32 %v179, %v827
  %v829 = vpop.f32.mrf.mxu0
  %830 = vmatprep.mubr.f32.mxu0 0.0
  %831 = vmatmul.mubr.f32.gmra.mxu0 %v303
  %v832 = vpop.f32.mrf.mxu0
  %v833 = vadd.f32 %v179, %v832
  %v834 = vpop.f32.mrf.mxu0
  %835 = vmatprep.mubr.f32.mxu0 0.0
  %836 = vmatmul.mubr.f32.gmra.mxu0 %v306
  %v837 = vpop.f32.mrf.mxu0
  %v838 = vadd.f32 %v179, %v837
  %v839 = vpop.f32.mrf.mxu0
  %840 = vmatprep.mubr.f32.mxu0 0.0
  %841 = vmatmul.mubr.f32.gmra.mxu0 %v309
  %v842 = vpop.f32.mrf.mxu0
  %v843 = vadd.f32 %v179, %v842
  %v844 = vpop.f32.mrf.mxu0
  %845 = vmatprep.mubr.f32.mxu0 0.0
  %846 = vmatmul.mubr.f32.gmra.mxu0 %v312
  %v847 = vpop.f32.mrf.mxu0
  %v848 = vadd.f32 %v179, %v847
  %v849 = vpop.f32.mrf.mxu0
  %850 = vmatprep.mubr.f32.mxu0 0.0
  %851 = vmatmul.mubr.f32.gmra.mxu0 %v315
  %v852 = vpop.f32.mrf.mxu0
  %v853 = vadd.f32 %v179, %v852
  %v854 = vpop.f32.mrf.mxu0
  %855 = vmatprep.mubr.f32.mxu0 0.0
  %856 = vmatmul.mubr.f32.gmra.mxu0 %v318
  %v857 = vpop.f32.mrf.mxu0
  %v858 = vadd.f32 %v179, %v857
  %v859 = vpop.f32.mrf.mxu0
  %860 = vmatprep.mubr.f32.mxu0 0.0
  %861 = vmatmul.mubr.f32.gmra.mxu0 %v321
  %v862 = vpop.f32.mrf.mxu0
  %v863 = vadd.f32 %v179, %v862
  %v864 = vpop.f32.mrf.mxu0
  %865 = vmatprep.mubr.f32.mxu0 0.0
  %866 = vmatmul.mubr.f32.gmra.mxu0 %v324
  %v867 = vpop.f32.mrf.mxu0
  %v868 = vadd.f32 %v179, %v867
  %v869 = vpop.f32.mrf.mxu0
  %870 = vmatprep.mubr.f32.mxu0 0.0
  %871 = vmatmul.mubr.f32.gmra.mxu0 %v327
  %v872 = vpop.f32.mrf.mxu0
  %v873 = vadd.f32 %v179, %v872
  %v874 = vpop.f32.mrf.mxu0
  %875 = vmatprep.mubr.f32.mxu0 0.0
  %876 = vmatmul.mubr.f32.gmra.mxu0 %v330
  %v877 = vpop.f32.mrf.mxu0
  %v878 = vadd.f32 %v179, %v877
  %v879 = vpop.f32.mrf.mxu0
  %880 = vmatprep.mubr.f32.mxu0 0.0
  %881 = vmatmul.mubr.f32.gmra.mxu0 %v333
  %v882 = vpop.f32.mrf.mxu0
  %v883 = vadd.f32 %v179, %v882
  %v884 = vpop.f32.mrf.mxu0
  %885 = vmatprep.mubr.f32.mxu0 0.0
  %886 = vmatmul.mubr.f32.gmra.mxu0 %v336
  %v887 = vpop.f32.mrf.mxu0
  %v888 = vadd.f32 %v179, %v887
  %v889 = vpop.f32.mrf.mxu0
  %890 = vmatprep.mubr.f32.mxu0 0.0
  %891 = vmatmul.mubr.f32.gmra.mxu0 %v339
  %v892 = vpop.f32.mrf.mxu0
  %v893 = vadd.f32 %v179, %v892
  %v894 = vpop.f32.mrf.mxu0
  %895 = vmatprep.mubr.f32.mxu0 0.0
  %896 = vmatmul.mubr.f32.gmra.mxu0 %v342
  %v897 = vpop.f32.mrf.mxu0
  %v898 = vadd.f32 %v179, %v897
  %v899 = vpop.f32.mrf.mxu0
  %900 = vmatprep.mubr.f32.mxu0 0.0
  %901 = vmatmul.mubr.f32.gmra.mxu0 %v345
  %v902 = vpop.f32.mrf.mxu0
  %v903 = vadd.f32 %v179, %v902
  %v904 = vpop.f32.mrf.mxu0
  %905 = vmatprep.mubr.f32.mxu0 0.0
  %906 = vmatmul.mubr.f32.gmra.mxu0 %v348
  %v907 = vpop.f32.mrf.mxu0
  %v908 = vadd.f32 %v179, %v907
  %v909 = vpop.f32.mrf.mxu0
  %910 = vmatprep.mubr.f32.mxu0 0.0
  %911 = vmatmul.mubr.f32.gmra.mxu0 %v351
  %v912 = vpop.f32.mrf.mxu0
  %v913 = vadd.f32 %v179, %v912
  %v914 = vpop.f32.mrf.mxu0
  %915 = vmatprep.mubr.f32.mxu0 0.0
  %916 = vmatmul.mubr.f32.gmra.mxu0 %v354
  %v917 = vpop.f32.mrf.mxu0
  %v918 = vadd.f32 %v179, %v917
  %v919 = vpop.f32.mrf.mxu0
  %920 = vmatprep.mubr.f32.mxu0 0.0
  %921 = vmatmul.mubr.f32.gmra.mxu0 %v357
  %v922 = vpop.f32.mrf.mxu0
  %v923 = vadd.f32 %v179, %v922
  %v924 = vpop.f32.mrf.mxu0
  %925 = vmatprep.mubr.f32.mxu0 0.0
  %926 = vmatmul.mubr.f32.gmra.mxu0 %v360
  %v927 = vpop.f32.mrf.mxu0
  %v928 = vadd.f32 %v179, %v927
  %v929 = vpop.f32.mrf.mxu0
  %930 = vmatprep.mubr.f32.mxu0 0.0
  %931 = vmatmul.mubr.f32.gmra.mxu0 %v363
  %v932 = vpop.f32.mrf.mxu0
  %v933 = vadd.f32 %v179, %v932
  %v934 = vpop.f32.mrf.mxu0
  %935 = vmatprep.mubr.f32.mxu0 0.0
  %936 = vmatmul.mubr.f32.gmra.mxu0 %v366
  %v937 = vpop.f32.mrf.mxu0
  %v938 = vadd.f32 %v179, %v937
  %v939 = vpop.f32.mrf.mxu0
  %940 = vmatprep.mubr.f32.mxu0 0.0
  %941 = vmatmul.mubr.f32.gmra.mxu0 %v369
  %v942 = vpop.f32.mrf.mxu0
  %v943 = vadd.f32 %v179, %v942
  %v944 = vpop.f32.mrf.mxu0
  %945 = vmatprep.mubr.f32.mxu0 0.0
  %946 = vmatmul.mubr.f32.gmra.mxu0 %v372
  %v947 = vpop.f32.mrf.mxu0
  %v948 = vadd.f32 %v179, %v947
  %v949 = vpop.f32.mrf.mxu0
  %950 = vmatprep.mubr.f32.mxu0 0.0
  %951 = vmatmul.mubr.f32.gmra.mxu0 %v375
  %v952 = vpop.f32.mrf.mxu0
  %v953 = vadd.f32 %v179, %v952
  %v954 = vpop.f32.mrf.mxu0
  %955 = vmatprep.mubr.f32.mxu0 0.0
  %956 = vmatmul.mubr.f32.gmra.mxu0 %v378
  %v957 = vpop.f32.mrf.mxu0
  %v958 = vadd.f32 %v179, %v957
  %v959 = vpop.f32.mrf.mxu0
  %960 = vmatprep.mubr.f32.mxu0 0.0
  %961 = vmatmul.mubr.f32.gmra.mxu0 %v381
  %v962 = vpop.f32.mrf.mxu0
  %v963 = vadd.f32 %v179, %v962
  %v964 = vpop.f32.mrf.mxu0
  %965 = vmatprep.mubr.f32.mxu0 0.0
  %966 = vmatmul.mubr.f32.gmra.mxu0 %v384
  %v967 = vpop.f32.mrf.mxu0
  %v968 = vadd.f32 %v179, %v967
  %v969 = vpop.f32.mrf.mxu0
  %970 = vmatprep.mubr.f32.mxu0 0.0
  %971 = vmatmul.mubr.f32.gmra.mxu0 %v387
  %v972 = vpop.f32.mrf.mxu0
  %v973 = vadd.f32 %v179, %v972
  %v974 = vpop.f32.mrf.mxu0
  %975 = vmatprep.mubr.f32.mxu0 0.0
  %976 = vmatmul.mubr.f32.gmra.mxu0 %v390
  %v977 = vpop.f32.mrf.mxu0
  %v978 = vadd.f32 %v179, %v977
  %v979 = vpop.f32.mrf.mxu0
  %980 = vmatprep.mubr.f32.mxu0 0.0
  %981 = vmatmul.mubr.f32.gmra.mxu0 %v393
  %v982 = vpop.f32.mrf.mxu0
  %v983 = vadd.f32 %v179, %v982
  %v984 = vpop.f32.mrf.mxu0
  %985 = vmatprep.mubr.f32.mxu0 0.0
  %986 = vmatmul.mubr.f32.gmra.mxu0 %v396
  %v987 = vpop.f32.mrf.mxu0
  %v988 = vadd.f32 %v179, %v987
  %v989 = vpop.f32.mrf.mxu0
  %990 = vmatprep.mubr.f32.mxu0 0.0
  %991 = vmatmul.mubr.f32.gmra.mxu0 %v399
  %v992 = vpop.f32.mrf.mxu0
  %v993 = vadd.f32 %v179, %v992
  %v994 = vpop.f32.mrf.mxu0
  %995 = vmatprep.mubr.f32.mxu0 0.0
  %996 = vmatmul.mubr.f32.gmra.mxu0 %v402
  %v997 = vpop.f32.mrf.mxu0
  %v998 = vadd.f32 %v179, %v997
  %v999 = vpop.f32.mrf.mxu0
  %1000 = vmatprep.mubr.f32.mxu0 0.0
  %1001 = vmatmul.mubr.f32.gmra.mxu0 %v405
  %v1002 = vpop.f32.mrf.mxu0
  %v1003 = vadd.f32 %v179, %v1002
  %v1004 = vpop.f32.mrf.mxu0
  %1005 = vmatprep.mubr.f32.mxu0 0.0
  %1006 = vmatmul.mubr.f32.gmra.mxu0 %v408
  %v1007 = vpop.f32.mrf.mxu0
  %v1008 = vadd.f32 %v179, %v1007
  %v1009 = vpop.f32.mrf.mxu0
  %1010 = vmatprep.mubr.f32.mxu0 0.0
  %1011 = vmatmul.mubr.f32.gmra.mxu0 %v411
  %v1012 = vpop.f32.mrf.mxu0
  %v1013 = vadd.f32 %v179, %v1012
  %v1014 = vpop.f32.mrf.mxu0
  %1015 = vmatprep.mubr.f32.mxu0 0.0
  %1016 = vmatmul.mubr.f32.gmra.mxu0 %v414
  %v1017 = vpop.f32.mrf.mxu0
  %v1018 = vadd.f32 %v179, %v1017
  %v1019 = vpop.f32.mrf.mxu0
  %1020 = vmatprep.mubr.f32.mxu0 0.0
  %1021 = vmatmul.mubr.f32.gmra.mxu0 %v417
  %v1022 = vpop.f32.mrf.mxu0
  %v1023 = vadd.f32 %v179, %v1022
  %v1024 = vpop.f32.mrf.mxu0
  %1025 = vmatprep.mubr.f32.mxu0 0.0
  %1026 = vmatmul.mubr.f32.gmra.mxu0 %v420
  %v1027 = vpop.f32.mrf.mxu0
  %v1028 = vadd.f32 %v179, %v1027
  %v1029 = vpop.f32.mrf.mxu0
  %1030 = vmatprep.mubr.f32.mxu0 0.0
  %1031 = vmatmul.mubr.f32.gmra.mxu0 %v423
  %v1032 = vpop.f32.mrf.mxu0
  %v1033 = vadd.f32 %v179, %v1032
  %v1034 = vpop.f32.mrf.mxu0
  %1035 = vmatprep.mubr.f32.mxu0 0.0
  %1036 = vmatmul.mubr.f32.gmra.mxu0 %v426
  %v1037 = vpop.f32.mrf.mxu0
  %v1038 = vadd.f32 %v179, %v1037
  %v1039 = vpop.f32.mrf.mxu0
  %1040 = vmatprep.mubr.f32.mxu0 0.0
  %1041 = vmatmul.mubr.f32.gmra.mxu0 %v429
  %v1042 = vpop.f32.mrf.mxu0
  %v1043 = vadd.f32 %v179, %v1042
  %v1044 = vpop.f32.mrf.mxu0
  %1045 = vmatprep.mubr.f32.mxu0 0.0
  %1046 = vmatmul.mubr.f32.gmra.mxu0 %v432
  %v1047 = vpop.f32.mrf.mxu0
  %v1048 = vadd.f32 %v179, %v1047
  %v1049 = vpop.f32.mrf.mxu0
  %1050 = vmatprep.mubr.f32.mxu0 0.0
  %1051 = vmatmul.mubr.f32.gmra.mxu0 %v435
  %v1052 = vpop.f32.mrf.mxu0
  %v1053 = vadd.f32 %v179, %v1052
  %v1054 = vpop.f32.mrf.mxu0
  %1055 = vmatprep.mubr.f32.mxu0 0.0
  %1056 = vmatmul.mubr.f32.gmra.mxu0 %v438
  %v1057 = vpop.f32.mrf.mxu0
  %v1058 = vadd.f32 %v179, %v1057
  %v1059 = vpop.f32.mrf.mxu0
  %1060 = vmatprep.mubr.f32.mxu0 0.0
  %1061 = vmatmul.mubr.f32.gmra.mxu0 %v441
  %v1062 = vpop.f32.mrf.mxu0
  %v1063 = vadd.f32 %v179, %v1062
  %v1064 = vpop.f32.mrf.mxu0
  %1065 = vmatprep.mubr.f32.mxu0 0.0
  %1066 = vmatmul.mubr.f32.gmra.mxu0 %v444
  %v1067 = vpop.f32.mrf.mxu0
  %v1068 = vadd.f32 %v179, %v1067
  %v1069 = vpop.f32.mrf.mxu0
  %1070 = vmatprep.mubr.f32.mxu0 0.0
  %1071 = vmatmul.mubr.f32.gmra.mxu0 %v447
  %v1072 = vpop.f32.mrf.mxu0
  %v1073 = vadd.f32 %v179, %v1072
  %v1074 = vpop.f32.mrf.mxu0
  %1075 = vmatprep.mubr.f32.mxu0 0.0
  %1076 = vmatmul.mubr.f32.gmra.mxu0 %v450
  %v1077 = vpop.f32.mrf.mxu0
  %v1078 = vadd.f32 %v179, %v1077
  %v1079 = vpop.f32.mrf.mxu0
  %1080 = vmatprep.mubr.f32.mxu0 0.0
  %1081 = vmatmul.mubr.f32.gmra.mxu0 %v453
  %v1082 = vpop.f32.mrf.mxu0
  %v1083 = vadd.f32 %v179, %v1082
  %v1084 = vpop.f32.mrf.mxu0
  %1085 = vmatprep.mubr.f32.mxu0 0.0
  %1086 = vmatmul.mubr.f32.gmra.mxu0 %v456
  %v1087 = vpop.f32.mrf.mxu0
  %v1088 = vadd.f32 %v179, %v1087
  %v1089 = vpop.f32.mrf.mxu0
  %1090 = vmatprep.mubr.f32.mxu0 0.0
  %1091 = vmatmul.mubr.f32.gmra.mxu0 %v459
  %v1092 = vpop.f32.mrf.mxu0
  %v1093 = vadd.f32 %v179, %v1092
  %v1094 = vpop.f32.mrf.mxu0
  %1095 = vmatprep.mubr.f32.mxu0 0.0
  %1096 = vmatmul.mubr.f32.gmra.mxu0 %v462
  %v1097 = vpop.f32.mrf.mxu0
  %v1098 = vadd.f32 %v179, %v1097
  %v1099 = vpop.f32.mrf.mxu0
  %1100 = vmatprep.mubr.f32.mxu0 0.0
  %1101 = vmatmul.mubr.f32.gmra.mxu0 %v465
  %v1102 = vpop.f32.mrf.mxu0
  %v1103 = vadd.f32 %v179, %v1102
  %v1104 = vpop.f32.mrf.mxu0
  %1105 = vmatprep.mubr.f32.mxu0 0.0
  %1106 = vmatmul.mubr.f32.gmra.mxu0 %v468
  %v1107 = vpop.f32.mrf.mxu0
  %v1108 = vadd.f32 %v179, %v1107
  %v1109 = vpop.f32.mrf.mxu0
  %1110 = vmatprep.mubr.f32.mxu0 0.0
  %1111 = vmatmul.mubr.f32.gmra.mxu0 %v471
  %v1112 = vpop.f32.mrf.mxu0
  %v1113 = vadd.f32 %v179, %v1112
  %v1114 = vpop.f32.mrf.mxu0
  %1115 = vmatprep.mubr.f32.mxu0 0.0
  %1116 = vmatmul.mubr.f32.gmra.mxu0 %v474
  %v1117 = vpop.f32.mrf.mxu0
  %v1118 = vadd.f32 %v179, %v1117
  %v1119 = vpop.f32.mrf.mxu0
  %1120 = vmatprep.mubr.f32.mxu0 0.0
  %1121 = vmatmul.mubr.f32.gmra.mxu0 %v477
  %v1122 = vpop.f32.mrf.mxu0
  %v1123 = vadd.f32 %v179, %v1122
  %v1124 = vpop.f32.mrf.mxu0
  %1125 = vmatprep.mubr.f32.mxu0 0.0
  %1126 = vmatmul.mubr.f32.gmra.mxu0 %v480
  %v1127 = vpop.f32.mrf.mxu0
  %v1128 = vadd.f32 %v179, %v1127
  %v1129 = vpop.f32.mrf.mxu0
  %1130 = vmatprep.mubr.f32.mxu0 0.0
  %1131 = vmatmul.mubr.f32.gmra.mxu0 %v483
  %v1132 = vpop.f32.mrf.mxu0
  %v1133 = vadd.f32 %v179, %v1132
  %v1134 = vpop.f32.mrf.mxu0
  %1135 = vmatprep.mubr.f32.mxu0 0.0
  %1136 = vmatmul.mubr.f32.gmra.mxu0 %v486
  %v1137 = vpop.f32.mrf.mxu0
  %v1138 = vadd.f32 %v179, %v1137
  %v1139 = vpop.f32.mrf.mxu0
  %1140 = vmatprep.mubr.f32.mxu0 0.0
  %1141 = vmatmul.mubr.f32.gmra.mxu0 %v489
  %v1142 = vpop.f32.mrf.mxu0
  %v1143 = vadd.f32 %v179, %v1142
  %v1144 = vpop.f32.mrf.mxu0
  %1145 = vmatprep.mubr.f32.mxu0 0.0
  %1146 = vmatmul.mubr.f32.gmra.mxu0 %v492
  %v1147 = vpop.f32.mrf.mxu0
  %v1148 = vadd.f32 %v179, %v1147
  %v1149 = vpop.f32.mrf.mxu0
  %1150 = vmatprep.mubr.f32.mxu0 0.0
  %1151 = vmatmul.mubr.f32.gmra.mxu0 %v495
  %v1152 = vpop.f32.mrf.mxu0
  %v1153 = vadd.f32 %v179, %v1152
  %v1154 = vpop.f32.mrf.mxu0
  %1155 = vmatprep.mubr.f32.mxu0 0.0
  %1156 = vmatmul.mubr.f32.gmra.mxu0 %v498
  %v1157 = vpop.f32.mrf.mxu0
  %v1158 = vadd.f32 %v179, %v1157
  %v1159 = vpop.f32.mrf.mxu0
  %1160 = vmatprep.mubr.f32.mxu0 0.0
  %1161 = vmatmul.mubr.f32.gmra.mxu0 %v501
  %v1162 = vpop.f32.mrf.mxu0
  %v1163 = vadd.f32 %v179, %v1162
  %v1164 = vpop.f32.mrf.mxu0
  %1165 = vmatprep.mubr.f32.mxu0 0.0
  %1166 = vmatmul.mubr.f32.gmra.mxu0 %v504
  %v1167 = vpop.f32.mrf.mxu0
  %v1168 = vadd.f32 %v179, %v1167
  %v1169 = vpop.f32.mrf.mxu0
  %1170 = vmatprep.mubr.f32.mxu0 0.0
  %1171 = vmatmul.mubr.f32.gmra.mxu0 %v507
  %v1172 = vpop.f32.mrf.mxu0
  %v1173 = vadd.f32 %v179, %v1172
  %v1174 = vpop.f32.mrf.mxu0
  %1175 = vmatprep.mubr.f32.mxu0 0.0
  %1176 = vmatmul.mubr.f32.gmra.mxu0 %v510
  %v1177 = vpop.f32.mrf.mxu0
  %v1178 = vadd.f32 %v179, %v1177
  %v1179 = vpop.f32.mrf.mxu0
  %1180 = vmatprep.mubr.f32.mxu0 0.0
  %1181 = vmatmul.mubr.f32.gmra.mxu0 %v513
  %v1182 = vpop.f32.mrf.mxu0
  %v1183 = vadd.f32 %v179, %v1182
  %v1184 = vpop.f32.mrf.mxu0
  %1185 = vmatprep.mubr.f32.mxu0 0.0
  %1186 = vmatmul.mubr.f32.gmra.mxu0 %v516
  %v1187 = vpop.f32.mrf.mxu0
  %v1188 = vadd.f32 %v179, %v1187
  %v1189 = vpop.f32.mrf.mxu0
  %1190 = vmatprep.mubr.f32.mxu0 0.0
  %1191 = vmatmul.mubr.f32.gmra.mxu0 %v519
  %v1192 = vpop.f32.mrf.mxu0
  %v1193 = vadd.f32 %v179, %v1192
  %v1194 = vpop.f32.mrf.mxu0
  %1195 = vmatprep.mubr.f32.mxu0 0.0
  %1196 = vmatmul.mubr.f32.gmra.mxu0 %v522
  %v1197 = vpop.f32.mrf.mxu0
  %v1198 = vadd.f32 %v179, %v1197
  %v1199 = vpop.f32.mrf.mxu0
  %1200 = vmatprep.mubr.f32.mxu0 0.0
  %1201 = vmatmul.mubr.f32.gmra.mxu0 %v525
  %v1202 = vpop.f32.mrf.mxu0
  %v1203 = vadd.f32 %v179, %v1202
  %v1204 = vpop.f32.mrf.mxu0
  %1205 = vmatprep.mubr.f32.mxu0 0.0
  %1206 = vmatmul.mubr.f32.gmra.mxu0 %v528
  %v1207 = vpop.f32.mrf.mxu0
  %v1208 = vadd.f32 %v179, %v1207
  %v1209 = vpop.f32.mrf.mxu0
  %1210 = vmatprep.mubr.f32.mxu0 0.0
  %1211 = vmatmul.mubr.f32.gmra.mxu0 %v531
  %v1212 = vpop.f32.mrf.mxu0
  %v1213 = vadd.f32 %v179, %v1212
  %v1214 = vpop.f32.mrf.mxu0
  %1215 = vmatprep.mubr.f32.mxu0 0.0
  %1216 = vmatmul.mubr.f32.gmra.mxu0 %v534
  %v1217 = vpop.f32.mrf.mxu0
  %v1218 = vadd.f32 %v179, %v1217
  %v1219 = vpop.f32.mrf.mxu0
  %1220 = vmatprep.mubr.f32.mxu0 0.0
  %1221 = vmatmul.mubr.f32.gmra.mxu0 %v537
  %v1222 = vpop.f32.mrf.mxu0
  %v1223 = vadd.f32 %v179, %v1222
  %v1224 = vpop.f32.mrf.mxu0
  %1225 = vmatprep.mubr.f32.mxu0 0.0
  %1226 = vmatmul.mubr.f32.gmra.mxu0 %v540
  %v1227 = vpop.f32.mrf.mxu0
  %v1228 = vadd.f32 %v179, %v1227
  %v1229 = vpop.f32.mrf.mxu0
  %1230 = vmatprep.mubr.f32.mxu0 0.0
  %1231 = vmatmul.mubr.f32.gmra.mxu0 %v543
  %v1232 = vpop.f32.mrf.mxu0
  %v1233 = vadd.f32 %v179, %v1232
  %v1234 = vpop.f32.mrf.mxu0
  %1235 = vmatprep.mubr.f32.mxu0 0.0
  %1236 = vmatmul.mubr.f32.gmra.mxu0 %v546
  %v1237 = vpop.f32.mrf.mxu0
  %v1238 = vadd.f32 %v179, %v1237
  %v1239 = vpop.f32.mrf.mxu0
  %1240 = vmatprep.mubr.f32.mxu0 0.0
  %1241 = vmatmul.mubr.f32.gmra.mxu0 %v549
  %v1242 = vpop.f32.mrf.mxu0
  %v1243 = vadd.f32 %v179, %v1242
  %v1244 = vpop.f32.mrf.mxu0
  %1245 = vmatprep.mubr.f32.mxu0 0.0
  %1246 = vmatmul.mubr.f32.gmra.mxu0 %v552
  %v1247 = vpop.f32.mrf.mxu0
  %v1248 = vadd.f32 %v179, %v1247
  %v1249 = vpop.f32.mrf.mxu0
  %1250 = vmatprep.mubr.f32.mxu0 0.0
  %1251 = vmatmul.mubr.f32.gmra.mxu0 %v555
  %v1252 = vpop.f32.mrf.mxu0
  %v1253 = vadd.f32 %v179, %v1252
  %v1254 = vpop.f32.mrf.mxu0
  %1255 = vmatprep.mubr.f32.mxu0 0.0
  %1256 = vmatmul.mubr.f32.gmra.mxu0 %v558
  %v1257 = vpop.f32.mrf.mxu0
  %v1258 = vadd.f32 %v179, %v1257
  %v1259 = vpop.f32.mrf.mxu0
  %1260 = vmatprep.mubr.f32.mxu0 0.0
  %1261 = vmatmul.mubr.f32.gmra.mxu0 %v561
  %v1262 = vpop.f32.mrf.mxu0
  %v1263 = vadd.f32 %v179, %v1262
  %v1264 = vpop.f32.mrf.mxu0
  %1265 = vmatprep.mubr.f32.mxu0 0.0
  %1266 = vmatmul.mubr.f32.gmra.mxu0 %v564
  %v1267 = vpop.f32.mrf.mxu0
  %v1268 = vadd.f32 %v179, %v1267
  %v1269 = vpop.f32.mrf.mxu0
  %1270 = vdwg.mxu0
  %v1271 = vmax.f32 %v633, 0.0
  %v1272 = vmax.f32 %v638, 0.0
  %v1273 = vmax.f32 %v643, 0.0
  %v1274 = vmax.f32 %v648, 0.0
  %v1275 = vmax.f32 %v653, 0.0
  %v1276 = vmax.f32 %v658, 0.0
  %v1277 = vmax.f32 %v663, 0.0
  %v1278 = vmax.f32 %v668, 0.0
  %v1279 = vmax.f32 %v673, 0.0
  %v1280 = vmax.f32 %v678, 0.0
  %v1281 = vmax.f32 %v683, 0.0
  %v1282 = vmax.f32 %v688, 0.0
  %v1283 = vmax.f32 %v693, 0.0
  %v1284 = vmax.f32 %v698, 0.0
  %v1285 = vmax.f32 %v703, 0.0
  %v1286 = vmax.f32 %v708, 0.0
  %v1287 = vmax.f32 %v713, 0.0
  %v1288 = vmax.f32 %v718, 0.0
  %v1289 = vmax.f32 %v723, 0.0
  %v1290 = vmax.f32 %v728, 0.0
  %v1291 = vmax.f32 %v733, 0.0
  %v1292 = vmax.f32 %v738, 0.0
  %v1293 = vmax.f32 %v743, 0.0
  %v1294 = vmax.f32 %v748, 0.0
  %v1295 = vmax.f32 %v753, 0.0
  %v1296 = vmax.f32 %v758, 0.0
  %v1297 = vmax.f32 %v763, 0.0
  %v1298 = vmax.f32 %v768, 0.0
  %v1299 = vmax.f32 %v773, 0.0
  %v1300 = vmax.f32 %v778, 0.0
  %v1301 = vmax.f32 %v783, 0.0
  %v1302 = vmax.f32 %v788, 0.0
  %v1303 = vmax.f32 %v793, 0.0
  %v1304 = vmax.f32 %v798, 0.0
  %v1305 = vmax.f32 %v803, 0.0
  %v1306 = vmax.f32 %v808, 0.0
  %v1307 = vmax.f32 %v813, 0.0
  %v1308 = vmax.f32 %v818, 0.0
  %v1309 = vmax.f32 %v823, 0.0
  %v1310 = vmax.f32 %v828, 0.0
  %v1311 = vmax.f32 %v833, 0.0
  %v1312 = vmax.f32 %v838, 0.0
  %v1313 = vmax.f32 %v843, 0.0
  %v1314 = vmax.f32 %v848, 0.0
  %v1315 = vmax.f32 %v853, 0.0
  %v1316 = vmax.f32 %v858, 0.0
  %v1317 = vmax.f32 %v863, 0.0
  %v1318 = vmax.f32 %v868, 0.0
  %v1319 = vmax.f32 %v873, 0.0
  %v1320 = vmax.f32 %v878, 0.0
  %v1321 = vmax.f32 %v883, 0.0
  %v1322 = vmax.f32 %v888, 0.0
  %v1323 = vmax.f32 %v893, 0.0
  %v1324 = vmax.f32 %v898, 0.0
  %v1325 = vmax.f32 %v903, 0.0
  %v1326 = vmax.f32 %v908, 0.0
  %v1327 = vmax.f32 %v913, 0.0
  %v1328 = vmax.f32 %v918, 0.0
  %v1329 = vmax.f32 %v923, 0.0
  %v1330 = vmax.f32 %v928, 0.0
  %v1331 = vmax.f32 %v933, 0.0
  %v1332 = vmax.f32 %v938, 0.0
  %v1333 = vmax.f32 %v943, 0.0
  %v1334 = vmax.f32 %v948, 0.0
  %v1335 = vmax.f32 %v953, 0.0
  %v1336 = vmax.f32 %v958, 0.0
  %v1337 = vmax.f32 %v963, 0.0
  %v1338 = vmax.f32 %v968, 0.0
  %v1339 = vmax.f32 %v973, 0.0
  %v1340 = vmax.f32 %v978, 0.0
  %v1341 = vmax.f32 %v983, 0.0
  %v1342 = vmax.f32 %v988, 0.0
  %v1343 = vmax.f32 %v993, 0.0
  %v1344 = vmax.f32 %v998, 0.0
  %v1345 = vmax.f32 %v1003, 0.0
  %v1346 = vmax.f32 %v1008, 0.0
  %v1347 = vmax.f32 %v1013, 0.0
  %v1348 = vmax.f32 %v1018, 0.0
  %v1349 = vmax.f32 %v1023, 0.0
  %v1350 = vmax.f32 %v1028, 0.0
  %v1351 = vmax.f32 %v1033, 0.0
  %v1352 = vmax.f32 %v1038, 0.0
  %v1353 = vmax.f32 %v1043, 0.0
  %v1354 = vmax.f32 %v1048, 0.0
  %v1355 = vmax.f32 %v1053, 0.0
  %v1356 = vmax.f32 %v1058, 0.0
  %v1357 = vmax.f32 %v1063, 0.0
  %v1358 = vmax.f32 %v1068, 0.0
  %v1359 = vmax.f32 %v1073, 0.0
  %v1360 = vmax.f32 %v1078, 0.0
  %v1361 = vmax.f32 %v1083, 0.0
  %v1362 = vmax.f32 %v1088, 0.0
  %v1363 = vmax.f32 %v1093, 0.0
  %v1364 = vmax.f32 %v1098, 0.0
  %v1365 = vmax.f32 %v1103, 0.0
  %v1366 = vmax.f32 %v1108, 0.0
  %v1367 = vmax.f32 %v1113, 0.0
  %v1368 = vmax.f32 %v1118, 0.0
  %v1369 = vmax.f32 %v1123, 0.0
  %v1370 = vmax.f32 %v1128, 0.0
  %v1371 = vmax.f32 %v1133, 0.0
  %v1372 = vmax.f32 %v1138, 0.0
  %v1373 = vmax.f32 %v1143, 0.0
  %v1374 = vmax.f32 %v1148, 0.0
  %v1375 = vmax.f32 %v1153, 0.0
  %v1376 = vmax.f32 %v1158, 0.0
  %v1377 = vmax.f32 %v1163, 0.0
  %v1378 = vmax.f32 %v1168, 0.0
  %v1379 = vmax.f32 %v1173, 0.0
  %v1380 = vmax.f32 %v1178, 0.0
  %v1381 = vmax.f32 %v1183, 0.0
  %v1382 = vmax.f32 %v1188, 0.0
  %v1383 = vmax.f32 %v1193, 0.0
  %v1384 = vmax.f32 %v1198, 0.0
  %v1385 = vmax.f32 %v1203, 0.0
  %v1386 = vmax.f32 %v1208, 0.0
  %v1387 = vmax.f32 %v1213, 0.0
  %v1388 = vmax.f32 %v1218, 0.0
  %v1389 = vmax.f32 %v1223, 0.0
  %v1390 = vmax.f32 %v1228, 0.0
  %v1391 = vmax.f32 %v1233, 0.0
  %v1392 = vmax.f32 %v1238, 0.0
  %v1393 = vmax.f32 %v1243, 0.0
  %v1394 = vmax.f32 %v1248, 0.0
  %v1395 = vmax.f32 %v1253, 0.0
  %v1396 = vmax.f32 %v1258, 0.0
  %v1397 = vmax.f32 %v1263, 0.0
  %v1398 = vmax.f32 %v1268, 0.0
  %1527 = vrot.lane.b32.xlu0 %v1271, 96
  %v1528 = vpop.permute.xlu0 %1527
  %1529 = vrot.lane.b32.xlu0 %v1272, 96
  %v1530 = vpop.permute.xlu0 %1529
  %1531 = vrot.lane.b32.xlu0 %v1273, 96
  %v1532 = vpop.permute.xlu0 %1531
  %1533 = vrot.lane.b32.xlu0 %v1274, 96
  %v1534 = vpop.permute.xlu0 %1533
  %1535 = vrot.lane.b32.xlu0 %v1275, 96
  %v1536 = vpop.permute.xlu0 %1535
  %1537 = vrot.lane.b32.xlu0 %v1276, 96
  %v1538 = vpop.permute.xlu0 %1537
  %1539 = vrot.lane.b32.xlu0 %v1277, 96
  %v1540 = vpop.permute.xlu0 %1539
  %1541 = vrot.lane.b32.xlu0 %v1278, 96
  %v1542 = vpop.permute.xlu0 %1541
  %1543 = vrot.lane.b32.xlu0 %v1279, 96
  %v1544 = vpop.permute.xlu0 %1543
  %1545 = vrot.lane.b32.xlu0 %v1280, 96
  %v1546 = vpop.permute.xlu0 %1545
  %1547 = vrot.lane.b32.xlu0 %v1281, 96
  %v1548 = vpop.permute.xlu0 %1547
  %1549 = vrot.lane.b32.xlu0 %v1282, 96
  %v1550 = vpop.permute.xlu0 %1549
  %1551 = vrot.lane.b32.xlu0 %v1283, 96
  %v1552 = vpop.permute.xlu0 %1551
  %1553 = vrot.lane.b32.xlu0 %v1284, 96
  %v1554 = vpop.permute.xlu0 %1553
  %1555 = vrot.lane.b32.xlu0 %v1285, 96
  %v1556 = vpop.permute.xlu0 %1555
  %1557 = vrot.lane.b32.xlu0 %v1286, 96
  %v1558 = vpop.permute.xlu0 %1557
  %1559 = vrot.lane.b32.xlu0 %v1287, 96
  %v1560 = vpop.permute.xlu0 %1559
  %1561 = vrot.lane.b32.xlu0 %v1288, 96
  %v1562 = vpop.permute.xlu0 %1561
  %1563 = vrot.lane.b32.xlu0 %v1289, 96
  %v1564 = vpop.permute.xlu0 %1563
  %1565 = vrot.lane.b32.xlu0 %v1290, 96
  %v1566 = vpop.permute.xlu0 %1565
  %1567 = vrot.lane.b32.xlu0 %v1291, 96
  %v1568 = vpop.permute.xlu0 %1567
  %1569 = vrot.lane.b32.xlu0 %v1292, 96
  %v1570 = vpop.permute.xlu0 %1569
  %1571 = vrot.lane.b32.xlu0 %v1293, 96
  %v1572 = vpop.permute.xlu0 %1571
  %1573 = vrot.lane.b32.xlu0 %v1294, 96
  %v1574 = vpop.permute.xlu0 %1573
  %1575 = vrot.lane.b32.xlu0 %v1295, 96
  %v1576 = vpop.permute.xlu0 %1575
  %1577 = vrot.lane.b32.xlu0 %v1296, 96
  %v1578 = vpop.permute.xlu0 %1577
  %1579 = vrot.lane.b32.xlu0 %v1297, 96
  %v1580 = vpop.permute.xlu0 %1579
  %1581 = vrot.lane.b32.xlu0 %v1298, 96
  %v1582 = vpop.permute.xlu0 %1581
  %1583 = vrot.lane.b32.xlu0 %v1299, 96
  %v1584 = vpop.permute.xlu0 %1583
  %1585 = vrot.lane.b32.xlu0 %v1300, 96
  %v1586 = vpop.permute.xlu0 %1585
  %1587 = vrot.lane.b32.xlu0 %v1301, 96
  %v1588 = vpop.permute.xlu0 %1587
  %1589 = vrot.lane.b32.xlu0 %v1302, 96
  %v1590 = vpop.permute.xlu0 %1589
  %1591 = vrot.lane.b32.xlu0 %v1303, 96
  %v1592 = vpop.permute.xlu0 %1591
  %1593 = vrot.lane.b32.xlu0 %v1304, 96
  %v1594 = vpop.permute.xlu0 %1593
  %1595 = vrot.lane.b32.xlu0 %v1305, 96
  %v1596 = vpop.permute.xlu0 %1595
  %1597 = vrot.lane.b32.xlu0 %v1306, 96
  %v1598 = vpop.permute.xlu0 %1597
  %1599 = vrot.lane.b32.xlu0 %v1307, 96
  %v1600 = vpop.permute.xlu0 %1599
  %1601 = vrot.lane.b32.xlu0 %v1308, 96
  %v1602 = vpop.permute.xlu0 %1601
  %1603 = vrot.lane.b32.xlu0 %v1309, 96
  %v1604 = vpop.permute.xlu0 %1603
  %1605 = vrot.lane.b32.xlu0 %v1310, 96
  %v1606 = vpop.permute.xlu0 %1605
  %1607 = vrot.lane.b32.xlu0 %v1311, 96
  %v1608 = vpop.permute.xlu0 %1607
  %1609 = vrot.lane.b32.xlu0 %v1312, 96
  %v1610 = vpop.permute.xlu0 %1609
  %1611 = vrot.lane.b32.xlu0 %v1313, 96
  %v1612 = vpop.permute.xlu0 %1611
  %1613 = vrot.lane.b32.xlu0 %v1314, 96
  %v1614 = vpop.permute.xlu0 %1613
  %1615 = vrot.lane.b32.xlu0 %v1315, 96
  %v1616 = vpop.permute.xlu0 %1615
  %1617 = vrot.lane.b32.xlu0 %v1316, 96
  %v1618 = vpop.permute.xlu0 %1617
  %1619 = vrot.lane.b32.xlu0 %v1317, 96
  %v1620 = vpop.permute.xlu0 %1619
  %1621 = vrot.lane.b32.xlu0 %v1318, 96
  %v1622 = vpop.permute.xlu0 %1621
  %1623 = vrot.lane.b32.xlu0 %v1319, 96
  %v1624 = vpop.permute.xlu0 %1623
  %1625 = vrot.lane.b32.xlu0 %v1320, 96
  %v1626 = vpop.permute.xlu0 %1625
  %1627 = vrot.lane.b32.xlu0 %v1321, 96
  %v1628 = vpop.permute.xlu0 %1627
  %1629 = vrot.lane.b32.xlu0 %v1322, 96
  %v1630 = vpop.permute.xlu0 %1629
  %1631 = vrot.lane.b32.xlu0 %v1323, 96
  %v1632 = vpop.permute.xlu0 %1631
  %1633 = vrot.lane.b32.xlu0 %v1324, 96
  %v1634 = vpop.permute.xlu0 %1633
  %1635 = vrot.lane.b32.xlu0 %v1325, 96
  %v1636 = vpop.permute.xlu0 %1635
  %1637 = vrot.lane.b32.xlu0 %v1326, 96
  %v1638 = vpop.permute.xlu0 %1637
  %1639 = vrot.lane.b32.xlu0 %v1327, 96
  %v1640 = vpop.permute.xlu0 %1639
  %1641 = vrot.lane.b32.xlu0 %v1328, 96
  %v1642 = vpop.permute.xlu0 %1641
  %1643 = vrot.lane.b32.xlu0 %v1329, 96
  %v1644 = vpop.permute.xlu0 %1643
  %1645 = vrot.lane.b32.xlu0 %v1330, 96
  %v1646 = vpop.permute.xlu0 %1645
  %1647 = vrot.lane.b32.xlu0 %v1331, 96
  %v1648 = vpop.permute.xlu0 %1647
  %1649 = vrot.lane.b32.xlu0 %v1332, 96
  %v1650 = vpop.permute.xlu0 %1649
  %1651 = vrot.lane.b32.xlu0 %v1333, 96
  %v1652 = vpop.permute.xlu0 %1651
  %1653 = vrot.lane.b32.xlu0 %v1334, 96
  %v1654 = vpop.permute.xlu0 %1653
  %1655 = vrot.lane.b32.xlu0 %v1335, 96
  %v1656 = vpop.permute.xlu0 %1655
  %1657 = vrot.lane.b32.xlu0 %v1336, 96
  %v1658 = vpop.permute.xlu0 %1657
  %1659 = vrot.lane.b32.xlu0 %v1337, 96
  %v1660 = vpop.permute.xlu0 %1659
  %1661 = vrot.lane.b32.xlu0 %v1338, 96
  %v1662 = vpop.permute.xlu0 %1661
  %1663 = vrot.lane.b32.xlu0 %v1339, 96
  %v1664 = vpop.permute.xlu0 %1663
  %1665 = vrot.lane.b32.xlu0 %v1340, 96
  %v1666 = vpop.permute.xlu0 %1665
  %1667 = vrot.lane.b32.xlu0 %v1341, 96
  %v1668 = vpop.permute.xlu0 %1667
  %1669 = vrot.lane.b32.xlu0 %v1342, 96
  %v1670 = vpop.permute.xlu0 %1669
  %1671 = vrot.lane.b32.xlu0 %v1343, 96
  %v1672 = vpop.permute.xlu0 %1671
  %1673 = vrot.lane.b32.xlu0 %v1344, 96
  %v1674 = vpop.permute.xlu0 %1673
  %1675 = vrot.lane.b32.xlu0 %v1345, 96
  %v1676 = vpop.permute.xlu0 %1675
  %1677 = vrot.lane.b32.xlu0 %v1346, 96
  %v1678 = vpop.permute.xlu0 %1677
  %1679 = vrot.lane.b32.xlu0 %v1347, 96
  %v1680 = vpop.permute.xlu0 %1679
  %1681 = vrot.lane.b32.xlu0 %v1348, 96
  %v1682 = vpop.permute.xlu0 %1681
  %1683 = vrot.lane.b32.xlu0 %v1349, 96
  %v1684 = vpop.permute.xlu0 %1683
  %1685 = vrot.lane.b32.xlu0 %v1350, 96
  %v1686 = vpop.permute.xlu0 %1685
  %1687 = vrot.lane.b32.xlu0 %v1351, 96
  %v1688 = vpop.permute.xlu0 %1687
  %1689 = vrot.lane.b32.xlu0 %v1352, 96
  %v1690 = vpop.permute.xlu0 %1689
  %1691 = vrot.lane.b32.xlu0 %v1353, 96
  %v1692 = vpop.permute.xlu0 %1691
  %1693 = vrot.lane.b32.xlu0 %v1354, 96
  %v1694 = vpop.permute.xlu0 %1693
  %1695 = vrot.lane.b32.xlu0 %v1355, 96
  %v1696 = vpop.permute.xlu0 %1695
  %1697 = vrot.lane.b32.xlu0 %v1356, 96
  %v1698 = vpop.permute.xlu0 %1697
  %1699 = vrot.lane.b32.xlu0 %v1357, 96
  %v1700 = vpop.permute.xlu0 %1699
  %1701 = vrot.lane.b32.xlu0 %v1358, 96
  %v1702 = vpop.permute.xlu0 %1701
  %1703 = vrot.lane.b32.xlu0 %v1359, 96
  %v1704 = vpop.permute.xlu0 %1703
  %1705 = vrot.lane.b32.xlu0 %v1360, 96
  %v1706 = vpop.permute.xlu0 %1705
  %1707 = vrot.lane.b32.xlu0 %v1361, 96
  %v1708 = vpop.permute.xlu0 %1707
  %1709 = vrot.lane.b32.xlu0 %v1362, 96
  %v1710 = vpop.permute.xlu0 %1709
  %1711 = vrot.lane.b32.xlu0 %v1363, 96
  %v1712 = vpop.permute.xlu0 %1711
  %1713 = vrot.lane.b32.xlu0 %v1364, 96
  %v1714 = vpop.permute.xlu0 %1713
  %1715 = vrot.lane.b32.xlu0 %v1365, 96
  %v1716 = vpop.permute.xlu0 %1715
  %1717 = vrot.lane.b32.xlu0 %v1366, 96
  %v1718 = vpop.permute.xlu0 %1717
  %1719 = vrot.lane.b32.xlu0 %v1367, 96
  %v1720 = vpop.permute.xlu0 %1719
  %1721 = vrot.lane.b32.xlu0 %v1368, 96
  %v1722 = vpop.permute.xlu0 %1721
  %1723 = vrot.lane.b32.xlu0 %v1369, 96
  %v1724 = vpop.permute.xlu0 %1723
  %1725 = vrot.lane.b32.xlu0 %v1370, 96
  %v1726 = vpop.permute.xlu0 %1725
  %1727 = vrot.lane.b32.xlu0 %v1371, 96
  %v1728 = vpop.permute.xlu0 %1727
  %1729 = vrot.lane.b32.xlu0 %v1372, 96
  %v1730 = vpop.permute.xlu0 %1729
  %1731 = vrot.lane.b32.xlu0 %v1373, 96
  %v1732 = vpop.permute.xlu0 %1731
  %1733 = vrot.lane.b32.xlu0 %v1374, 96
  %v1734 = vpop.permute.xlu0 %1733
  %1735 = vrot.lane.b32.xlu0 %v1375, 96
  %v1736 = vpop.permute.xlu0 %1735
  %1737 = vrot.lane.b32.xlu0 %v1376, 96
  %v1738 = vpop.permute.xlu0 %1737
  %1739 = vrot.lane.b32.xlu0 %v1377, 96
  %v1740 = vpop.permute.xlu0 %1739
  %1741 = vrot.lane.b32.xlu0 %v1378, 96
  %v1742 = vpop.permute.xlu0 %1741
  %1743 = vrot.lane.b32.xlu0 %v1379, 96
  %v1744 = vpop.permute.xlu0 %1743
  %1745 = vrot.lane.b32.xlu0 %v1380, 96
  %v1746 = vpop.permute.xlu0 %1745
  %1747 = vrot.lane.b32.xlu0 %v1381, 96
  %v1748 = vpop.permute.xlu0 %1747
  %1749 = vrot.lane.b32.xlu0 %v1382, 96
  %v1750 = vpop.permute.xlu0 %1749
  %1751 = vrot.lane.b32.xlu0 %v1383, 96
  %v1752 = vpop.permute.xlu0 %1751
  %1753 = vrot.lane.b32.xlu0 %v1384, 96
  %v1754 = vpop.permute.xlu0 %1753
  %1755 = vrot.lane.b32.xlu0 %v1385, 96
  %v1756 = vpop.permute.xlu0 %1755
  %1757 = vrot.lane.b32.xlu0 %v1386, 96
  %v1758 = vpop.permute.xlu0 %1757
  %1759 = vrot.lane.b32.xlu0 %v1387, 96
  %v1760 = vpop.permute.xlu0 %1759
  %1761 = vrot.lane.b32.xlu0 %v1388, 96
  %v1762 = vpop.permute.xlu0 %1761
  %1763 = vrot.lane.b32.xlu0 %v1389, 96
  %v1764 = vpop.permute.xlu0 %1763
  %1765 = vrot.lane.b32.xlu0 %v1390, 96
  %v1766 = vpop.permute.xlu0 %1765
  %1767 = vrot.lane.b32.xlu0 %v1391, 96
  %v1768 = vpop.permute.xlu0 %1767
  %1769 = vrot.lane.b32.xlu0 %v1392, 96
  %v1770 = vpop.permute.xlu0 %1769
  %1771 = vrot.lane.b32.xlu0 %v1393, 96
  %v1772 = vpop.permute.xlu0 %1771
  %1773 = vrot.lane.b32.xlu0 %v1394, 96
  %v1774 = vpop.permute.xlu0 %1773
  %1775 = vrot.lane.b32.xlu0 %v1395, 96
  %v1776 = vpop.permute.xlu0 %1775
  %1777 = vrot.lane.b32.xlu0 %v1396, 96
  %v1778 = vpop.permute.xlu0 %1777
  %1779 = vrot.lane.b32.xlu0 %v1397, 96
  %v1780 = vpop.permute.xlu0 %1779
  %1781 = vrot.lane.b32.xlu0 %v1398, 96
  %v1782 = vpop.permute.xlu0 %1781
  %v1911 = vadd.f32 %v1271, %v1528
  %v1912 = vadd.f32 %v1272, %v1530
  %v1913 = vadd.f32 %v1273, %v1532
  %v1914 = vadd.f32 %v1274, %v1534
  %v1915 = vadd.f32 %v1275, %v1536
  %v1916 = vadd.f32 %v1276, %v1538
  %v1917 = vadd.f32 %v1277, %v1540
  %v1918 = vadd.f32 %v1278, %v1542
  %v1919 = vadd.f32 %v1279, %v1544
  %v1920 = vadd.f32 %v1280, %v1546
  %v1921 = vadd.f32 %v1281, %v1548
  %v1922 = vadd.f32 %v1282, %v1550
  %v1923 = vadd.f32 %v1283, %v1552
  %v1924 = vadd.f32 %v1284, %v1554
  %v1925 = vadd.f32 %v1285, %v1556
  %v1926 = vadd.f32 %v1286, %v1558
  %v1927 = vadd.f32 %v1287, %v1560
  %v1928 = vadd.f32 %v1288, %v1562
  %v1929 = vadd.f32 %v1289, %v1564
  %v1930 = vadd.f32 %v1290, %v1566
  %v1931 = vadd.f32 %v1291, %v1568
  %v1932 = vadd.f32 %v1292, %v1570
  %v1933 = vadd.f32 %v1293, %v1572
  %v1934 = vadd.f32 %v1294, %v1574
  %v1935 = vadd.f32 %v1295, %v1576
  %v1936 = vadd.f32 %v1296, %v1578
  %v1937 = vadd.f32 %v1297, %v1580
  %v1938 = vadd.f32 %v1298, %v1582
  %v1939 = vadd.f32 %v1299, %v1584
  %v1940 = vadd.f32 %v1300, %v1586
  %v1941 = vadd.f32 %v1301, %v1588
  %v1942 = vadd.f32 %v1302, %v1590
  %v1943 = vadd.f32 %v1303, %v1592
  %v1944 = vadd.f32 %v1304, %v1594
  %v1945 = vadd.f32 %v1305, %v1596
  %v1946 = vadd.f32 %v1306, %v1598
  %v1947 = vadd.f32 %v1307, %v1600
  %v1948 = vadd.f32 %v1308, %v1602
  %v1949 = vadd.f32 %v1309, %v1604
  %v1950 = vadd.f32 %v1310, %v1606
  %v1951 = vadd.f32 %v1311, %v1608
  %v1952 = vadd.f32 %v1312, %v1610
  %v1953 = vadd.f32 %v1313, %v1612
  %v1954 = vadd.f32 %v1314, %v1614
  %v1955 = vadd.f32 %v1315, %v1616
  %v1956 = vadd.f32 %v1316, %v1618
  %v1957 = vadd.f32 %v1317, %v1620
  %v1958 = vadd.f32 %v1318, %v1622
  %v1959 = vadd.f32 %v1319, %v1624
  %v1960 = vadd.f32 %v1320, %v1626
  %v1961 = vadd.f32 %v1321, %v1628
  %v1962 = vadd.f32 %v1322, %v1630
  %v1963 = vadd.f32 %v1323, %v1632
  %v1964 = vadd.f32 %v1324, %v1634
  %v1965 = vadd.f32 %v1325, %v1636
  %v1966 = vadd.f32 %v1326, %v1638
  %v1967 = vadd.f32 %v1327, %v1640
  %v1968 = vadd.f32 %v1328, %v1642
  %v1969 = vadd.f32 %v1329, %v1644
  %v1970 = vadd.f32 %v1330, %v1646
  %v1971 = vadd.f32 %v1331, %v1648
  %v1972 = vadd.f32 %v1332, %v1650
  %v1973 = vadd.f32 %v1333, %v1652
  %v1974 = vadd.f32 %v1334, %v1654
  %v1975 = vadd.f32 %v1335, %v1656
  %v1976 = vadd.f32 %v1336, %v1658
  %v1977 = vadd.f32 %v1337, %v1660
  %v1978 = vadd.f32 %v1338, %v1662
  %v1979 = vadd.f32 %v1339, %v1664
  %v1980 = vadd.f32 %v1340, %v1666
  %v1981 = vadd.f32 %v1341, %v1668
  %v1982 = vadd.f32 %v1342, %v1670
  %v1983 = vadd.f32 %v1343, %v1672
  %v1984 = vadd.f32 %v1344, %v1674
  %v1985 = vadd.f32 %v1345, %v1676
  %v1986 = vadd.f32 %v1346, %v1678
  %v1987 = vadd.f32 %v1347, %v1680
  %v1988 = vadd.f32 %v1348, %v1682
  %v1989 = vadd.f32 %v1349, %v1684
  %v1990 = vadd.f32 %v1350, %v1686
  %v1991 = vadd.f32 %v1351, %v1688
  %v1992 = vadd.f32 %v1352, %v1690
  %v1993 = vadd.f32 %v1353, %v1692
  %v1994 = vadd.f32 %v1354, %v1694
  %v1995 = vadd.f32 %v1355, %v1696
  %v1996 = vadd.f32 %v1356, %v1698
  %v1997 = vadd.f32 %v1357, %v1700
  %v1998 = vadd.f32 %v1358, %v1702
  %v1999 = vadd.f32 %v1359, %v1704
  %v2000 = vadd.f32 %v1360, %v1706
  %v2001 = vadd.f32 %v1361, %v1708
  %v2002 = vadd.f32 %v1362, %v1710
  %v2003 = vadd.f32 %v1363, %v1712
  %v2004 = vadd.f32 %v1364, %v1714
  %v2005 = vadd.f32 %v1365, %v1716
  %v2006 = vadd.f32 %v1366, %v1718
  %v2007 = vadd.f32 %v1367, %v1720
  %v2008 = vadd.f32 %v1368, %v1722
  %v2009 = vadd.f32 %v1369, %v1724
  %v2010 = vadd.f32 %v1370, %v1726
  %v2011 = vadd.f32 %v1371, %v1728
  %v2012 = vadd.f32 %v1372, %v1730
  %v2013 = vadd.f32 %v1373, %v1732
  %v2014 = vadd.f32 %v1374, %v1734
  %v2015 = vadd.f32 %v1375, %v1736
  %v2016 = vadd.f32 %v1376, %v1738
  %v2017 = vadd.f32 %v1377, %v1740
  %v2018 = vadd.f32 %v1378, %v1742
  %v2019 = vadd.f32 %v1379, %v1744
  %v2020 = vadd.f32 %v1380, %v1746
  %v2021 = vadd.f32 %v1381, %v1748
  %v2022 = vadd.f32 %v1382, %v1750
  %v2023 = vadd.f32 %v1383, %v1752
  %v2024 = vadd.f32 %v1384, %v1754
  %v2025 = vadd.f32 %v1385, %v1756
  %v2026 = vadd.f32 %v1386, %v1758
  %v2027 = vadd.f32 %v1387, %v1760
  %v2028 = vadd.f32 %v1388, %v1762
  %v2029 = vadd.f32 %v1389, %v1764
  %v2030 = vadd.f32 %v1390, %v1766
  %v2031 = vadd.f32 %v1391, %v1768
  %v2032 = vadd.f32 %v1392, %v1770
  %v2033 = vadd.f32 %v1393, %v1772
  %v2034 = vadd.f32 %v1394, %v1774
  %v2035 = vadd.f32 %v1395, %v1776
  %v2036 = vadd.f32 %v1396, %v1778
  %v2037 = vadd.f32 %v1397, %v1780
  %v2038 = vadd.f32 %v1398, %v1782
  %vm2039 = vcmask 261120
  %v2040 = vsel %vm2039, %v1911, 0.0
  %v2041 = vsel %vm2039, %v1912, 0.0
  %v2042 = vadd.f32 %v2040, %v2041
  %v2043 = vsel %vm2039, %v1913, 0.0
  %v2044 = vadd.f32 %v2042, %v2043
  %v2045 = vsel %vm2039, %v1914, 0.0
  %v2046 = vadd.f32 %v2044, %v2045
  %v2047 = vrot.slane %v2046, 4
  %v2048 = vadd.f32 %v2046, %v2047
  %v2049 = vrot.slane %v2048, 2
  %v2050 = vadd.f32 %v2048, %v2049
  %v2051 = vrot.slane %v2050, 1
  %v2052 = vadd.f32 %v2050, %v2051
  %v2053 = vsel %vm2039, %v1915, 0.0
  %v2054 = vsel %vm2039, %v1916, 0.0
  %v2055 = vadd.f32 %v2053, %v2054
  %v2056 = vsel %vm2039, %v1917, 0.0
  %v2057 = vadd.f32 %v2055, %v2056
  %v2058 = vsel %vm2039, %v1918, 0.0
  %v2059 = vadd.f32 %v2057, %v2058
  %v2060 = vrot.slane %v2059, 4
  %v2061 = vadd.f32 %v2059, %v2060
  %v2062 = vrot.slane %v2061, 2
  %v2063 = vadd.f32 %v2061, %v2062
  %v2064 = vrot.slane %v2063, 1
  %v2065 = vadd.f32 %v2063, %v2064
  %v2066 = vsel %vm2039, %v1919, 0.0
  %v2067 = vsel %vm2039, %v1920, 0.0
  %v2068 = vadd.f32 %v2066, %v2067
  %v2069 = vsel %vm2039, %v1921, 0.0
  %v2070 = vadd.f32 %v2068, %v2069
  %v2071 = vsel %vm2039, %v1922, 0.0
  %v2072 = vadd.f32 %v2070, %v2071
  %v2073 = vrot.slane %v2072, 4
  %v2074 = vadd.f32 %v2072, %v2073
  %v2075 = vrot.slane %v2074, 2
  %v2076 = vadd.f32 %v2074, %v2075
  %v2077 = vrot.slane %v2076, 1
  %v2078 = vadd.f32 %v2076, %v2077
  %v2079 = vsel %vm2039, %v1923, 0.0
  %v2080 = vsel %vm2039, %v1924, 0.0
  %v2081 = vadd.f32 %v2079, %v2080
  %v2082 = vsel %vm2039, %v1925, 0.0
  %v2083 = vadd.f32 %v2081, %v2082
  %v2084 = vsel %vm2039, %v1926, 0.0
  %v2085 = vadd.f32 %v2083, %v2084
  %v2086 = vrot.slane %v2085, 4
  %v2087 = vadd.f32 %v2085, %v2086
  %v2088 = vrot.slane %v2087, 2
  %v2089 = vadd.f32 %v2087, %v2088
  %v2090 = vrot.slane %v2089, 1
  %v2091 = vadd.f32 %v2089, %v2090
  %v2092 = vsel %vm2039, %v1927, 0.0
  %v2093 = vsel %vm2039, %v1928, 0.0
  %v2094 = vadd.f32 %v2092, %v2093
  %v2095 = vsel %vm2039, %v1929, 0.0
  %v2096 = vadd.f32 %v2094, %v2095
  %v2097 = vsel %vm2039, %v1930, 0.0
  %v2098 = vadd.f32 %v2096, %v2097
  %v2099 = vrot.slane %v2098, 4
  %v2100 = vadd.f32 %v2098, %v2099
  %v2101 = vrot.slane %v2100, 2
  %v2102 = vadd.f32 %v2100, %v2101
  %v2103 = vrot.slane %v2102, 1
  %v2104 = vadd.f32 %v2102, %v2103
  %v2105 = vsel %vm2039, %v1931, 0.0
  %v2106 = vsel %vm2039, %v1932, 0.0
  %v2107 = vadd.f32 %v2105, %v2106
  %v2108 = vsel %vm2039, %v1933, 0.0
  %v2109 = vadd.f32 %v2107, %v2108
  %v2110 = vsel %vm2039, %v1934, 0.0
  %v2111 = vadd.f32 %v2109, %v2110
  %v2112 = vrot.slane %v2111, 4
  %v2113 = vadd.f32 %v2111, %v2112
  %v2114 = vrot.slane %v2113, 2
  %v2115 = vadd.f32 %v2113, %v2114
  %v2116 = vrot.slane %v2115, 1
  %v2117 = vadd.f32 %v2115, %v2116
  %v2118 = vsel %vm2039, %v1935, 0.0
  %v2119 = vsel %vm2039, %v1936, 0.0
  %v2120 = vadd.f32 %v2118, %v2119
  %v2121 = vsel %vm2039, %v1937, 0.0
  %v2122 = vadd.f32 %v2120, %v2121
  %v2123 = vsel %vm2039, %v1938, 0.0
  %v2124 = vadd.f32 %v2122, %v2123
  %v2125 = vrot.slane %v2124, 4
  %v2126 = vadd.f32 %v2124, %v2125
  %v2127 = vrot.slane %v2126, 2
  %v2128 = vadd.f32 %v2126, %v2127
  %v2129 = vrot.slane %v2128, 1
  %v2130 = vadd.f32 %v2128, %v2129
  %v2131 = vsel %vm2039, %v1939, 0.0
  %v2132 = vsel %vm2039, %v1940, 0.0
  %v2133 = vadd.f32 %v2131, %v2132
  %v2134 = vsel %vm2039, %v1941, 0.0
  %v2135 = vadd.f32 %v2133, %v2134
  %v2136 = vsel %vm2039, %v1942, 0.0
  %v2137 = vadd.f32 %v2135, %v2136
  %v2138 = vrot.slane %v2137, 4
  %v2139 = vadd.f32 %v2137, %v2138
  %v2140 = vrot.slane %v2139, 2
  %v2141 = vadd.f32 %v2139, %v2140
  %v2142 = vrot.slane %v2141, 1
  %v2143 = vadd.f32 %v2141, %v2142
  %v2144 = vsel %vm2039, %v1943, 0.0
  %v2145 = vsel %vm2039, %v1944, 0.0
  %v2146 = vadd.f32 %v2144, %v2145
  %v2147 = vsel %vm2039, %v1945, 0.0
  %v2148 = vadd.f32 %v2146, %v2147
  %v2149 = vsel %vm2039, %v1946, 0.0
  %v2150 = vadd.f32 %v2148, %v2149
  %v2151 = vrot.slane %v2150, 4
  %v2152 = vadd.f32 %v2150, %v2151
  %v2153 = vrot.slane %v2152, 2
  %v2154 = vadd.f32 %v2152, %v2153
  %v2155 = vrot.slane %v2154, 1
  %v2156 = vadd.f32 %v2154, %v2155
  %v2157 = vsel %vm2039, %v1947, 0.0
  %v2158 = vsel %vm2039, %v1948, 0.0
  %v2159 = vadd.f32 %v2157, %v2158
  %v2160 = vsel %vm2039, %v1949, 0.0
  %v2161 = vadd.f32 %v2159, %v2160
  %v2162 = vsel %vm2039, %v1950, 0.0
  %v2163 = vadd.f32 %v2161, %v2162
  %v2164 = vrot.slane %v2163, 4
  %v2165 = vadd.f32 %v2163, %v2164
  %v2166 = vrot.slane %v2165, 2
  %v2167 = vadd.f32 %v2165, %v2166
  %v2168 = vrot.slane %v2167, 1
  %v2169 = vadd.f32 %v2167, %v2168
  %v2170 = vsel %vm2039, %v1951, 0.0
  %v2171 = vsel %vm2039, %v1952, 0.0
  %v2172 = vadd.f32 %v2170, %v2171
  %v2173 = vsel %vm2039, %v1953, 0.0
  %v2174 = vadd.f32 %v2172, %v2173
  %v2175 = vsel %vm2039, %v1954, 0.0
  %v2176 = vadd.f32 %v2174, %v2175
  %v2177 = vrot.slane %v2176, 4
  %v2178 = vadd.f32 %v2176, %v2177
  %v2179 = vrot.slane %v2178, 2
  %v2180 = vadd.f32 %v2178, %v2179
  %v2181 = vrot.slane %v2180, 1
  %v2182 = vadd.f32 %v2180, %v2181
  %v2183 = vsel %vm2039, %v1955, 0.0
  %v2184 = vsel %vm2039, %v1956, 0.0
  %v2185 = vadd.f32 %v2183, %v2184
  %v2186 = vsel %vm2039, %v1957, 0.0
  %v2187 = vadd.f32 %v2185, %v2186
  %v2188 = vsel %vm2039, %v1958, 0.0
  %v2189 = vadd.f32 %v2187, %v2188
  %v2190 = vrot.slane %v2189, 4
  %v2191 = vadd.f32 %v2189, %v2190
  %v2192 = vrot.slane %v2191, 2
  %v2193 = vadd.f32 %v2191, %v2192
  %v2194 = vrot.slane %v2193, 1
  %v2195 = vadd.f32 %v2193, %v2194
  %v2196 = vsel %vm2039, %v1959, 0.0
  %v2197 = vsel %vm2039, %v1960, 0.0
  %v2198 = vadd.f32 %v2196, %v2197
  %v2199 = vsel %vm2039, %v1961, 0.0
  %v2200 = vadd.f32 %v2198, %v2199
  %v2201 = vsel %vm2039, %v1962, 0.0
  %v2202 = vadd.f32 %v2200, %v2201
  %v2203 = vrot.slane %v2202, 4
  %v2204 = vadd.f32 %v2202, %v2203
  %v2205 = vrot.slane %v2204, 2
  %v2206 = vadd.f32 %v2204, %v2205
  %v2207 = vrot.slane %v2206, 1
  %v2208 = vadd.f32 %v2206, %v2207
  %v2209 = vsel %vm2039, %v1963, 0.0
  %v2210 = vsel %vm2039, %v1964, 0.0
  %v2211 = vadd.f32 %v2209, %v2210
  %v2212 = vsel %vm2039, %v1965, 0.0
  %v2213 = vadd.f32 %v2211, %v2212
  %v2214 = vsel %vm2039, %v1966, 0.0
  %v2215 = vadd.f32 %v2213, %v2214
  %v2216 = vrot.slane %v2215, 4
  %v2217 = vadd.f32 %v2215, %v2216
  %v2218 = vrot.slane %v2217, 2
  %v2219 = vadd.f32 %v2217, %v2218
  %v2220 = vrot.slane %v2219, 1
  %v2221 = vadd.f32 %v2219, %v2220
  %v2222 = vsel %vm2039, %v1967, 0.0
  %v2223 = vsel %vm2039, %v1968, 0.0
  %v2224 = vadd.f32 %v2222, %v2223
  %v2225 = vsel %vm2039, %v1969, 0.0
  %v2226 = vadd.f32 %v2224, %v2225
  %v2227 = vsel %vm2039, %v1970, 0.0
  %v2228 = vadd.f32 %v2226, %v2227
  %v2229 = vrot.slane %v2228, 4
  %v2230 = vadd.f32 %v2228, %v2229
  %v2231 = vrot.slane %v2230, 2
  %v2232 = vadd.f32 %v2230, %v2231
  %v2233 = vrot.slane %v2232, 1
  %v2234 = vadd.f32 %v2232, %v2233
  %v2235 = vsel %vm2039, %v1971, 0.0
  %v2236 = vsel %vm2039, %v1972, 0.0
  %v2237 = vadd.f32 %v2235, %v2236
  %v2238 = vsel %vm2039, %v1973, 0.0
  %v2239 = vadd.f32 %v2237, %v2238
  %v2240 = vsel %vm2039, %v1974, 0.0
  %v2241 = vadd.f32 %v2239, %v2240
  %v2242 = vrot.slane %v2241, 4
  %v2243 = vadd.f32 %v2241, %v2242
  %v2244 = vrot.slane %v2243, 2
  %v2245 = vadd.f32 %v2243, %v2244
  %v2246 = vrot.slane %v2245, 1
  %v2247 = vadd.f32 %v2245, %v2246
  %v2248 = vsel %vm2039, %v1975, 0.0
  %v2249 = vsel %vm2039, %v1976, 0.0
  %v2250 = vadd.f32 %v2248, %v2249
  %v2251 = vsel %vm2039, %v1977, 0.0
  %v2252 = vadd.f32 %v2250, %v2251
  %v2253 = vsel %vm2039, %v1978, 0.0
  %v2254 = vadd.f32 %v2252, %v2253
  %v2255 = vrot.slane %v2254, 4
  %v2256 = vadd.f32 %v2254, %v2255
  %v2257 = vrot.slane %v2256, 2
  %v2258 = vadd.f32 %v2256, %v2257
  %v2259 = vrot.slane %v2258, 1
  %v2260 = vadd.f32 %v2258, %v2259
  %v2261 = vsel %vm2039, %v1979, 0.0
  %v2262 = vsel %vm2039, %v1980, 0.0
  %v2263 = vadd.f32 %v2261, %v2262
  %v2264 = vsel %vm2039, %v1981, 0.0
  %v2265 = vadd.f32 %v2263, %v2264
  %v2266 = vsel %vm2039, %v1982, 0.0
  %v2267 = vadd.f32 %v2265, %v2266
  %v2268 = vrot.slane %v2267, 4
  %v2269 = vadd.f32 %v2267, %v2268
  %v2270 = vrot.slane %v2269, 2
  %v2271 = vadd.f32 %v2269, %v2270
  %v2272 = vrot.slane %v2271, 1
  %v2273 = vadd.f32 %v2271, %v2272
  %v2274 = vsel %vm2039, %v1983, 0.0
  %v2275 = vsel %vm2039, %v1984, 0.0
  %v2276 = vadd.f32 %v2274, %v2275
  %v2277 = vsel %vm2039, %v1985, 0.0
  %v2278 = vadd.f32 %v2276, %v2277
  %v2279 = vsel %vm2039, %v1986, 0.0
  %v2280 = vadd.f32 %v2278, %v2279
  %v2281 = vrot.slane %v2280, 4
  %v2282 = vadd.f32 %v2280, %v2281
  %v2283 = vrot.slane %v2282, 2
  %v2284 = vadd.f32 %v2282, %v2283
  %v2285 = vrot.slane %v2284, 1
  %v2286 = vadd.f32 %v2284, %v2285
  %v2287 = vsel %vm2039, %v1987, 0.0
  %v2288 = vsel %vm2039, %v1988, 0.0
  %v2289 = vadd.f32 %v2287, %v2288
  %v2290 = vsel %vm2039, %v1989, 0.0
  %v2291 = vadd.f32 %v2289, %v2290
  %v2292 = vsel %vm2039, %v1990, 0.0
  %v2293 = vadd.f32 %v2291, %v2292
  %v2294 = vrot.slane %v2293, 4
  %v2295 = vadd.f32 %v2293, %v2294
  %v2296 = vrot.slane %v2295, 2
  %v2297 = vadd.f32 %v2295, %v2296
  %v2298 = vrot.slane %v2297, 1
  %v2299 = vadd.f32 %v2297, %v2298
  %v2300 = vsel %vm2039, %v1991, 0.0
  %v2301 = vsel %vm2039, %v1992, 0.0
  %v2302 = vadd.f32 %v2300, %v2301
  %v2303 = vsel %vm2039, %v1993, 0.0
  %v2304 = vadd.f32 %v2302, %v2303
  %v2305 = vsel %vm2039, %v1994, 0.0
  %v2306 = vadd.f32 %v2304, %v2305
  %v2307 = vrot.slane %v2306, 4
  %v2308 = vadd.f32 %v2306, %v2307
  %v2309 = vrot.slane %v2308, 2
  %v2310 = vadd.f32 %v2308, %v2309
  %v2311 = vrot.slane %v2310, 1
  %v2312 = vadd.f32 %v2310, %v2311
  %v2313 = vsel %vm2039, %v1995, 0.0
  %v2314 = vsel %vm2039, %v1996, 0.0
  %v2315 = vadd.f32 %v2313, %v2314
  %v2316 = vsel %vm2039, %v1997, 0.0
  %v2317 = vadd.f32 %v2315, %v2316
  %v2318 = vsel %vm2039, %v1998, 0.0
  %v2319 = vadd.f32 %v2317, %v2318
  %v2320 = vrot.slane %v2319, 4
  %v2321 = vadd.f32 %v2319, %v2320
  %v2322 = vrot.slane %v2321, 2
  %v2323 = vadd.f32 %v2321, %v2322
  %v2324 = vrot.slane %v2323, 1
  %v2325 = vadd.f32 %v2323, %v2324
  %v2326 = vsel %vm2039, %v1999, 0.0
  %v2327 = vsel %vm2039, %v2000, 0.0
  %v2328 = vadd.f32 %v2326, %v2327
  %v2329 = vsel %vm2039, %v2001, 0.0
  %v2330 = vadd.f32 %v2328, %v2329
  %v2331 = vsel %vm2039, %v2002, 0.0
  %v2332 = vadd.f32 %v2330, %v2331
  %v2333 = vrot.slane %v2332, 4
  %v2334 = vadd.f32 %v2332, %v2333
  %v2335 = vrot.slane %v2334, 2
  %v2336 = vadd.f32 %v2334, %v2335
  %v2337 = vrot.slane %v2336, 1
  %v2338 = vadd.f32 %v2336, %v2337
  %v2339 = vsel %vm2039, %v2003, 0.0
  %v2340 = vsel %vm2039, %v2004, 0.0
  %v2341 = vadd.f32 %v2339, %v2340
  %v2342 = vsel %vm2039, %v2005, 0.0
  %v2343 = vadd.f32 %v2341, %v2342
  %v2344 = vsel %vm2039, %v2006, 0.0
  %v2345 = vadd.f32 %v2343, %v2344
  %v2346 = vrot.slane %v2345, 4
  %v2347 = vadd.f32 %v2345, %v2346
  %v2348 = vrot.slane %v2347, 2
  %v2349 = vadd.f32 %v2347, %v2348
  %v2350 = vrot.slane %v2349, 1
  %v2351 = vadd.f32 %v2349, %v2350
  %v2352 = vsel %vm2039, %v2007, 0.0
  %v2353 = vsel %vm2039, %v2008, 0.0
  %v2354 = vadd.f32 %v2352, %v2353
  %v2355 = vsel %vm2039, %v2009, 0.0
  %v2356 = vadd.f32 %v2354, %v2355
  %v2357 = vsel %vm2039, %v2010, 0.0
  %v2358 = vadd.f32 %v2356, %v2357
  %v2359 = vrot.slane %v2358, 4
  %v2360 = vadd.f32 %v2358, %v2359
  %v2361 = vrot.slane %v2360, 2
  %v2362 = vadd.f32 %v2360, %v2361
  %v2363 = vrot.slane %v2362, 1
  %v2364 = vadd.f32 %v2362, %v2363
  %v2365 = vsel %vm2039, %v2011, 0.0
  %v2366 = vsel %vm2039, %v2012, 0.0
  %v2367 = vadd.f32 %v2365, %v2366
  %v2368 = vsel %vm2039, %v2013, 0.0
  %v2369 = vadd.f32 %v2367, %v2368
  %v2370 = vsel %vm2039, %v2014, 0.0
  %v2371 = vadd.f32 %v2369, %v2370
  %v2372 = vrot.slane %v2371, 4
  %v2373 = vadd.f32 %v2371, %v2372
  %v2374 = vrot.slane %v2373, 2
  %v2375 = vadd.f32 %v2373, %v2374
  %v2376 = vrot.slane %v2375, 1
  %v2377 = vadd.f32 %v2375, %v2376
  %v2378 = vsel %vm2039, %v2015, 0.0
  %v2379 = vsel %vm2039, %v2016, 0.0
  %v2380 = vadd.f32 %v2378, %v2379
  %v2381 = vsel %vm2039, %v2017, 0.0
  %v2382 = vadd.f32 %v2380, %v2381
  %v2383 = vsel %vm2039, %v2018, 0.0
  %v2384 = vadd.f32 %v2382, %v2383
  %v2385 = vrot.slane %v2384, 4
  %v2386 = vadd.f32 %v2384, %v2385
  %v2387 = vrot.slane %v2386, 2
  %v2388 = vadd.f32 %v2386, %v2387
  %v2389 = vrot.slane %v2388, 1
  %v2390 = vadd.f32 %v2388, %v2389
  %v2391 = vsel %vm2039, %v2019, 0.0
  %v2392 = vsel %vm2039, %v2020, 0.0
  %v2393 = vadd.f32 %v2391, %v2392
  %v2394 = vsel %vm2039, %v2021, 0.0
  %v2395 = vadd.f32 %v2393, %v2394
  %v2396 = vsel %vm2039, %v2022, 0.0
  %v2397 = vadd.f32 %v2395, %v2396
  %v2398 = vrot.slane %v2397, 4
  %v2399 = vadd.f32 %v2397, %v2398
  %v2400 = vrot.slane %v2399, 2
  %v2401 = vadd.f32 %v2399, %v2400
  %v2402 = vrot.slane %v2401, 1
  %v2403 = vadd.f32 %v2401, %v2402
  %v2404 = vsel %vm2039, %v2023, 0.0
  %v2405 = vsel %vm2039, %v2024, 0.0
  %v2406 = vadd.f32 %v2404, %v2405
  %v2407 = vsel %vm2039, %v2025, 0.0
  %v2408 = vadd.f32 %v2406, %v2407
  %v2409 = vsel %vm2039, %v2026, 0.0
  %v2410 = vadd.f32 %v2408, %v2409
  %v2411 = vrot.slane %v2410, 4
  %v2412 = vadd.f32 %v2410, %v2411
  %v2413 = vrot.slane %v2412, 2
  %v2414 = vadd.f32 %v2412, %v2413
  %v2415 = vrot.slane %v2414, 1
  %v2416 = vadd.f32 %v2414, %v2415
  %v2417 = vsel %vm2039, %v2027, 0.0
  %v2418 = vsel %vm2039, %v2028, 0.0
  %v2419 = vadd.f32 %v2417, %v2418
  %v2420 = vsel %vm2039, %v2029, 0.0
  %v2421 = vadd.f32 %v2419, %v2420
  %v2422 = vsel %vm2039, %v2030, 0.0
  %v2423 = vadd.f32 %v2421, %v2422
  %v2424 = vrot.slane %v2423, 4
  %v2425 = vadd.f32 %v2423, %v2424
  %v2426 = vrot.slane %v2425, 2
  %v2427 = vadd.f32 %v2425, %v2426
  %v2428 = vrot.slane %v2427, 1
  %v2429 = vadd.f32 %v2427, %v2428
  %v2430 = vsel %vm2039, %v2031, 0.0
  %v2431 = vsel %vm2039, %v2032, 0.0
  %v2432 = vadd.f32 %v2430, %v2431
  %v2433 = vsel %vm2039, %v2033, 0.0
  %v2434 = vadd.f32 %v2432, %v2433
  %v2435 = vsel %vm2039, %v2034, 0.0
  %v2436 = vadd.f32 %v2434, %v2435
  %v2437 = vrot.slane %v2436, 4
  %v2438 = vadd.f32 %v2436, %v2437
  %v2439 = vrot.slane %v2438, 2
  %v2440 = vadd.f32 %v2438, %v2439
  %v2441 = vrot.slane %v2440, 1
  %v2442 = vadd.f32 %v2440, %v2441
  %v2443 = vsel %vm2039, %v2035, 0.0
  %v2444 = vsel %vm2039, %v2036, 0.0
  %v2445 = vadd.f32 %v2443, %v2444
  %v2446 = vsel %vm2039, %v2037, 0.0
  %v2447 = vadd.f32 %v2445, %v2446
  %v2448 = vsel %vm2039, %v2038, 0.0
  %v2449 = vadd.f32 %v2447, %v2448
  %v2450 = vrot.slane %v2449, 4
  %v2451 = vadd.f32 %v2449, %v2450
  %v2452 = vrot.slane %v2451, 2
  %v2453 = vadd.f32 %v2451, %v2452
  %v2454 = vrot.slane %v2453, 1
  %v2455 = vadd.f32 %v2453, %v2454
  %v2456 = vrcp.pop 32.0
  %v2457 = vmul.f32 %v2052, %v2456
  %v2458 = vmul.f32 %v2065, %v2456
  %v2459 = vmul.f32 %v2078, %v2456
  %v2460 = vmul.f32 %v2091, %v2456
  %v2461 = vmul.f32 %v2104, %v2456
  %v2462 = vmul.f32 %v2117, %v2456
  %v2463 = vmul.f32 %v2130, %v2456
  %v2464 = vmul.f32 %v2143, %v2456
  %v2465 = vmul.f32 %v2156, %v2456
  %v2466 = vmul.f32 %v2169, %v2456
  %v2467 = vmul.f32 %v2182, %v2456
  %v2468 = vmul.f32 %v2195, %v2456
  %v2469 = vmul.f32 %v2208, %v2456
  %v2470 = vmul.f32 %v2221, %v2456
  %v2471 = vmul.f32 %v2234, %v2456
  %v2472 = vmul.f32 %v2247, %v2456
  %v2473 = vmul.f32 %v2260, %v2456
  %v2474 = vmul.f32 %v2273, %v2456
  %v2475 = vmul.f32 %v2286, %v2456
  %v2476 = vmul.f32 %v2299, %v2456
  %v2477 = vmul.f32 %v2312, %v2456
  %v2478 = vmul.f32 %v2325, %v2456
  %v2479 = vmul.f32 %v2338, %v2456
  %v2480 = vmul.f32 %v2351, %v2456
  %v2481 = vmul.f32 %v2364, %v2456
  %v2482 = vmul.f32 %v2377, %v2456
  %v2483 = vmul.f32 %v2390, %v2456
  %v2484 = vmul.f32 %v2403, %v2456
  %v2485 = vmul.f32 %v2416, %v2456
  %v2486 = vmul.f32 %v2429, %v2456
  %v2487 = vmul.f32 %v2442, %v2456
  %v2488 = vmul.f32 %v2455, %v2456
  %v2489 = vsel %vm2039, %v1911, -inf
  %v2490 = vsel %vm2039, %v1912, -inf
  %v2491 = vmax.f32 %v2489, %v2490
  %v2492 = vsel %vm2039, %v1913, -inf
  %v2493 = vmax.f32 %v2491, %v2492
  %v2494 = vsel %vm2039, %v1914, -inf
  %v2495 = vmax.f32 %v2493, %v2494
  %v2496 = vrot.slane %v2495, 4
  %v2497 = vmax.f32 %v2495, %v2496
  %v2498 = vrot.slane %v2497, 2
  %v2499 = vmax.f32 %v2497, %v2498
  %v2500 = vrot.slane %v2499, 1
  %v2501 = vmax.f32 %v2499, %v2500
  %v2502 = vsel %vm2039, %v1915, -inf
  %v2503 = vsel %vm2039, %v1916, -inf
  %v2504 = vmax.f32 %v2502, %v2503
  %v2505 = vsel %vm2039, %v1917, -inf
  %v2506 = vmax.f32 %v2504, %v2505
  %v2507 = vsel %vm2039, %v1918, -inf
  %v2508 = vmax.f32 %v2506, %v2507
  %v2509 = vrot.slane %v2508, 4
  %v2510 = vmax.f32 %v2508, %v2509
  %v2511 = vrot.slane %v2510, 2
  %v2512 = vmax.f32 %v2510, %v2511
  %v2513 = vrot.slane %v2512, 1
  %v2514 = vmax.f32 %v2512, %v2513
  %v2515 = vsel %vm2039, %v1919, -inf
  %v2516 = vsel %vm2039, %v1920, -inf
  %v2517 = vmax.f32 %v2515, %v2516
  %v2518 = vsel %vm2039, %v1921, -inf
  %v2519 = vmax.f32 %v2517, %v2518
  %v2520 = vsel %vm2039, %v1922, -inf
  %v2521 = vmax.f32 %v2519, %v2520
  %v2522 = vrot.slane %v2521, 4
  %v2523 = vmax.f32 %v2521, %v2522
  %v2524 = vrot.slane %v2523, 2
  %v2525 = vmax.f32 %v2523, %v2524
  %v2526 = vrot.slane %v2525, 1
  %v2527 = vmax.f32 %v2525, %v2526
  %v2528 = vsel %vm2039, %v1923, -inf
  %v2529 = vsel %vm2039, %v1924, -inf
  %v2530 = vmax.f32 %v2528, %v2529
  %v2531 = vsel %vm2039, %v1925, -inf
  %v2532 = vmax.f32 %v2530, %v2531
  %v2533 = vsel %vm2039, %v1926, -inf
  %v2534 = vmax.f32 %v2532, %v2533
  %v2535 = vrot.slane %v2534, 4
  %v2536 = vmax.f32 %v2534, %v2535
  %v2537 = vrot.slane %v2536, 2
  %v2538 = vmax.f32 %v2536, %v2537
  %v2539 = vrot.slane %v2538, 1
  %v2540 = vmax.f32 %v2538, %v2539
  %v2541 = vsel %vm2039, %v1927, -inf
  %v2542 = vsel %vm2039, %v1928, -inf
  %v2543 = vmax.f32 %v2541, %v2542
  %v2544 = vsel %vm2039, %v1929, -inf
  %v2545 = vmax.f32 %v2543, %v2544
  %v2546 = vsel %vm2039, %v1930, -inf
  %v2547 = vmax.f32 %v2545, %v2546
  %v2548 = vrot.slane %v2547, 4
  %v2549 = vmax.f32 %v2547, %v2548
  %v2550 = vrot.slane %v2549, 2
  %v2551 = vmax.f32 %v2549, %v2550
  %v2552 = vrot.slane %v2551, 1
  %v2553 = vmax.f32 %v2551, %v2552
  %v2554 = vsel %vm2039, %v1931, -inf
  %v2555 = vsel %vm2039, %v1932, -inf
  %v2556 = vmax.f32 %v2554, %v2555
  %v2557 = vsel %vm2039, %v1933, -inf
  %v2558 = vmax.f32 %v2556, %v2557
  %v2559 = vsel %vm2039, %v1934, -inf
  %v2560 = vmax.f32 %v2558, %v2559
  %v2561 = vrot.slane %v2560, 4
  %v2562 = vmax.f32 %v2560, %v2561
  %v2563 = vrot.slane %v2562, 2
  %v2564 = vmax.f32 %v2562, %v2563
  %v2565 = vrot.slane %v2564, 1
  %v2566 = vmax.f32 %v2564, %v2565
  %v2567 = vsel %vm2039, %v1935, -inf
  %v2568 = vsel %vm2039, %v1936, -inf
  %v2569 = vmax.f32 %v2567, %v2568
  %v2570 = vsel %vm2039, %v1937, -inf
  %v2571 = vmax.f32 %v2569, %v2570
  %v2572 = vsel %vm2039, %v1938, -inf
  %v2573 = vmax.f32 %v2571, %v2572
  %v2574 = vrot.slane %v2573, 4
  %v2575 = vmax.f32 %v2573, %v2574
  %v2576 = vrot.slane %v2575, 2
  %v2577 = vmax.f32 %v2575, %v2576
  %v2578 = vrot.slane %v2577, 1
  %v2579 = vmax.f32 %v2577, %v2578
  %v2580 = vsel %vm2039, %v1939, -inf
  %v2581 = vsel %vm2039, %v1940, -inf
  %v2582 = vmax.f32 %v2580, %v2581
  %v2583 = vsel %vm2039, %v1941, -inf
  %v2584 = vmax.f32 %v2582, %v2583
  %v2585 = vsel %vm2039, %v1942, -inf
  %v2586 = vmax.f32 %v2584, %v2585
  %v2587 = vrot.slane %v2586, 4
  %v2588 = vmax.f32 %v2586, %v2587
  %v2589 = vrot.slane %v2588, 2
  %v2590 = vmax.f32 %v2588, %v2589
  %v2591 = vrot.slane %v2590, 1
  %v2592 = vmax.f32 %v2590, %v2591
  %v2593 = vsel %vm2039, %v1943, -inf
  %v2594 = vsel %vm2039, %v1944, -inf
  %v2595 = vmax.f32 %v2593, %v2594
  %v2596 = vsel %vm2039, %v1945, -inf
  %v2597 = vmax.f32 %v2595, %v2596
  %v2598 = vsel %vm2039, %v1946, -inf
  %v2599 = vmax.f32 %v2597, %v2598
  %v2600 = vrot.slane %v2599, 4
  %v2601 = vmax.f32 %v2599, %v2600
  %v2602 = vrot.slane %v2601, 2
  %v2603 = vmax.f32 %v2601, %v2602
  %v2604 = vrot.slane %v2603, 1
  %v2605 = vmax.f32 %v2603, %v2604
  %v2606 = vsel %vm2039, %v1947, -inf
  %v2607 = vsel %vm2039, %v1948, -inf
  %v2608 = vmax.f32 %v2606, %v2607
  %v2609 = vsel %vm2039, %v1949, -inf
  %v2610 = vmax.f32 %v2608, %v2609
  %v2611 = vsel %vm2039, %v1950, -inf
  %v2612 = vmax.f32 %v2610, %v2611
  %v2613 = vrot.slane %v2612, 4
  %v2614 = vmax.f32 %v2612, %v2613
  %v2615 = vrot.slane %v2614, 2
  %v2616 = vmax.f32 %v2614, %v2615
  %v2617 = vrot.slane %v2616, 1
  %v2618 = vmax.f32 %v2616, %v2617
  %v2619 = vsel %vm2039, %v1951, -inf
  %v2620 = vsel %vm2039, %v1952, -inf
  %v2621 = vmax.f32 %v2619, %v2620
  %v2622 = vsel %vm2039, %v1953, -inf
  %v2623 = vmax.f32 %v2621, %v2622
  %v2624 = vsel %vm2039, %v1954, -inf
  %v2625 = vmax.f32 %v2623, %v2624
  %v2626 = vrot.slane %v2625, 4
  %v2627 = vmax.f32 %v2625, %v2626
  %v2628 = vrot.slane %v2627, 2
  %v2629 = vmax.f32 %v2627, %v2628
  %v2630 = vrot.slane %v2629, 1
  %v2631 = vmax.f32 %v2629, %v2630
  %v2632 = vsel %vm2039, %v1955, -inf
  %v2633 = vsel %vm2039, %v1956, -inf
  %v2634 = vmax.f32 %v2632, %v2633
  %v2635 = vsel %vm2039, %v1957, -inf
  %v2636 = vmax.f32 %v2634, %v2635
  %v2637 = vsel %vm2039, %v1958, -inf
  %v2638 = vmax.f32 %v2636, %v2637
  %v2639 = vrot.slane %v2638, 4
  %v2640 = vmax.f32 %v2638, %v2639
  %v2641 = vrot.slane %v2640, 2
  %v2642 = vmax.f32 %v2640, %v2641
  %v2643 = vrot.slane %v2642, 1
  %v2644 = vmax.f32 %v2642, %v2643
  %v2645 = vsel %vm2039, %v1959, -inf
  %v2646 = vsel %vm2039, %v1960, -inf
  %v2647 = vmax.f32 %v2645, %v2646
  %v2648 = vsel %vm2039, %v1961, -inf
  %v2649 = vmax.f32 %v2647, %v2648
  %v2650 = vsel %vm2039, %v1962, -inf
  %v2651 = vmax.f32 %v2649, %v2650
  %v2652 = vrot.slane %v2651, 4
  %v2653 = vmax.f32 %v2651, %v2652
  %v2654 = vrot.slane %v2653, 2
  %v2655 = vmax.f32 %v2653, %v2654
  %v2656 = vrot.slane %v2655, 1
  %v2657 = vmax.f32 %v2655, %v2656
  %v2658 = vsel %vm2039, %v1963, -inf
  %v2659 = vsel %vm2039, %v1964, -inf
  %v2660 = vmax.f32 %v2658, %v2659
  %v2661 = vsel %vm2039, %v1965, -inf
  %v2662 = vmax.f32 %v2660, %v2661
  %v2663 = vsel %vm2039, %v1966, -inf
  %v2664 = vmax.f32 %v2662, %v2663
  %v2665 = vrot.slane %v2664, 4
  %v2666 = vmax.f32 %v2664, %v2665
  %v2667 = vrot.slane %v2666, 2
  %v2668 = vmax.f32 %v2666, %v2667
  %v2669 = vrot.slane %v2668, 1
  %v2670 = vmax.f32 %v2668, %v2669
  %v2671 = vsel %vm2039, %v1967, -inf
  %v2672 = vsel %vm2039, %v1968, -inf
  %v2673 = vmax.f32 %v2671, %v2672
  %v2674 = vsel %vm2039, %v1969, -inf
  %v2675 = vmax.f32 %v2673, %v2674
  %v2676 = vsel %vm2039, %v1970, -inf
  %v2677 = vmax.f32 %v2675, %v2676
  %v2678 = vrot.slane %v2677, 4
  %v2679 = vmax.f32 %v2677, %v2678
  %v2680 = vrot.slane %v2679, 2
  %v2681 = vmax.f32 %v2679, %v2680
  %v2682 = vrot.slane %v2681, 1
  %v2683 = vmax.f32 %v2681, %v2682
  %v2684 = vsel %vm2039, %v1971, -inf
  %v2685 = vsel %vm2039, %v1972, -inf
  %v2686 = vmax.f32 %v2684, %v2685
  %v2687 = vsel %vm2039, %v1973, -inf
  %v2688 = vmax.f32 %v2686, %v2687
  %v2689 = vsel %vm2039, %v1974, -inf
  %v2690 = vmax.f32 %v2688, %v2689
  %v2691 = vrot.slane %v2690, 4
  %v2692 = vmax.f32 %v2690, %v2691
  %v2693 = vrot.slane %v2692, 2
  %v2694 = vmax.f32 %v2692, %v2693
  %v2695 = vrot.slane %v2694, 1
  %v2696 = vmax.f32 %v2694, %v2695
  %v2697 = vsel %vm2039, %v1975, -inf
  %v2698 = vsel %vm2039, %v1976, -inf
  %v2699 = vmax.f32 %v2697, %v2698
  %v2700 = vsel %vm2039, %v1977, -inf
  %v2701 = vmax.f32 %v2699, %v2700
  %v2702 = vsel %vm2039, %v1978, -inf
  %v2703 = vmax.f32 %v2701, %v2702
  %v2704 = vrot.slane %v2703, 4
  %v2705 = vmax.f32 %v2703, %v2704
  %v2706 = vrot.slane %v2705, 2
  %v2707 = vmax.f32 %v2705, %v2706
  %v2708 = vrot.slane %v2707, 1
  %v2709 = vmax.f32 %v2707, %v2708
  %v2710 = vsel %vm2039, %v1979, -inf
  %v2711 = vsel %vm2039, %v1980, -inf
  %v2712 = vmax.f32 %v2710, %v2711
  %v2713 = vsel %vm2039, %v1981, -inf
  %v2714 = vmax.f32 %v2712, %v2713
  %v2715 = vsel %vm2039, %v1982, -inf
  %v2716 = vmax.f32 %v2714, %v2715
  %v2717 = vrot.slane %v2716, 4
  %v2718 = vmax.f32 %v2716, %v2717
  %v2719 = vrot.slane %v2718, 2
  %v2720 = vmax.f32 %v2718, %v2719
  %v2721 = vrot.slane %v2720, 1
  %v2722 = vmax.f32 %v2720, %v2721
  %v2723 = vsel %vm2039, %v1983, -inf
  %v2724 = vsel %vm2039, %v1984, -inf
  %v2725 = vmax.f32 %v2723, %v2724
  %v2726 = vsel %vm2039, %v1985, -inf
  %v2727 = vmax.f32 %v2725, %v2726
  %v2728 = vsel %vm2039, %v1986, -inf
  %v2729 = vmax.f32 %v2727, %v2728
  %v2730 = vrot.slane %v2729, 4
  %v2731 = vmax.f32 %v2729, %v2730
  %v2732 = vrot.slane %v2731, 2
  %v2733 = vmax.f32 %v2731, %v2732
  %v2734 = vrot.slane %v2733, 1
  %v2735 = vmax.f32 %v2733, %v2734
  %v2736 = vsel %vm2039, %v1987, -inf
  %v2737 = vsel %vm2039, %v1988, -inf
  %v2738 = vmax.f32 %v2736, %v2737
  %v2739 = vsel %vm2039, %v1989, -inf
  %v2740 = vmax.f32 %v2738, %v2739
  %v2741 = vsel %vm2039, %v1990, -inf
  %v2742 = vmax.f32 %v2740, %v2741
  %v2743 = vrot.slane %v2742, 4
  %v2744 = vmax.f32 %v2742, %v2743
  %v2745 = vrot.slane %v2744, 2
  %v2746 = vmax.f32 %v2744, %v2745
  %v2747 = vrot.slane %v2746, 1
  %v2748 = vmax.f32 %v2746, %v2747
  %v2749 = vsel %vm2039, %v1991, -inf
  %v2750 = vsel %vm2039, %v1992, -inf
  %v2751 = vmax.f32 %v2749, %v2750
  %v2752 = vsel %vm2039, %v1993, -inf
  %v2753 = vmax.f32 %v2751, %v2752
  %v2754 = vsel %vm2039, %v1994, -inf
  %v2755 = vmax.f32 %v2753, %v2754
  %v2756 = vrot.slane %v2755, 4
  %v2757 = vmax.f32 %v2755, %v2756
  %v2758 = vrot.slane %v2757, 2
  %v2759 = vmax.f32 %v2757, %v2758
  %v2760 = vrot.slane %v2759, 1
  %v2761 = vmax.f32 %v2759, %v2760
  %v2762 = vsel %vm2039, %v1995, -inf
  %v2763 = vsel %vm2039, %v1996, -inf
  %v2764 = vmax.f32 %v2762, %v2763
  %v2765 = vsel %vm2039, %v1997, -inf
  %v2766 = vmax.f32 %v2764, %v2765
  %v2767 = vsel %vm2039, %v1998, -inf
  %v2768 = vmax.f32 %v2766, %v2767
  %v2769 = vrot.slane %v2768, 4
  %v2770 = vmax.f32 %v2768, %v2769
  %v2771 = vrot.slane %v2770, 2
  %v2772 = vmax.f32 %v2770, %v2771
  %v2773 = vrot.slane %v2772, 1
  %v2774 = vmax.f32 %v2772, %v2773
  %v2775 = vsel %vm2039, %v1999, -inf
  %v2776 = vsel %vm2039, %v2000, -inf
  %v2777 = vmax.f32 %v2775, %v2776
  %v2778 = vsel %vm2039, %v2001, -inf
  %v2779 = vmax.f32 %v2777, %v2778
  %v2780 = vsel %vm2039, %v2002, -inf
  %v2781 = vmax.f32 %v2779, %v2780
  %v2782 = vrot.slane %v2781, 4
  %v2783 = vmax.f32 %v2781, %v2782
  %v2784 = vrot.slane %v2783, 2
  %v2785 = vmax.f32 %v2783, %v2784
  %v2786 = vrot.slane %v2785, 1
  %v2787 = vmax.f32 %v2785, %v2786
  %v2788 = vsel %vm2039, %v2003, -inf
  %v2789 = vsel %vm2039, %v2004, -inf
  %v2790 = vmax.f32 %v2788, %v2789
  %v2791 = vsel %vm2039, %v2005, -inf
  %v2792 = vmax.f32 %v2790, %v2791
  %v2793 = vsel %vm2039, %v2006, -inf
  %v2794 = vmax.f32 %v2792, %v2793
  %v2795 = vrot.slane %v2794, 4
  %v2796 = vmax.f32 %v2794, %v2795
  %v2797 = vrot.slane %v2796, 2
  %v2798 = vmax.f32 %v2796, %v2797
  %v2799 = vrot.slane %v2798, 1
  %v2800 = vmax.f32 %v2798, %v2799
  %v2801 = vsel %vm2039, %v2007, -inf
  %v2802 = vsel %vm2039, %v2008, -inf
  %v2803 = vmax.f32 %v2801, %v2802
  %v2804 = vsel %vm2039, %v2009, -inf
  %v2805 = vmax.f32 %v2803, %v2804
  %v2806 = vsel %vm2039, %v2010, -inf
  %v2807 = vmax.f32 %v2805, %v2806
  %v2808 = vrot.slane %v2807, 4
  %v2809 = vmax.f32 %v2807, %v2808
  %v2810 = vrot.slane %v2809, 2
  %v2811 = vmax.f32 %v2809, %v2810
  %v2812 = vrot.slane %v2811, 1
  %v2813 = vmax.f32 %v2811, %v2812
  %v2814 = vsel %vm2039, %v2011, -inf
  %v2815 = vsel %vm2039, %v2012, -inf
  %v2816 = vmax.f32 %v2814, %v2815
  %v2817 = vsel %vm2039, %v2013, -inf
  %v2818 = vmax.f32 %v2816, %v2817
  %v2819 = vsel %vm2039, %v2014, -inf
  %v2820 = vmax.f32 %v2818, %v2819
  %v2821 = vrot.slane %v2820, 4
  %v2822 = vmax.f32 %v2820, %v2821
  %v2823 = vrot.slane %v2822, 2
  %v2824 = vmax.f32 %v2822, %v2823
  %v2825 = vrot.slane %v2824, 1
  %v2826 = vmax.f32 %v2824, %v2825
  %v2827 = vsel %vm2039, %v2015, -inf
  %v2828 = vsel %vm2039, %v2016, -inf
  %v2829 = vmax.f32 %v2827, %v2828
  %v2830 = vsel %vm2039, %v2017, -inf
  %v2831 = vmax.f32 %v2829, %v2830
  %v2832 = vsel %vm2039, %v2018, -inf
  %v2833 = vmax.f32 %v2831, %v2832
  %v2834 = vrot.slane %v2833, 4
  %v2835 = vmax.f32 %v2833, %v2834
  %v2836 = vrot.slane %v2835, 2
  %v2837 = vmax.f32 %v2835, %v2836
  %v2838 = vrot.slane %v2837, 1
  %v2839 = vmax.f32 %v2837, %v2838
  %v2840 = vsel %vm2039, %v2019, -inf
  %v2841 = vsel %vm2039, %v2020, -inf
  %v2842 = vmax.f32 %v2840, %v2841
  %v2843 = vsel %vm2039, %v2021, -inf
  %v2844 = vmax.f32 %v2842, %v2843
  %v2845 = vsel %vm2039, %v2022, -inf
  %v2846 = vmax.f32 %v2844, %v2845
  %v2847 = vrot.slane %v2846, 4
  %v2848 = vmax.f32 %v2846, %v2847
  %v2849 = vrot.slane %v2848, 2
  %v2850 = vmax.f32 %v2848, %v2849
  %v2851 = vrot.slane %v2850, 1
  %v2852 = vmax.f32 %v2850, %v2851
  %v2853 = vsel %vm2039, %v2023, -inf
  %v2854 = vsel %vm2039, %v2024, -inf
  %v2855 = vmax.f32 %v2853, %v2854
  %v2856 = vsel %vm2039, %v2025, -inf
  %v2857 = vmax.f32 %v2855, %v2856
  %v2858 = vsel %vm2039, %v2026, -inf
  %v2859 = vmax.f32 %v2857, %v2858
  %v2860 = vrot.slane %v2859, 4
  %v2861 = vmax.f32 %v2859, %v2860
  %v2862 = vrot.slane %v2861, 2
  %v2863 = vmax.f32 %v2861, %v2862
  %v2864 = vrot.slane %v2863, 1
  %v2865 = vmax.f32 %v2863, %v2864
  %v2866 = vsel %vm2039, %v2027, -inf
  %v2867 = vsel %vm2039, %v2028, -inf
  %v2868 = vmax.f32 %v2866, %v2867
  %v2869 = vsel %vm2039, %v2029, -inf
  %v2870 = vmax.f32 %v2868, %v2869
  %v2871 = vsel %vm2039, %v2030, -inf
  %v2872 = vmax.f32 %v2870, %v2871
  %v2873 = vrot.slane %v2872, 4
  %v2874 = vmax.f32 %v2872, %v2873
  %v2875 = vrot.slane %v2874, 2
  %v2876 = vmax.f32 %v2874, %v2875
  %v2877 = vrot.slane %v2876, 1
  %v2878 = vmax.f32 %v2876, %v2877
  %v2879 = vsel %vm2039, %v2031, -inf
  %v2880 = vsel %vm2039, %v2032, -inf
  %v2881 = vmax.f32 %v2879, %v2880
  %v2882 = vsel %vm2039, %v2033, -inf
  %v2883 = vmax.f32 %v2881, %v2882
  %v2884 = vsel %vm2039, %v2034, -inf
  %v2885 = vmax.f32 %v2883, %v2884
  %v2886 = vrot.slane %v2885, 4
  %v2887 = vmax.f32 %v2885, %v2886
  %v2888 = vrot.slane %v2887, 2
  %v2889 = vmax.f32 %v2887, %v2888
  %v2890 = vrot.slane %v2889, 1
  %v2891 = vmax.f32 %v2889, %v2890
  %v2892 = vsel %vm2039, %v2035, -inf
  %v2893 = vsel %vm2039, %v2036, -inf
  %v2894 = vmax.f32 %v2892, %v2893
  %v2895 = vsel %vm2039, %v2037, -inf
  %v2896 = vmax.f32 %v2894, %v2895
  %v2897 = vsel %vm2039, %v2038, -inf
  %v2898 = vmax.f32 %v2896, %v2897
  %v2899 = vrot.slane %v2898, 4
  %v2900 = vmax.f32 %v2898, %v2899
  %v2901 = vrot.slane %v2900, 2
  %v2902 = vmax.f32 %v2900, %v2901
  %v2903 = vrot.slane %v2902, 1
  %v2904 = vmax.f32 %v2902, %v2903
  %vm2937 = vcmask 1041409
  %v2938 = vsel %vm2937, %v2458, %v2457
  %vm2939 = vcmask 1042434
  %v2940 = vsel %vm2939, %v2459, %v2938
  %vm2941 = vcmask 1043459
  %v2942 = vsel %vm2941, %v2460, %v2940
  %vm2943 = vcmask 1044484
  %v2944 = vsel %vm2943, %v2461, %v2942
  %vm2945 = vcmask 1045509
  %v2946 = vsel %vm2945, %v2462, %v2944
  %vm2947 = vcmask 1046534
  %v2948 = vsel %vm2947, %v2463, %v2946
  %vm2949 = vcmask 1047559
  %v2950 = vsel %vm2949, %v2464, %v2948
  %v2951 = vsel %vm2937, %v2466, %v2465
  %v2952 = vsel %vm2939, %v2467, %v2951
  %v2953 = vsel %vm2941, %v2468, %v2952
  %v2954 = vsel %vm2943, %v2469, %v2953
  %v2955 = vsel %vm2945, %v2470, %v2954
  %v2956 = vsel %vm2947, %v2471, %v2955
  %v2957 = vsel %vm2949, %v2472, %v2956
  %v2958 = vsel %vm2937, %v2474, %v2473
  %v2959 = vsel %vm2939, %v2475, %v2958
  %v2960 = vsel %vm2941, %v2476, %v2959
  %v2961 = vsel %vm2943, %v2477, %v2960
  %v2962 = vsel %vm2945, %v2478, %v2961
  %v2963 = vsel %vm2947, %v2479, %v2962
  %v2964 = vsel %vm2949, %v2480, %v2963
  %v2965 = vsel %vm2937, %v2482, %v2481
  %v2966 = vsel %vm2939, %v2483, %v2965
  %v2967 = vsel %vm2941, %v2484, %v2966
  %v2968 = vsel %vm2943, %v2485, %v2967
  %v2969 = vsel %vm2945, %v2486, %v2968
  %v2970 = vsel %vm2947, %v2487, %v2969
  %v2971 = vsel %vm2949, %v2488, %v2970
  %v3008 = vsel %vm2937, %v2514, %v2501
  %v3009 = vsel %vm2939, %v2527, %v3008
  %v3010 = vsel %vm2941, %v2540, %v3009
  %v3011 = vsel %vm2943, %v2553, %v3010
  %v3012 = vsel %vm2945, %v2566, %v3011
  %v3013 = vsel %vm2947, %v2579, %v3012
  %v3014 = vsel %vm2949, %v2592, %v3013
  %v3015 = vsel %vm2937, %v2618, %v2605
  %v3016 = vsel %vm2939, %v2631, %v3015
  %v3017 = vsel %vm2941, %v2644, %v3016
  %v3018 = vsel %vm2943, %v2657, %v3017
  %v3019 = vsel %vm2945, %v2670, %v3018
  %v3020 = vsel %vm2947, %v2683, %v3019
  %v3021 = vsel %vm2949, %v2696, %v3020
  %v3022 = vsel %vm2937, %v2722, %v2709
  %v3023 = vsel %vm2939, %v2735, %v3022
  %v3024 = vsel %vm2941, %v2748, %v3023
  %v3025 = vsel %vm2943, %v2761, %v3024
  %v3026 = vsel %vm2945, %v2774, %v3025
  %v3027 = vsel %vm2947, %v2787, %v3026
  %v3028 = vsel %vm2949, %v2800, %v3027
  %v3029 = vsel %vm2937, %v2826, %v2813
  %v3030 = vsel %vm2939, %v2839, %v3029
  %v3031 = vsel %vm2941, %v2852, %v3030
  %v3032 = vsel %vm2943, %v2865, %v3031
  %v3033 = vsel %vm2945, %v2878, %v3032
  %v3034 = vsel %vm2947, %v2891, %v3033
  %v3035 = vsel %vm2949, %v2904, %v3034
  %3036 = vrot.lane.b32.xlu0 %v3014, 32
  %v3037 = vpop.permute.xlu0 %3036
  %3038 = vrot.lane.b32.xlu0 %v3021, 32
  %v3039 = vpop.permute.xlu0 %3038
  %3040 = vrot.lane.b32.xlu0 %v3028, 32
  %v3041 = vpop.permute.xlu0 %3040
  %3042 = vrot.lane.b32.xlu0 %v3035, 32
  %v3043 = vpop.permute.xlu0 %3042
  %v3048 = vsel %vm2039, %v2950, %v3037
  %v3049 = vsel %vm2039, %v2957, %v3039
  %v3050 = vsel %vm2039, %v2964, %v3041
  %v3051 = vsel %vm2039, %v2971, %v3043
  %v3052 = vld [vmem:[%s3] sm:$0xff]
  %v3053 = vld [vmem:[%s3 + $0x8] sm:$0xff]
  %v3054 = vld [vmem:[%s3 + $0x10] sm:$0xff]
  %v3055 = vld [vmem:[%s3 + $0x18] sm:$0xff]
  %v3056 = vld [vmem:[%s3 + $0x20] sm:$0xff]
  %v3057 = vld [vmem:[%s3 + $0x28] sm:$0xff]
  %v3058 = vld [vmem:[%s3 + $0x30] sm:$0xff]
  %v3059 = vld [vmem:[%s3 + $0x38] sm:$0xff]
  %v3060 = vld [vmem:[%s3 + $0x40] sm:$0xff]
  %v3061 = vld [vmem:[%s3 + $0x48] sm:$0xff]
  %v3062 = vld [vmem:[%s3 + $0x50] sm:$0xff]
  %v3063 = vld [vmem:[%s3 + $0x58] sm:$0xff]
  %v3064 = vld [vmem:[%s3 + $0x60] sm:$0xff]
  %v3065 = vld [vmem:[%s3 + $0x68] sm:$0xff]
  %v3066 = vld [vmem:[%s3 + $0x70] sm:$0xff]
  %v3067 = vld [vmem:[%s3 + $0x78] sm:$0xff]
  %v3068 = vld [vmem:[%s4] sm:$0x3]
  %v3070 = vlaneseq
  %v3071 = vshrl.u32 %v3070, 7
  %v3072 = vsub.s32 0, %v3071
  %v3073 = vrot.slane %v3068, %v3072
  %v3074 = vlaneseq
  %v3075 = vshrl.u32 %v3074, 7
  %v3076 = vsub.s32 1, %v3075
  %v3077 = vrot.slane %v3068, %v3076
  %vm3080 = vcmask 523264
  %v3082 = vsel %vm3080, %v3048, 0
  %v3085 = vsel %vm3080, %v3049, 0
  %v3088 = vsel %vm3080, %v3050, 0
  %v3091 = vsel %vm3080, %v3051, 0
  %3093 = vmatprep.subr.mxu0 0.0
  %3094 = vmatpush1.msra.mxu0 0.0
  %3095 = vmatprep.subr.mxu0 0.0
  %3096 = vmatpush1.msra.mxu0 0.0
  %3097 = vmatprep.subr.mxu0 0.0
  %3098 = vmatpush1.msra.mxu0 0.0
  %3099 = vmatprep.subr.mxu0 0.0
  %3100 = vmatpush1.msra.mxu0 0.0
  %3101 = vmatprep.subr.mxu0 0.0
  %3102 = vmatpush1.msra.mxu0 0.0
  %3103 = vmatprep.subr.mxu0 0.0
  %3104 = vmatpush1.msra.mxu0 0.0
  %3105 = vmatprep.subr.mxu0 0.0
  %3106 = vmatpush1.msra.mxu0 0.0
  %3107 = vmatprep.subr.mxu0 0.0
  %3108 = vmatpush1.msra.mxu0 0.0
  %3109 = vmatprep.subr.mxu0 %v3067
  %3110 = vmatpush1.msra.mxu0 %v3066
  %3111 = vmatprep.subr.mxu0 %v3065
  %3112 = vmatpush1.msra.mxu0 %v3064
  %3113 = vmatprep.subr.mxu0 %v3063
  %3114 = vmatpush1.msra.mxu0 %v3062
  %3115 = vmatprep.subr.mxu0 %v3061
  %3116 = vmatpush1.msra.mxu0 %v3060
  %3117 = vmatprep.subr.mxu0 %v3059
  %3118 = vmatpush1.msra.mxu0 %v3058
  %3119 = vmatprep.subr.mxu0 %v3057
  %3120 = vmatpush1.msra.mxu0 %v3056
  %3121 = vmatprep.subr.mxu0 %v3055
  %3122 = vmatpush1.msra.mxu0 %v3054
  %3123 = vmatprep.subr.mxu0 %v3053
  %3124 = vmatpush1.msra.mxu0 %v3052
  %3125 = vmatprep.subr.mxu0 0.0
  %3126 = vmatpush2.msra.mxu0 0.0
  %3127 = vmatprep.subr.mxu0 0.0
  %3128 = vmatpush2.msra.mxu0 0.0
  %3129 = vmatprep.subr.mxu0 0.0
  %3130 = vmatpush2.msra.mxu0 0.0
  %3131 = vmatprep.subr.mxu0 0.0
  %3132 = vmatpush2.msra.mxu0 0.0
  %3133 = vmatprep.subr.mxu0 0.0
  %3134 = vmatpush2.msra.mxu0 0.0
  %3135 = vmatprep.subr.mxu0 0.0
  %3136 = vmatpush2.msra.mxu0 0.0
  %3137 = vmatprep.subr.mxu0 0.0
  %3138 = vmatpush2.msra.mxu0 0.0
  %3139 = vmatprep.subr.mxu0 0.0
  %3140 = vmatpush2.msra.mxu0 0.0
  %3141 = vmatprep.subr.mxu0 0.0
  %3142 = vmatpush2.msra.mxu0 0.0
  %3143 = vmatprep.subr.mxu0 0.0
  %3144 = vmatpush2.msra.mxu0 0.0
  %3145 = vmatprep.subr.mxu0 0.0
  %3146 = vmatpush2.msra.mxu0 0.0
  %3147 = vmatprep.subr.mxu0 0.0
  %3148 = vmatpush2.msra.mxu0 0.0
  %3149 = vmatprep.subr.mxu0 0.0
  %3150 = vmatpush2.msra.mxu0 0.0
  %3151 = vmatprep.subr.mxu0 0.0
  %3152 = vmatpush2.msra.mxu0 0.0
  %3153 = vmatprep.subr.mxu0 0.0
  %3154 = vmatpush2.msra.mxu0 0.0
  %3155 = vmatprep.subr.mxu0 0.0
  %3156 = vmatpush2.msra.mxu0 0.0
  %3157 = vmatprep.mubr.f32.mxu0 0.0
  %3158 = vmatmul.mubr.f32.gmra.mxu0 %v3082
  %v3159 = vpop.f32.mrf.mxu0
  %v3160 = vadd.f32 %v3073, %v3159
  %v3161 = vpop.f32.mrf.mxu0
  %v3162 = vadd.f32 %v3077, %v3161
  %3163 = vmatprep.mubr.f32.mxu0 0.0
  %3164 = vmatmul.mubr.f32.gmra.mxu0 %v3085
  %v3165 = vpop.f32.mrf.mxu0
  %v3166 = vadd.f32 %v3073, %v3165
  %v3167 = vpop.f32.mrf.mxu0
  %v3168 = vadd.f32 %v3077, %v3167
  %3169 = vmatprep.mubr.f32.mxu0 0.0
  %3170 = vmatmul.mubr.f32.gmra.mxu0 %v3088
  %v3171 = vpop.f32.mrf.mxu0
  %v3172 = vadd.f32 %v3073, %v3171
  %v3173 = vpop.f32.mrf.mxu0
  %v3174 = vadd.f32 %v3077, %v3173
  %3175 = vmatprep.mubr.f32.mxu0 0.0
  %3176 = vmatmul.mubr.f32.gmra.mxu0 %v3091
  %v3177 = vpop.f32.mrf.mxu0
  %v3178 = vadd.f32 %v3073, %v3177
  %v3179 = vpop.f32.mrf.mxu0
  %v3180 = vadd.f32 %v3077, %v3179
  %3181 = vdwg.mxu0
  %3186 = vrot.lane.b32.xlu0 %v3160, 120
  %v3187 = vpop.permute.xlu0 %3186
  %3188 = vrot.lane.b32.xlu0 %v3166, 120
  %v3189 = vpop.permute.xlu0 %3188
  %3190 = vrot.lane.b32.xlu0 %v3172, 120
  %v3191 = vpop.permute.xlu0 %3190
  %3192 = vrot.lane.b32.xlu0 %v3178, 120
  %v3193 = vpop.permute.xlu0 %3192
  %3194 = vrot.lane.b32.xlu0 %v3160, 112
  %v3195 = vpop.permute.xlu0 %3194
  %3196 = vrot.lane.b32.xlu0 %v3166, 112
  %v3197 = vpop.permute.xlu0 %3196
  %3198 = vrot.lane.b32.xlu0 %v3172, 112
  %v3199 = vpop.permute.xlu0 %3198
  %3200 = vrot.lane.b32.xlu0 %v3178, 112
  %v3201 = vpop.permute.xlu0 %3200
  %3202 = vrot.lane.b32.xlu0 %v3160, 104
  %v3203 = vpop.permute.xlu0 %3202
  %3204 = vrot.lane.b32.xlu0 %v3166, 104
  %v3205 = vpop.permute.xlu0 %3204
  %3206 = vrot.lane.b32.xlu0 %v3172, 104
  %v3207 = vpop.permute.xlu0 %3206
  %3208 = vrot.lane.b32.xlu0 %v3178, 104
  %v3209 = vpop.permute.xlu0 %3208
  %3210 = vrot.lane.b32.xlu0 %v3160, 96
  %v3211 = vpop.permute.xlu0 %3210
  %3212 = vrot.lane.b32.xlu0 %v3166, 96
  %v3213 = vpop.permute.xlu0 %3212
  %3214 = vrot.lane.b32.xlu0 %v3172, 96
  %v3215 = vpop.permute.xlu0 %3214
  %3216 = vrot.lane.b32.xlu0 %v3178, 96
  %v3217 = vpop.permute.xlu0 %3216
  %3218 = vrot.lane.b32.xlu0 %v3160, 88
  %v3219 = vpop.permute.xlu0 %3218
  %3220 = vrot.lane.b32.xlu0 %v3166, 88
  %v3221 = vpop.permute.xlu0 %3220
  %3222 = vrot.lane.b32.xlu0 %v3172, 88
  %v3223 = vpop.permute.xlu0 %3222
  %3224 = vrot.lane.b32.xlu0 %v3178, 88
  %v3225 = vpop.permute.xlu0 %3224
  %3226 = vrot.lane.b32.xlu0 %v3160, 80
  %v3227 = vpop.permute.xlu0 %3226
  %3228 = vrot.lane.b32.xlu0 %v3166, 80
  %v3229 = vpop.permute.xlu0 %3228
  %3230 = vrot.lane.b32.xlu0 %v3172, 80
  %v3231 = vpop.permute.xlu0 %3230
  %3232 = vrot.lane.b32.xlu0 %v3178, 80
  %v3233 = vpop.permute.xlu0 %3232
  %3234 = vrot.lane.b32.xlu0 %v3160, 72
  %v3235 = vpop.permute.xlu0 %3234
  %3236 = vrot.lane.b32.xlu0 %v3166, 72
  %v3237 = vpop.permute.xlu0 %3236
  %3238 = vrot.lane.b32.xlu0 %v3172, 72
  %v3239 = vpop.permute.xlu0 %3238
  %3240 = vrot.lane.b32.xlu0 %v3178, 72
  %v3241 = vpop.permute.xlu0 %3240
  %3246 = vrot.lane.b32.xlu0 %v3162, 120
  %v3247 = vpop.permute.xlu0 %3246
  %3248 = vrot.lane.b32.xlu0 %v3168, 120
  %v3249 = vpop.permute.xlu0 %3248
  %3250 = vrot.lane.b32.xlu0 %v3174, 120
  %v3251 = vpop.permute.xlu0 %3250
  %3252 = vrot.lane.b32.xlu0 %v3180, 120
  %v3253 = vpop.permute.xlu0 %3252
  %3258 = vrot.lane.b32.xlu0 %v3162, 112
  %v3259 = vpop.permute.xlu0 %3258
  %3260 = vrot.lane.b32.xlu0 %v3168, 112
  %v3261 = vpop.permute.xlu0 %3260
  %3262 = vrot.lane.b32.xlu0 %v3174, 112
  %v3263 = vpop.permute.xlu0 %3262
  %3264 = vrot.lane.b32.xlu0 %v3180, 112
  %v3265 = vpop.permute.xlu0 %3264
  %3270 = vrot.lane.b32.xlu0 %v3162, 104
  %v3271 = vpop.permute.xlu0 %3270
  %3272 = vrot.lane.b32.xlu0 %v3168, 104
  %v3273 = vpop.permute.xlu0 %3272
  %3274 = vrot.lane.b32.xlu0 %v3174, 104
  %v3275 = vpop.permute.xlu0 %3274
  %3276 = vrot.lane.b32.xlu0 %v3180, 104
  %v3277 = vpop.permute.xlu0 %3276
  %3282 = vrot.lane.b32.xlu0 %v3162, 96
  %v3283 = vpop.permute.xlu0 %3282
  %3284 = vrot.lane.b32.xlu0 %v3168, 96
  %v3285 = vpop.permute.xlu0 %3284
  %3286 = vrot.lane.b32.xlu0 %v3174, 96
  %v3287 = vpop.permute.xlu0 %3286
  %3288 = vrot.lane.b32.xlu0 %v3180, 96
  %v3289 = vpop.permute.xlu0 %3288
  %3294 = vrot.lane.b32.xlu0 %v3162, 88
  %v3295 = vpop.permute.xlu0 %3294
  %3296 = vrot.lane.b32.xlu0 %v3168, 88
  %v3297 = vpop.permute.xlu0 %3296
  %3298 = vrot.lane.b32.xlu0 %v3174, 88
  %v3299 = vpop.permute.xlu0 %3298
  %3300 = vrot.lane.b32.xlu0 %v3180, 88
  %v3301 = vpop.permute.xlu0 %3300
  %3306 = vrot.lane.b32.xlu0 %v3162, 80
  %v3307 = vpop.permute.xlu0 %3306
  %3308 = vrot.lane.b32.xlu0 %v3168, 80
  %v3309 = vpop.permute.xlu0 %3308
  %3310 = vrot.lane.b32.xlu0 %v3174, 80
  %v3311 = vpop.permute.xlu0 %3310
  %3312 = vrot.lane.b32.xlu0 %v3180, 80
  %v3313 = vpop.permute.xlu0 %3312
  %3318 = vrot.lane.b32.xlu0 %v3162, 72
  %v3319 = vpop.permute.xlu0 %3318
  %3320 = vrot.lane.b32.xlu0 %v3168, 72
  %v3321 = vpop.permute.xlu0 %3320
  %3322 = vrot.lane.b32.xlu0 %v3174, 72
  %v3323 = vpop.permute.xlu0 %3322
  %3324 = vrot.lane.b32.xlu0 %v3180, 72
  %v3325 = vpop.permute.xlu0 %3324
  %3330 = vrot.lane.b32.xlu0 %v3160, 64
  %v3331 = vpop.permute.xlu0 %3330
  %3332 = vrot.lane.b32.xlu0 %v3166, 64
  %v3333 = vpop.permute.xlu0 %3332
  %vm3334 = vcmask 64512
  %v3335 = vsel %vm3334, %v3160, 0
  %v3337 = vsel %vm3334, %v3166, 0
  %v3339 = vsel %vm3334, %v3331, 0
  %v3341 = vsel %vm3334, %v3333, 0
  %3343 = vmatprep.subr.mxu0 0.0
  %3344 = vmatpush1.xpose.msra.mxu0 0.0
  %3345 = vmatprep.subr.mxu0 0.0
  %3346 = vmatpush1.xpose.msra.mxu0 0.0
  %3347 = vmatprep.subr.mxu0 0.0
  %3348 = vmatpush1.xpose.msra.mxu0 0.0
  %3349 = vmatprep.subr.mxu0 0.0
  %3350 = vmatpush1.xpose.msra.mxu0 0.0
  %3351 = vmatprep.subr.mxu0 0.0
  %3352 = vmatpush1.xpose.msra.mxu0 0.0
  %3353 = vmatprep.subr.mxu0 0.0
  %3354 = vmatpush1.xpose.msra.mxu0 0.0
  %3355 = vmatprep.subr.mxu0 0.0
  %3356 = vmatpush1.xpose.msra.mxu0 0.0
  %3357 = vmatprep.subr.mxu0 0.0
  %3358 = vmatpush1.xpose.msra.mxu0 0.0
  %3359 = vmatprep.subr.mxu0 0.0
  %3360 = vmatpush1.xpose.msra.mxu0 0.0
  %3361 = vmatprep.subr.mxu0 0.0
  %3362 = vmatpush1.xpose.msra.mxu0 0.0
  %3363 = vmatprep.subr.mxu0 0.0
  %3364 = vmatpush1.xpose.msra.mxu0 0.0
  %3365 = vmatprep.subr.mxu0 0.0
  %3366 = vmatpush1.xpose.msra.mxu0 0.0
  %3367 = vmatprep.subr.mxu0 0.0
  %3368 = vmatpush1.xpose.msra.mxu0 0.0
  %3369 = vmatprep.subr.mxu0 0.0
  %3370 = vmatpush1.xpose.msra.mxu0 0.0
  %3371 = vmatprep.subr.mxu0 0.0
  %3372 = vmatpush1.xpose.msra.mxu0 %v3341
  %3373 = vmatprep.subr.mxu0 0.0
  %3374 = vmatpush1.xpose.msra.mxu0 %v3339
  %3375 = vmatprep.subr.mxu0 0.0
  %3376 = vmatpush2.xpose.msra.mxu0 0.0
  %3377 = vmatprep.subr.mxu0 0.0
  %3378 = vmatpush2.xpose.msra.mxu0 0.0
  %3379 = vmatprep.subr.mxu0 0.0
  %3380 = vmatpush2.xpose.msra.mxu0 0.0
  %3381 = vmatprep.subr.mxu0 0.0
  %3382 = vmatpush2.xpose.msra.mxu0 0.0
  %3383 = vmatprep.subr.mxu0 0.0
  %3384 = vmatpush2.xpose.msra.mxu0 0.0
  %3385 = vmatprep.subr.mxu0 0.0
  %3386 = vmatpush2.xpose.msra.mxu0 0.0
  %3387 = vmatprep.subr.mxu0 0.0
  %3388 = vmatpush2.xpose.msra.mxu0 0.0
  %3389 = vmatprep.subr.mxu0 0.0
  %3390 = vmatpush2.xpose.msra.mxu0 0.0
  %3391 = vmatprep.subr.mxu0 0.0
  %3392 = vmatpush2.xpose.msra.mxu0 0.0
  %3393 = vmatprep.subr.mxu0 0.0
  %3394 = vmatpush2.xpose.msra.mxu0 0.0
  %3395 = vmatprep.subr.mxu0 0.0
  %3396 = vmatpush2.xpose.msra.mxu0 0.0
  %3397 = vmatprep.subr.mxu0 0.0
  %3398 = vmatpush2.xpose.msra.mxu0 0.0
  %3399 = vmatprep.subr.mxu0 0.0
  %3400 = vmatpush2.xpose.msra.mxu0 0.0
  %3401 = vmatprep.subr.mxu0 0.0
  %3402 = vmatpush2.xpose.msra.mxu0 0.0
  %3403 = vmatprep.subr.mxu0 0.0
  %3404 = vmatpush2.xpose.msra.mxu0 0.0
  %3405 = vmatprep.subr.mxu0 0.0
  %3406 = vmatpush2.xpose.msra.mxu0 0.0
  %3407 = vmatprep.mubr.f32.mxu0 0.0
  %3408 = vmatmul.mubr.f32.gmra.mxu0 %v3335
  %v3409 = vpop.f32.mrf.mxu0
  %v3410 = vadd.f32 0.0, %v3409
  %v3411 = vpop.f32.mrf.mxu0
  %3412 = vmatprep.mubr.f32.mxu0 0.0
  %3413 = vmatmul.mubr.f32.gmra.mxu0 %v3337
  %v3414 = vpop.f32.mrf.mxu0
  %v3415 = vadd.f32 0.0, %v3414
  %v3416 = vpop.f32.mrf.mxu0
  %3417 = vdwg.mxu0
  %3418 = vrot.lane.b32.xlu0 %v3172, 64
  %v3419 = vpop.permute.xlu0 %3418
  %3420 = vrot.lane.b32.xlu0 %v3178, 64
  %v3421 = vpop.permute.xlu0 %3420
  %v3422 = vsel %vm3334, %v3172, 0
  %v3424 = vsel %vm3334, %v3178, 0
  %v3426 = vsel %vm3334, %v3419, 0
  %v3428 = vsel %vm3334, %v3421, 0
  %3430 = vmatprep.subr.mxu0 0.0
  %3431 = vmatpush1.xpose.msra.mxu0 0.0
  %3432 = vmatprep.subr.mxu0 0.0
  %3433 = vmatpush1.xpose.msra.mxu0 0.0
  %3434 = vmatprep.subr.mxu0 0.0
  %3435 = vmatpush1.xpose.msra.mxu0 0.0
  %3436 = vmatprep.subr.mxu0 0.0
  %3437 = vmatpush1.xpose.msra.mxu0 0.0
  %3438 = vmatprep.subr.mxu0 0.0
  %3439 = vmatpush1.xpose.msra.mxu0 0.0
  %3440 = vmatprep.subr.mxu0 0.0
  %3441 = vmatpush1.xpose.msra.mxu0 0.0
  %3442 = vmatprep.subr.mxu0 0.0
  %3443 = vmatpush1.xpose.msra.mxu0 0.0
  %3444 = vmatprep.subr.mxu0 0.0
  %3445 = vmatpush1.xpose.msra.mxu0 0.0
  %3446 = vmatprep.subr.mxu0 0.0
  %3447 = vmatpush1.xpose.msra.mxu0 0.0
  %3448 = vmatprep.subr.mxu0 0.0
  %3449 = vmatpush1.xpose.msra.mxu0 0.0
  %3450 = vmatprep.subr.mxu0 0.0
  %3451 = vmatpush1.xpose.msra.mxu0 0.0
  %3452 = vmatprep.subr.mxu0 0.0
  %3453 = vmatpush1.xpose.msra.mxu0 0.0
  %3454 = vmatprep.subr.mxu0 0.0
  %3455 = vmatpush1.xpose.msra.mxu0 0.0
  %3456 = vmatprep.subr.mxu0 0.0
  %3457 = vmatpush1.xpose.msra.mxu0 0.0
  %3458 = vmatprep.subr.mxu0 0.0
  %3459 = vmatpush1.xpose.msra.mxu0 %v3428
  %3460 = vmatprep.subr.mxu0 0.0
  %3461 = vmatpush1.xpose.msra.mxu0 %v3426
  %3462 = vmatprep.subr.mxu0 0.0
  %3463 = vmatpush2.xpose.msra.mxu0 0.0
  %3464 = vmatprep.subr.mxu0 0.0
  %3465 = vmatpush2.xpose.msra.mxu0 0.0
  %3466 = vmatprep.subr.mxu0 0.0
  %3467 = vmatpush2.xpose.msra.mxu0 0.0
  %3468 = vmatprep.subr.mxu0 0.0
  %3469 = vmatpush2.xpose.msra.mxu0 0.0
  %3470 = vmatprep.subr.mxu0 0.0
  %3471 = vmatpush2.xpose.msra.mxu0 0.0
  %3472 = vmatprep.subr.mxu0 0.0
  %3473 = vmatpush2.xpose.msra.mxu0 0.0
  %3474 = vmatprep.subr.mxu0 0.0
  %3475 = vmatpush2.xpose.msra.mxu0 0.0
  %3476 = vmatprep.subr.mxu0 0.0
  %3477 = vmatpush2.xpose.msra.mxu0 0.0
  %3478 = vmatprep.subr.mxu0 0.0
  %3479 = vmatpush2.xpose.msra.mxu0 0.0
  %3480 = vmatprep.subr.mxu0 0.0
  %3481 = vmatpush2.xpose.msra.mxu0 0.0
  %3482 = vmatprep.subr.mxu0 0.0
  %3483 = vmatpush2.xpose.msra.mxu0 0.0
  %3484 = vmatprep.subr.mxu0 0.0
  %3485 = vmatpush2.xpose.msra.mxu0 0.0
  %3486 = vmatprep.subr.mxu0 0.0
  %3487 = vmatpush2.xpose.msra.mxu0 0.0
  %3488 = vmatprep.subr.mxu0 0.0
  %3489 = vmatpush2.xpose.msra.mxu0 0.0
  %3490 = vmatprep.subr.mxu0 0.0
  %3491 = vmatpush2.xpose.msra.mxu0 0.0
  %3492 = vmatprep.subr.mxu0 0.0
  %3493 = vmatpush2.xpose.msra.mxu0 0.0
  %3494 = vmatprep.mubr.f32.mxu0 0.0
  %3495 = vmatmul.mubr.f32.gmra.mxu0 %v3422
  %v3496 = vpop.f32.mrf.mxu0
  %v3497 = vadd.f32 0.0, %v3496
  %v3498 = vpop.f32.mrf.mxu0
  %3499 = vmatprep.mubr.f32.mxu0 0.0
  %3500 = vmatmul.mubr.f32.gmra.mxu0 %v3424
  %v3501 = vpop.f32.mrf.mxu0
  %v3502 = vadd.f32 0.0, %v3501
  %v3503 = vpop.f32.mrf.mxu0
  %3504 = vdwg.mxu0
  %3505 = vrot.lane.b32.xlu0 %v3187, 64
  %v3506 = vpop.permute.xlu0 %3505
  %3507 = vrot.lane.b32.xlu0 %v3189, 64
  %v3508 = vpop.permute.xlu0 %3507
  %v3509 = vsel %vm3334, %v3187, 0
  %v3511 = vsel %vm3334, %v3189, 0
  %v3513 = vsel %vm3334, %v3506, 0
  %v3515 = vsel %vm3334, %v3508, 0
  %3517 = vmatprep.subr.mxu0 0.0
  %3518 = vmatpush1.xpose.msra.mxu0 0.0
  %3519 = vmatprep.subr.mxu0 0.0
  %3520 = vmatpush1.xpose.msra.mxu0 0.0
  %3521 = vmatprep.subr.mxu0 0.0
  %3522 = vmatpush1.xpose.msra.mxu0 0.0
  %3523 = vmatprep.subr.mxu0 0.0
  %3524 = vmatpush1.xpose.msra.mxu0 0.0
  %3525 = vmatprep.subr.mxu0 0.0
  %3526 = vmatpush1.xpose.msra.mxu0 0.0
  %3527 = vmatprep.subr.mxu0 0.0
  %3528 = vmatpush1.xpose.msra.mxu0 0.0
  %3529 = vmatprep.subr.mxu0 0.0
  %3530 = vmatpush1.xpose.msra.mxu0 0.0
  %3531 = vmatprep.subr.mxu0 0.0
  %3532 = vmatpush1.xpose.msra.mxu0 0.0
  %3533 = vmatprep.subr.mxu0 0.0
  %3534 = vmatpush1.xpose.msra.mxu0 0.0
  %3535 = vmatprep.subr.mxu0 0.0
  %3536 = vmatpush1.xpose.msra.mxu0 0.0
  %3537 = vmatprep.subr.mxu0 0.0
  %3538 = vmatpush1.xpose.msra.mxu0 0.0
  %3539 = vmatprep.subr.mxu0 0.0
  %3540 = vmatpush1.xpose.msra.mxu0 0.0
  %3541 = vmatprep.subr.mxu0 0.0
  %3542 = vmatpush1.xpose.msra.mxu0 0.0
  %3543 = vmatprep.subr.mxu0 0.0
  %3544 = vmatpush1.xpose.msra.mxu0 0.0
  %3545 = vmatprep.subr.mxu0 0.0
  %3546 = vmatpush1.xpose.msra.mxu0 %v3515
  %3547 = vmatprep.subr.mxu0 0.0
  %3548 = vmatpush1.xpose.msra.mxu0 %v3513
  %3549 = vmatprep.subr.mxu0 0.0
  %3550 = vmatpush2.xpose.msra.mxu0 0.0
  %3551 = vmatprep.subr.mxu0 0.0
  %3552 = vmatpush2.xpose.msra.mxu0 0.0
  %3553 = vmatprep.subr.mxu0 0.0
  %3554 = vmatpush2.xpose.msra.mxu0 0.0
  %3555 = vmatprep.subr.mxu0 0.0
  %3556 = vmatpush2.xpose.msra.mxu0 0.0
  %3557 = vmatprep.subr.mxu0 0.0
  %3558 = vmatpush2.xpose.msra.mxu0 0.0
  %3559 = vmatprep.subr.mxu0 0.0
  %3560 = vmatpush2.xpose.msra.mxu0 0.0
  %3561 = vmatprep.subr.mxu0 0.0
  %3562 = vmatpush2.xpose.msra.mxu0 0.0
  %3563 = vmatprep.subr.mxu0 0.0
  %3564 = vmatpush2.xpose.msra.mxu0 0.0
  %3565 = vmatprep.subr.mxu0 0.0
  %3566 = vmatpush2.xpose.msra.mxu0 0.0
  %3567 = vmatprep.subr.mxu0 0.0
  %3568 = vmatpush2.xpose.msra.mxu0 0.0
  %3569 = vmatprep.subr.mxu0 0.0
  %3570 = vmatpush2.xpose.msra.mxu0 0.0
  %3571 = vmatprep.subr.mxu0 0.0
  %3572 = vmatpush2.xpose.msra.mxu0 0.0
  %3573 = vmatprep.subr.mxu0 0.0
  %3574 = vmatpush2.xpose.msra.mxu0 0.0
  %3575 = vmatprep.subr.mxu0 0.0
  %3576 = vmatpush2.xpose.msra.mxu0 0.0
  %3577 = vmatprep.subr.mxu0 0.0
  %3578 = vmatpush2.xpose.msra.mxu0 0.0
  %3579 = vmatprep.subr.mxu0 0.0
  %3580 = vmatpush2.xpose.msra.mxu0 0.0
  %3581 = vmatprep.mubr.f32.mxu0 0.0
  %3582 = vmatmul.mubr.f32.gmra.mxu0 %v3509
  %v3583 = vpop.f32.mrf.mxu0
  %v3584 = vadd.f32 0.0, %v3583
  %v3585 = vpop.f32.mrf.mxu0
  %3586 = vmatprep.mubr.f32.mxu0 0.0
  %3587 = vmatmul.mubr.f32.gmra.mxu0 %v3511
  %v3588 = vpop.f32.mrf.mxu0
  %v3589 = vadd.f32 0.0, %v3588
  %v3590 = vpop.f32.mrf.mxu0
  %3591 = vdwg.mxu0
  %3592 = vrot.lane.b32.xlu0 %v3191, 64
  %v3593 = vpop.permute.xlu0 %3592
  %3594 = vrot.lane.b32.xlu0 %v3193, 64
  %v3595 = vpop.permute.xlu0 %3594
  %v3596 = vsel %vm3334, %v3191, 0
  %v3598 = vsel %vm3334, %v3193, 0
  %v3600 = vsel %vm3334, %v3593, 0
  %v3602 = vsel %vm3334, %v3595, 0
  %3604 = vmatprep.subr.mxu0 0.0
  %3605 = vmatpush1.xpose.msra.mxu0 0.0
  %3606 = vmatprep.subr.mxu0 0.0
  %3607 = vmatpush1.xpose.msra.mxu0 0.0
  %3608 = vmatprep.subr.mxu0 0.0
  %3609 = vmatpush1.xpose.msra.mxu0 0.0
  %3610 = vmatprep.subr.mxu0 0.0
  %3611 = vmatpush1.xpose.msra.mxu0 0.0
  %3612 = vmatprep.subr.mxu0 0.0
  %3613 = vmatpush1.xpose.msra.mxu0 0.0
  %3614 = vmatprep.subr.mxu0 0.0
  %3615 = vmatpush1.xpose.msra.mxu0 0.0
  %3616 = vmatprep.subr.mxu0 0.0
  %3617 = vmatpush1.xpose.msra.mxu0 0.0
  %3618 = vmatprep.subr.mxu0 0.0
  %3619 = vmatpush1.xpose.msra.mxu0 0.0
  %3620 = vmatprep.subr.mxu0 0.0
  %3621 = vmatpush1.xpose.msra.mxu0 0.0
  %3622 = vmatprep.subr.mxu0 0.0
  %3623 = vmatpush1.xpose.msra.mxu0 0.0
  %3624 = vmatprep.subr.mxu0 0.0
  %3625 = vmatpush1.xpose.msra.mxu0 0.0
  %3626 = vmatprep.subr.mxu0 0.0
  %3627 = vmatpush1.xpose.msra.mxu0 0.0
  %3628 = vmatprep.subr.mxu0 0.0
  %3629 = vmatpush1.xpose.msra.mxu0 0.0
  %3630 = vmatprep.subr.mxu0 0.0
  %3631 = vmatpush1.xpose.msra.mxu0 0.0
  %3632 = vmatprep.subr.mxu0 0.0
  %3633 = vmatpush1.xpose.msra.mxu0 %v3602
  %3634 = vmatprep.subr.mxu0 0.0
  %3635 = vmatpush1.xpose.msra.mxu0 %v3600
  %3636 = vmatprep.subr.mxu0 0.0
  %3637 = vmatpush2.xpose.msra.mxu0 0.0
  %3638 = vmatprep.subr.mxu0 0.0
  %3639 = vmatpush2.xpose.msra.mxu0 0.0
  %3640 = vmatprep.subr.mxu0 0.0
  %3641 = vmatpush2.xpose.msra.mxu0 0.0
  %3642 = vmatprep.subr.mxu0 0.0
  %3643 = vmatpush2.xpose.msra.mxu0 0.0
  %3644 = vmatprep.subr.mxu0 0.0
  %3645 = vmatpush2.xpose.msra.mxu0 0.0
  %3646 = vmatprep.subr.mxu0 0.0
  %3647 = vmatpush2.xpose.msra.mxu0 0.0
  %3648 = vmatprep.subr.mxu0 0.0
  %3649 = vmatpush2.xpose.msra.mxu0 0.0
  %3650 = vmatprep.subr.mxu0 0.0
  %3651 = vmatpush2.xpose.msra.mxu0 0.0
  %3652 = vmatprep.subr.mxu0 0.0
  %3653 = vmatpush2.xpose.msra.mxu0 0.0
  %3654 = vmatprep.subr.mxu0 0.0
  %3655 = vmatpush2.xpose.msra.mxu0 0.0
  %3656 = vmatprep.subr.mxu0 0.0
  %3657 = vmatpush2.xpose.msra.mxu0 0.0
  %3658 = vmatprep.subr.mxu0 0.0
  %3659 = vmatpush2.xpose.msra.mxu0 0.0
  %3660 = vmatprep.subr.mxu0 0.0
  %3661 = vmatpush2.xpose.msra.mxu0 0.0
  %3662 = vmatprep.subr.mxu0 0.0
  %3663 = vmatpush2.xpose.msra.mxu0 0.0
  %3664 = vmatprep.subr.mxu0 0.0
  %3665 = vmatpush2.xpose.msra.mxu0 0.0
  %3666 = vmatprep.subr.mxu0 0.0
  %3667 = vmatpush2.xpose.msra.mxu0 0.0
  %3668 = vmatprep.mubr.f32.mxu0 0.0
  %3669 = vmatmul.mubr.f32.gmra.mxu0 %v3596
  %v3670 = vpop.f32.mrf.mxu0
  %v3671 = vadd.f32 0.0, %v3670
  %v3672 = vpop.f32.mrf.mxu0
  %3673 = vmatprep.mubr.f32.mxu0 0.0
  %3674 = vmatmul.mubr.f32.gmra.mxu0 %v3598
  %v3675 = vpop.f32.mrf.mxu0
  %v3676 = vadd.f32 0.0, %v3675
  %v3677 = vpop.f32.mrf.mxu0
  %3678 = vdwg.mxu0
  %3679 = vrot.lane.b32.xlu0 %v3195, 64
  %v3680 = vpop.permute.xlu0 %3679
  %3681 = vrot.lane.b32.xlu0 %v3197, 64
  %v3682 = vpop.permute.xlu0 %3681
  %v3683 = vsel %vm3334, %v3195, 0
  %v3685 = vsel %vm3334, %v3197, 0
  %v3687 = vsel %vm3334, %v3680, 0
  %v3689 = vsel %vm3334, %v3682, 0
  %3691 = vmatprep.subr.mxu0 0.0
  %3692 = vmatpush1.xpose.msra.mxu0 0.0
  %3693 = vmatprep.subr.mxu0 0.0
  %3694 = vmatpush1.xpose.msra.mxu0 0.0
  %3695 = vmatprep.subr.mxu0 0.0
  %3696 = vmatpush1.xpose.msra.mxu0 0.0
  %3697 = vmatprep.subr.mxu0 0.0
  %3698 = vmatpush1.xpose.msra.mxu0 0.0
  %3699 = vmatprep.subr.mxu0 0.0
  %3700 = vmatpush1.xpose.msra.mxu0 0.0
  %3701 = vmatprep.subr.mxu0 0.0
  %3702 = vmatpush1.xpose.msra.mxu0 0.0
  %3703 = vmatprep.subr.mxu0 0.0
  %3704 = vmatpush1.xpose.msra.mxu0 0.0
  %3705 = vmatprep.subr.mxu0 0.0
  %3706 = vmatpush1.xpose.msra.mxu0 0.0
  %3707 = vmatprep.subr.mxu0 0.0
  %3708 = vmatpush1.xpose.msra.mxu0 0.0
  %3709 = vmatprep.subr.mxu0 0.0
  %3710 = vmatpush1.xpose.msra.mxu0 0.0
  %3711 = vmatprep.subr.mxu0 0.0
  %3712 = vmatpush1.xpose.msra.mxu0 0.0
  %3713 = vmatprep.subr.mxu0 0.0
  %3714 = vmatpush1.xpose.msra.mxu0 0.0
  %3715 = vmatprep.subr.mxu0 0.0
  %3716 = vmatpush1.xpose.msra.mxu0 0.0
  %3717 = vmatprep.subr.mxu0 0.0
  %3718 = vmatpush1.xpose.msra.mxu0 0.0
  %3719 = vmatprep.subr.mxu0 0.0
  %3720 = vmatpush1.xpose.msra.mxu0 %v3689
  %3721 = vmatprep.subr.mxu0 0.0
  %3722 = vmatpush1.xpose.msra.mxu0 %v3687
  %3723 = vmatprep.subr.mxu0 0.0
  %3724 = vmatpush2.xpose.msra.mxu0 0.0
  %3725 = vmatprep.subr.mxu0 0.0
  %3726 = vmatpush2.xpose.msra.mxu0 0.0
  %3727 = vmatprep.subr.mxu0 0.0
  %3728 = vmatpush2.xpose.msra.mxu0 0.0
  %3729 = vmatprep.subr.mxu0 0.0
  %3730 = vmatpush2.xpose.msra.mxu0 0.0
  %3731 = vmatprep.subr.mxu0 0.0
  %3732 = vmatpush2.xpose.msra.mxu0 0.0
  %3733 = vmatprep.subr.mxu0 0.0
  %3734 = vmatpush2.xpose.msra.mxu0 0.0
  %3735 = vmatprep.subr.mxu0 0.0
  %3736 = vmatpush2.xpose.msra.mxu0 0.0
  %3737 = vmatprep.subr.mxu0 0.0
  %3738 = vmatpush2.xpose.msra.mxu0 0.0
  %3739 = vmatprep.subr.mxu0 0.0
  %3740 = vmatpush2.xpose.msra.mxu0 0.0
  %3741 = vmatprep.subr.mxu0 0.0
  %3742 = vmatpush2.xpose.msra.mxu0 0.0
  %3743 = vmatprep.subr.mxu0 0.0
  %3744 = vmatpush2.xpose.msra.mxu0 0.0
  %3745 = vmatprep.subr.mxu0 0.0
  %3746 = vmatpush2.xpose.msra.mxu0 0.0
  %3747 = vmatprep.subr.mxu0 0.0
  %3748 = vmatpush2.xpose.msra.mxu0 0.0
  %3749 = vmatprep.subr.mxu0 0.0
  %3750 = vmatpush2.xpose.msra.mxu0 0.0
  %3751 = vmatprep.subr.mxu0 0.0
  %3752 = vmatpush2.xpose.msra.mxu0 0.0
  %3753 = vmatprep.subr.mxu0 0.0
  %3754 = vmatpush2.xpose.msra.mxu0 0.0
  %3755 = vmatprep.mubr.f32.mxu0 0.0
  %3756 = vmatmul.mubr.f32.gmra.mxu0 %v3683
  %v3757 = vpop.f32.mrf.mxu0
  %v3758 = vadd.f32 0.0, %v3757
  %v3759 = vpop.f32.mrf.mxu0
  %3760 = vmatprep.mubr.f32.mxu0 0.0
  %3761 = vmatmul.mubr.f32.gmra.mxu0 %v3685
  %v3762 = vpop.f32.mrf.mxu0
  %v3763 = vadd.f32 0.0, %v3762
  %v3764 = vpop.f32.mrf.mxu0
  %3765 = vdwg.mxu0
  %3766 = vrot.lane.b32.xlu0 %v3199, 64
  %v3767 = vpop.permute.xlu0 %3766
  %3768 = vrot.lane.b32.xlu0 %v3201, 64
  %v3769 = vpop.permute.xlu0 %3768
  %v3770 = vsel %vm3334, %v3199, 0
  %v3772 = vsel %vm3334, %v3201, 0
  %v3774 = vsel %vm3334, %v3767, 0
  %v3776 = vsel %vm3334, %v3769, 0
  %3778 = vmatprep.subr.mxu0 0.0
  %3779 = vmatpush1.xpose.msra.mxu0 0.0
  %3780 = vmatprep.subr.mxu0 0.0
  %3781 = vmatpush1.xpose.msra.mxu0 0.0
  %3782 = vmatprep.subr.mxu0 0.0
  %3783 = vmatpush1.xpose.msra.mxu0 0.0
  %3784 = vmatprep.subr.mxu0 0.0
  %3785 = vmatpush1.xpose.msra.mxu0 0.0
  %3786 = vmatprep.subr.mxu0 0.0
  %3787 = vmatpush1.xpose.msra.mxu0 0.0
  %3788 = vmatprep.subr.mxu0 0.0
  %3789 = vmatpush1.xpose.msra.mxu0 0.0
  %3790 = vmatprep.subr.mxu0 0.0
  %3791 = vmatpush1.xpose.msra.mxu0 0.0
  %3792 = vmatprep.subr.mxu0 0.0
  %3793 = vmatpush1.xpose.msra.mxu0 0.0
  %3794 = vmatprep.subr.mxu0 0.0
  %3795 = vmatpush1.xpose.msra.mxu0 0.0
  %3796 = vmatprep.subr.mxu0 0.0
  %3797 = vmatpush1.xpose.msra.mxu0 0.0
  %3798 = vmatprep.subr.mxu0 0.0
  %3799 = vmatpush1.xpose.msra.mxu0 0.0
  %3800 = vmatprep.subr.mxu0 0.0
  %3801 = vmatpush1.xpose.msra.mxu0 0.0
  %3802 = vmatprep.subr.mxu0 0.0
  %3803 = vmatpush1.xpose.msra.mxu0 0.0
  %3804 = vmatprep.subr.mxu0 0.0
  %3805 = vmatpush1.xpose.msra.mxu0 0.0
  %3806 = vmatprep.subr.mxu0 0.0
  %3807 = vmatpush1.xpose.msra.mxu0 %v3776
  %3808 = vmatprep.subr.mxu0 0.0
  %3809 = vmatpush1.xpose.msra.mxu0 %v3774
  %3810 = vmatprep.subr.mxu0 0.0
  %3811 = vmatpush2.xpose.msra.mxu0 0.0
  %3812 = vmatprep.subr.mxu0 0.0
  %3813 = vmatpush2.xpose.msra.mxu0 0.0
  %3814 = vmatprep.subr.mxu0 0.0
  %3815 = vmatpush2.xpose.msra.mxu0 0.0
  %3816 = vmatprep.subr.mxu0 0.0
  %3817 = vmatpush2.xpose.msra.mxu0 0.0
  %3818 = vmatprep.subr.mxu0 0.0
  %3819 = vmatpush2.xpose.msra.mxu0 0.0
  %3820 = vmatprep.subr.mxu0 0.0
  %3821 = vmatpush2.xpose.msra.mxu0 0.0
  %3822 = vmatprep.subr.mxu0 0.0
  %3823 = vmatpush2.xpose.msra.mxu0 0.0
  %3824 = vmatprep.subr.mxu0 0.0
  %3825 = vmatpush2.xpose.msra.mxu0 0.0
  %3826 = vmatprep.subr.mxu0 0.0
  %3827 = vmatpush2.xpose.msra.mxu0 0.0
  %3828 = vmatprep.subr.mxu0 0.0
  %3829 = vmatpush2.xpose.msra.mxu0 0.0
  %3830 = vmatprep.subr.mxu0 0.0
  %3831 = vmatpush2.xpose.msra.mxu0 0.0
  %3832 = vmatprep.subr.mxu0 0.0
  %3833 = vmatpush2.xpose.msra.mxu0 0.0
  %3834 = vmatprep.subr.mxu0 0.0
  %3835 = vmatpush2.xpose.msra.mxu0 0.0
  %3836 = vmatprep.subr.mxu0 0.0
  %3837 = vmatpush2.xpose.msra.mxu0 0.0
  %3838 = vmatprep.subr.mxu0 0.0
  %3839 = vmatpush2.xpose.msra.mxu0 0.0
  %3840 = vmatprep.subr.mxu0 0.0
  %3841 = vmatpush2.xpose.msra.mxu0 0.0
  %3842 = vmatprep.mubr.f32.mxu0 0.0
  %3843 = vmatmul.mubr.f32.gmra.mxu0 %v3770
  %v3844 = vpop.f32.mrf.mxu0
  %v3845 = vadd.f32 0.0, %v3844
  %v3846 = vpop.f32.mrf.mxu0
  %3847 = vmatprep.mubr.f32.mxu0 0.0
  %3848 = vmatmul.mubr.f32.gmra.mxu0 %v3772
  %v3849 = vpop.f32.mrf.mxu0
  %v3850 = vadd.f32 0.0, %v3849
  %v3851 = vpop.f32.mrf.mxu0
  %3852 = vdwg.mxu0
  %3853 = vrot.lane.b32.xlu0 %v3203, 64
  %v3854 = vpop.permute.xlu0 %3853
  %3855 = vrot.lane.b32.xlu0 %v3205, 64
  %v3856 = vpop.permute.xlu0 %3855
  %v3857 = vsel %vm3334, %v3203, 0
  %v3859 = vsel %vm3334, %v3205, 0
  %v3861 = vsel %vm3334, %v3854, 0
  %v3863 = vsel %vm3334, %v3856, 0
  %3865 = vmatprep.subr.mxu0 0.0
  %3866 = vmatpush1.xpose.msra.mxu0 0.0
  %3867 = vmatprep.subr.mxu0 0.0
  %3868 = vmatpush1.xpose.msra.mxu0 0.0
  %3869 = vmatprep.subr.mxu0 0.0
  %3870 = vmatpush1.xpose.msra.mxu0 0.0
  %3871 = vmatprep.subr.mxu0 0.0
  %3872 = vmatpush1.xpose.msra.mxu0 0.0
  %3873 = vmatprep.subr.mxu0 0.0
  %3874 = vmatpush1.xpose.msra.mxu0 0.0
  %3875 = vmatprep.subr.mxu0 0.0
  %3876 = vmatpush1.xpose.msra.mxu0 0.0
  %3877 = vmatprep.subr.mxu0 0.0
  %3878 = vmatpush1.xpose.msra.mxu0 0.0
  %3879 = vmatprep.subr.mxu0 0.0
  %3880 = vmatpush1.xpose.msra.mxu0 0.0
  %3881 = vmatprep.subr.mxu0 0.0
  %3882 = vmatpush1.xpose.msra.mxu0 0.0
  %3883 = vmatprep.subr.mxu0 0.0
  %3884 = vmatpush1.xpose.msra.mxu0 0.0
  %3885 = vmatprep.subr.mxu0 0.0
  %3886 = vmatpush1.xpose.msra.mxu0 0.0
  %3887 = vmatprep.subr.mxu0 0.0
  %3888 = vmatpush1.xpose.msra.mxu0 0.0
  %3889 = vmatprep.subr.mxu0 0.0
  %3890 = vmatpush1.xpose.msra.mxu0 0.0
  %3891 = vmatprep.subr.mxu0 0.0
  %3892 = vmatpush1.xpose.msra.mxu0 0.0
  %3893 = vmatprep.subr.mxu0 0.0
  %3894 = vmatpush1.xpose.msra.mxu0 %v3863
  %3895 = vmatprep.subr.mxu0 0.0
  %3896 = vmatpush1.xpose.msra.mxu0 %v3861
  %3897 = vmatprep.subr.mxu0 0.0
  %3898 = vmatpush2.xpose.msra.mxu0 0.0
  %3899 = vmatprep.subr.mxu0 0.0
  %3900 = vmatpush2.xpose.msra.mxu0 0.0
  %3901 = vmatprep.subr.mxu0 0.0
  %3902 = vmatpush2.xpose.msra.mxu0 0.0
  %3903 = vmatprep.subr.mxu0 0.0
  %3904 = vmatpush2.xpose.msra.mxu0 0.0
  %3905 = vmatprep.subr.mxu0 0.0
  %3906 = vmatpush2.xpose.msra.mxu0 0.0
  %3907 = vmatprep.subr.mxu0 0.0
  %3908 = vmatpush2.xpose.msra.mxu0 0.0
  %3909 = vmatprep.subr.mxu0 0.0
  %3910 = vmatpush2.xpose.msra.mxu0 0.0
  %3911 = vmatprep.subr.mxu0 0.0
  %3912 = vmatpush2.xpose.msra.mxu0 0.0
  %3913 = vmatprep.subr.mxu0 0.0
  %3914 = vmatpush2.xpose.msra.mxu0 0.0
  %3915 = vmatprep.subr.mxu0 0.0
  %3916 = vmatpush2.xpose.msra.mxu0 0.0
  %3917 = vmatprep.subr.mxu0 0.0
  %3918 = vmatpush2.xpose.msra.mxu0 0.0
  %3919 = vmatprep.subr.mxu0 0.0
  %3920 = vmatpush2.xpose.msra.mxu0 0.0
  %3921 = vmatprep.subr.mxu0 0.0
  %3922 = vmatpush2.xpose.msra.mxu0 0.0
  %3923 = vmatprep.subr.mxu0 0.0
  %3924 = vmatpush2.xpose.msra.mxu0 0.0
  %3925 = vmatprep.subr.mxu0 0.0
  %3926 = vmatpush2.xpose.msra.mxu0 0.0
  %3927 = vmatprep.subr.mxu0 0.0
  %3928 = vmatpush2.xpose.msra.mxu0 0.0
  %3929 = vmatprep.mubr.f32.mxu0 0.0
  %3930 = vmatmul.mubr.f32.gmra.mxu0 %v3857
  %v3931 = vpop.f32.mrf.mxu0
  %v3932 = vadd.f32 0.0, %v3931
  %v3933 = vpop.f32.mrf.mxu0
  %3934 = vmatprep.mubr.f32.mxu0 0.0
  %3935 = vmatmul.mubr.f32.gmra.mxu0 %v3859
  %v3936 = vpop.f32.mrf.mxu0
  %v3937 = vadd.f32 0.0, %v3936
  %v3938 = vpop.f32.mrf.mxu0
  %3939 = vdwg.mxu0
  %3940 = vrot.lane.b32.xlu0 %v3207, 64
  %v3941 = vpop.permute.xlu0 %3940
  %3942 = vrot.lane.b32.xlu0 %v3209, 64
  %v3943 = vpop.permute.xlu0 %3942
  %v3944 = vsel %vm3334, %v3207, 0
  %v3946 = vsel %vm3334, %v3209, 0
  %v3948 = vsel %vm3334, %v3941, 0
  %v3950 = vsel %vm3334, %v3943, 0
  %3952 = vmatprep.subr.mxu0 0.0
  %3953 = vmatpush1.xpose.msra.mxu0 0.0
  %3954 = vmatprep.subr.mxu0 0.0
  %3955 = vmatpush1.xpose.msra.mxu0 0.0
  %3956 = vmatprep.subr.mxu0 0.0
  %3957 = vmatpush1.xpose.msra.mxu0 0.0
  %3958 = vmatprep.subr.mxu0 0.0
  %3959 = vmatpush1.xpose.msra.mxu0 0.0
  %3960 = vmatprep.subr.mxu0 0.0
  %3961 = vmatpush1.xpose.msra.mxu0 0.0
  %3962 = vmatprep.subr.mxu0 0.0
  %3963 = vmatpush1.xpose.msra.mxu0 0.0
  %3964 = vmatprep.subr.mxu0 0.0
  %3965 = vmatpush1.xpose.msra.mxu0 0.0
  %3966 = vmatprep.subr.mxu0 0.0
  %3967 = vmatpush1.xpose.msra.mxu0 0.0
  %3968 = vmatprep.subr.mxu0 0.0
  %3969 = vmatpush1.xpose.msra.mxu0 0.0
  %3970 = vmatprep.subr.mxu0 0.0
  %3971 = vmatpush1.xpose.msra.mxu0 0.0
  %3972 = vmatprep.subr.mxu0 0.0
  %3973 = vmatpush1.xpose.msra.mxu0 0.0
  %3974 = vmatprep.subr.mxu0 0.0
  %3975 = vmatpush1.xpose.msra.mxu0 0.0
  %3976 = vmatprep.subr.mxu0 0.0
  %3977 = vmatpush1.xpose.msra.mxu0 0.0
  %3978 = vmatprep.subr.mxu0 0.0
  %3979 = vmatpush1.xpose.msra.mxu0 0.0
  %3980 = vmatprep.subr.mxu0 0.0
  %3981 = vmatpush1.xpose.msra.mxu0 %v3950
  %3982 = vmatprep.subr.mxu0 0.0
  %3983 = vmatpush1.xpose.msra.mxu0 %v3948
  %3984 = vmatprep.subr.mxu0 0.0
  %3985 = vmatpush2.xpose.msra.mxu0 0.0
  %3986 = vmatprep.subr.mxu0 0.0
  %3987 = vmatpush2.xpose.msra.mxu0 0.0
  %3988 = vmatprep.subr.mxu0 0.0
  %3989 = vmatpush2.xpose.msra.mxu0 0.0
  %3990 = vmatprep.subr.mxu0 0.0
  %3991 = vmatpush2.xpose.msra.mxu0 0.0
  %3992 = vmatprep.subr.mxu0 0.0
  %3993 = vmatpush2.xpose.msra.mxu0 0.0
  %3994 = vmatprep.subr.mxu0 0.0
  %3995 = vmatpush2.xpose.msra.mxu0 0.0
  %3996 = vmatprep.subr.mxu0 0.0
  %3997 = vmatpush2.xpose.msra.mxu0 0.0
  %3998 = vmatprep.subr.mxu0 0.0
  %3999 = vmatpush2.xpose.msra.mxu0 0.0
  %4000 = vmatprep.subr.mxu0 0.0
  %4001 = vmatpush2.xpose.msra.mxu0 0.0
  %4002 = vmatprep.subr.mxu0 0.0
  %4003 = vmatpush2.xpose.msra.mxu0 0.0
  %4004 = vmatprep.subr.mxu0 0.0
  %4005 = vmatpush2.xpose.msra.mxu0 0.0
  %4006 = vmatprep.subr.mxu0 0.0
  %4007 = vmatpush2.xpose.msra.mxu0 0.0
  %4008 = vmatprep.subr.mxu0 0.0
  %4009 = vmatpush2.xpose.msra.mxu0 0.0
  %4010 = vmatprep.subr.mxu0 0.0
  %4011 = vmatpush2.xpose.msra.mxu0 0.0
  %4012 = vmatprep.subr.mxu0 0.0
  %4013 = vmatpush2.xpose.msra.mxu0 0.0
  %4014 = vmatprep.subr.mxu0 0.0
  %4015 = vmatpush2.xpose.msra.mxu0 0.0
  %4016 = vmatprep.mubr.f32.mxu0 0.0
  %4017 = vmatmul.mubr.f32.gmra.mxu0 %v3944
  %v4018 = vpop.f32.mrf.mxu0
  %v4019 = vadd.f32 0.0, %v4018
  %v4020 = vpop.f32.mrf.mxu0
  %4021 = vmatprep.mubr.f32.mxu0 0.0
  %4022 = vmatmul.mubr.f32.gmra.mxu0 %v3946
  %v4023 = vpop.f32.mrf.mxu0
  %v4024 = vadd.f32 0.0, %v4023
  %v4025 = vpop.f32.mrf.mxu0
  %4026 = vdwg.mxu0
  %4027 = vrot.lane.b32.xlu0 %v3211, 64
  %v4028 = vpop.permute.xlu0 %4027
  %4029 = vrot.lane.b32.xlu0 %v3213, 64
  %v4030 = vpop.permute.xlu0 %4029
  %v4031 = vsel %vm3334, %v3211, 0
  %v4033 = vsel %vm3334, %v3213, 0
  %v4035 = vsel %vm3334, %v4028, 0
  %v4037 = vsel %vm3334, %v4030, 0
  %4039 = vmatprep.subr.mxu0 0.0
  %4040 = vmatpush1.xpose.msra.mxu0 0.0
  %4041 = vmatprep.subr.mxu0 0.0
  %4042 = vmatpush1.xpose.msra.mxu0 0.0
  %4043 = vmatprep.subr.mxu0 0.0
  %4044 = vmatpush1.xpose.msra.mxu0 0.0
  %4045 = vmatprep.subr.mxu0 0.0
  %4046 = vmatpush1.xpose.msra.mxu0 0.0
  %4047 = vmatprep.subr.mxu0 0.0
  %4048 = vmatpush1.xpose.msra.mxu0 0.0
  %4049 = vmatprep.subr.mxu0 0.0
  %4050 = vmatpush1.xpose.msra.mxu0 0.0
  %4051 = vmatprep.subr.mxu0 0.0
  %4052 = vmatpush1.xpose.msra.mxu0 0.0
  %4053 = vmatprep.subr.mxu0 0.0
  %4054 = vmatpush1.xpose.msra.mxu0 0.0
  %4055 = vmatprep.subr.mxu0 0.0
  %4056 = vmatpush1.xpose.msra.mxu0 0.0
  %4057 = vmatprep.subr.mxu0 0.0
  %4058 = vmatpush1.xpose.msra.mxu0 0.0
  %4059 = vmatprep.subr.mxu0 0.0
  %4060 = vmatpush1.xpose.msra.mxu0 0.0
  %4061 = vmatprep.subr.mxu0 0.0
  %4062 = vmatpush1.xpose.msra.mxu0 0.0
  %4063 = vmatprep.subr.mxu0 0.0
  %4064 = vmatpush1.xpose.msra.mxu0 0.0
  %4065 = vmatprep.subr.mxu0 0.0
  %4066 = vmatpush1.xpose.msra.mxu0 0.0
  %4067 = vmatprep.subr.mxu0 0.0
  %4068 = vmatpush1.xpose.msra.mxu0 %v4037
  %4069 = vmatprep.subr.mxu0 0.0
  %4070 = vmatpush1.xpose.msra.mxu0 %v4035
  %4071 = vmatprep.subr.mxu0 0.0
  %4072 = vmatpush2.xpose.msra.mxu0 0.0
  %4073 = vmatprep.subr.mxu0 0.0
  %4074 = vmatpush2.xpose.msra.mxu0 0.0
  %4075 = vmatprep.subr.mxu0 0.0
  %4076 = vmatpush2.xpose.msra.mxu0 0.0
  %4077 = vmatprep.subr.mxu0 0.0
  %4078 = vmatpush2.xpose.msra.mxu0 0.0
  %4079 = vmatprep.subr.mxu0 0.0
  %4080 = vmatpush2.xpose.msra.mxu0 0.0
  %4081 = vmatprep.subr.mxu0 0.0
  %4082 = vmatpush2.xpose.msra.mxu0 0.0
  %4083 = vmatprep.subr.mxu0 0.0
  %4084 = vmatpush2.xpose.msra.mxu0 0.0
  %4085 = vmatprep.subr.mxu0 0.0
  %4086 = vmatpush2.xpose.msra.mxu0 0.0
  %4087 = vmatprep.subr.mxu0 0.0
  %4088 = vmatpush2.xpose.msra.mxu0 0.0
  %4089 = vmatprep.subr.mxu0 0.0
  %4090 = vmatpush2.xpose.msra.mxu0 0.0
  %4091 = vmatprep.subr.mxu0 0.0
  %4092 = vmatpush2.xpose.msra.mxu0 0.0
  %4093 = vmatprep.subr.mxu0 0.0
  %4094 = vmatpush2.xpose.msra.mxu0 0.0
  %4095 = vmatprep.subr.mxu0 0.0
  %4096 = vmatpush2.xpose.msra.mxu0 0.0
  %4097 = vmatprep.subr.mxu0 0.0
  %4098 = vmatpush2.xpose.msra.mxu0 0.0
  %4099 = vmatprep.subr.mxu0 0.0
  %4100 = vmatpush2.xpose.msra.mxu0 0.0
  %4101 = vmatprep.subr.mxu0 0.0
  %4102 = vmatpush2.xpose.msra.mxu0 0.0
  %4103 = vmatprep.mubr.f32.mxu0 0.0
  %4104 = vmatmul.mubr.f32.gmra.mxu0 %v4031
  %v4105 = vpop.f32.mrf.mxu0
  %v4106 = vadd.f32 0.0, %v4105
  %v4107 = vpop.f32.mrf.mxu0
  %4108 = vmatprep.mubr.f32.mxu0 0.0
  %4109 = vmatmul.mubr.f32.gmra.mxu0 %v4033
  %v4110 = vpop.f32.mrf.mxu0
  %v4111 = vadd.f32 0.0, %v4110
  %v4112 = vpop.f32.mrf.mxu0
  %4113 = vdwg.mxu0
  %4114 = vrot.lane.b32.xlu0 %v3215, 64
  %v4115 = vpop.permute.xlu0 %4114
  %4116 = vrot.lane.b32.xlu0 %v3217, 64
  %v4117 = vpop.permute.xlu0 %4116
  %v4118 = vsel %vm3334, %v3215, 0
  %v4120 = vsel %vm3334, %v3217, 0
  %v4122 = vsel %vm3334, %v4115, 0
  %v4124 = vsel %vm3334, %v4117, 0
  %4126 = vmatprep.subr.mxu0 0.0
  %4127 = vmatpush1.xpose.msra.mxu0 0.0
  %4128 = vmatprep.subr.mxu0 0.0
  %4129 = vmatpush1.xpose.msra.mxu0 0.0
  %4130 = vmatprep.subr.mxu0 0.0
  %4131 = vmatpush1.xpose.msra.mxu0 0.0
  %4132 = vmatprep.subr.mxu0 0.0
  %4133 = vmatpush1.xpose.msra.mxu0 0.0
  %4134 = vmatprep.subr.mxu0 0.0
  %4135 = vmatpush1.xpose.msra.mxu0 0.0
  %4136 = vmatprep.subr.mxu0 0.0
  %4137 = vmatpush1.xpose.msra.mxu0 0.0
  %4138 = vmatprep.subr.mxu0 0.0
  %4139 = vmatpush1.xpose.msra.mxu0 0.0
  %4140 = vmatprep.subr.mxu0 0.0
  %4141 = vmatpush1.xpose.msra.mxu0 0.0
  %4142 = vmatprep.subr.mxu0 0.0
  %4143 = vmatpush1.xpose.msra.mxu0 0.0
  %4144 = vmatprep.subr.mxu0 0.0
  %4145 = vmatpush1.xpose.msra.mxu0 0.0
  %4146 = vmatprep.subr.mxu0 0.0
  %4147 = vmatpush1.xpose.msra.mxu0 0.0
  %4148 = vmatprep.subr.mxu0 0.0
  %4149 = vmatpush1.xpose.msra.mxu0 0.0
  %4150 = vmatprep.subr.mxu0 0.0
  %4151 = vmatpush1.xpose.msra.mxu0 0.0
  %4152 = vmatprep.subr.mxu0 0.0
  %4153 = vmatpush1.xpose.msra.mxu0 0.0
  %4154 = vmatprep.subr.mxu0 0.0
  %4155 = vmatpush1.xpose.msra.mxu0 %v4124
  %4156 = vmatprep.subr.mxu0 0.0
  %4157 = vmatpush1.xpose.msra.mxu0 %v4122
  %4158 = vmatprep.subr.mxu0 0.0
  %4159 = vmatpush2.xpose.msra.mxu0 0.0
  %4160 = vmatprep.subr.mxu0 0.0
  %4161 = vmatpush2.xpose.msra.mxu0 0.0
  %4162 = vmatprep.subr.mxu0 0.0
  %4163 = vmatpush2.xpose.msra.mxu0 0.0
  %4164 = vmatprep.subr.mxu0 0.0
  %4165 = vmatpush2.xpose.msra.mxu0 0.0
  %4166 = vmatprep.subr.mxu0 0.0
  %4167 = vmatpush2.xpose.msra.mxu0 0.0
  %4168 = vmatprep.subr.mxu0 0.0
  %4169 = vmatpush2.xpose.msra.mxu0 0.0
  %4170 = vmatprep.subr.mxu0 0.0
  %4171 = vmatpush2.xpose.msra.mxu0 0.0
  %4172 = vmatprep.subr.mxu0 0.0
  %4173 = vmatpush2.xpose.msra.mxu0 0.0
  %4174 = vmatprep.subr.mxu0 0.0
  %4175 = vmatpush2.xpose.msra.mxu0 0.0
  %4176 = vmatprep.subr.mxu0 0.0
  %4177 = vmatpush2.xpose.msra.mxu0 0.0
  %4178 = vmatprep.subr.mxu0 0.0
  %4179 = vmatpush2.xpose.msra.mxu0 0.0
  %4180 = vmatprep.subr.mxu0 0.0
  %4181 = vmatpush2.xpose.msra.mxu0 0.0
  %4182 = vmatprep.subr.mxu0 0.0
  %4183 = vmatpush2.xpose.msra.mxu0 0.0
  %4184 = vmatprep.subr.mxu0 0.0
  %4185 = vmatpush2.xpose.msra.mxu0 0.0
  %4186 = vmatprep.subr.mxu0 0.0
  %4187 = vmatpush2.xpose.msra.mxu0 0.0
  %4188 = vmatprep.subr.mxu0 0.0
  %4189 = vmatpush2.xpose.msra.mxu0 0.0
  %4190 = vmatprep.mubr.f32.mxu0 0.0
  %4191 = vmatmul.mubr.f32.gmra.mxu0 %v4118
  %v4192 = vpop.f32.mrf.mxu0
  %v4193 = vadd.f32 0.0, %v4192
  %v4194 = vpop.f32.mrf.mxu0
  %4195 = vmatprep.mubr.f32.mxu0 0.0
  %4196 = vmatmul.mubr.f32.gmra.mxu0 %v4120
  %v4197 = vpop.f32.mrf.mxu0
  %v4198 = vadd.f32 0.0, %v4197
  %v4199 = vpop.f32.mrf.mxu0
  %4200 = vdwg.mxu0
  %4201 = vrot.lane.b32.xlu0 %v3219, 64
  %v4202 = vpop.permute.xlu0 %4201
  %4203 = vrot.lane.b32.xlu0 %v3221, 64
  %v4204 = vpop.permute.xlu0 %4203
  %v4205 = vsel %vm3334, %v3219, 0
  %v4207 = vsel %vm3334, %v3221, 0
  %v4209 = vsel %vm3334, %v4202, 0
  %v4211 = vsel %vm3334, %v4204, 0
  %4213 = vmatprep.subr.mxu0 0.0
  %4214 = vmatpush1.xpose.msra.mxu0 0.0
  %4215 = vmatprep.subr.mxu0 0.0
  %4216 = vmatpush1.xpose.msra.mxu0 0.0
  %4217 = vmatprep.subr.mxu0 0.0
  %4218 = vmatpush1.xpose.msra.mxu0 0.0
  %4219 = vmatprep.subr.mxu0 0.0
  %4220 = vmatpush1.xpose.msra.mxu0 0.0
  %4221 = vmatprep.subr.mxu0 0.0
  %4222 = vmatpush1.xpose.msra.mxu0 0.0
  %4223 = vmatprep.subr.mxu0 0.0
  %4224 = vmatpush1.xpose.msra.mxu0 0.0
  %4225 = vmatprep.subr.mxu0 0.0
  %4226 = vmatpush1.xpose.msra.mxu0 0.0
  %4227 = vmatprep.subr.mxu0 0.0
  %4228 = vmatpush1.xpose.msra.mxu0 0.0
  %4229 = vmatprep.subr.mxu0 0.0
  %4230 = vmatpush1.xpose.msra.mxu0 0.0
  %4231 = vmatprep.subr.mxu0 0.0
  %4232 = vmatpush1.xpose.msra.mxu0 0.0
  %4233 = vmatprep.subr.mxu0 0.0
  %4234 = vmatpush1.xpose.msra.mxu0 0.0
  %4235 = vmatprep.subr.mxu0 0.0
  %4236 = vmatpush1.xpose.msra.mxu0 0.0
  %4237 = vmatprep.subr.mxu0 0.0
  %4238 = vmatpush1.xpose.msra.mxu0 0.0
  %4239 = vmatprep.subr.mxu0 0.0
  %4240 = vmatpush1.xpose.msra.mxu0 0.0
  %4241 = vmatprep.subr.mxu0 0.0
  %4242 = vmatpush1.xpose.msra.mxu0 %v4211
  %4243 = vmatprep.subr.mxu0 0.0
  %4244 = vmatpush1.xpose.msra.mxu0 %v4209
  %4245 = vmatprep.subr.mxu0 0.0
  %4246 = vmatpush2.xpose.msra.mxu0 0.0
  %4247 = vmatprep.subr.mxu0 0.0
  %4248 = vmatpush2.xpose.msra.mxu0 0.0
  %4249 = vmatprep.subr.mxu0 0.0
  %4250 = vmatpush2.xpose.msra.mxu0 0.0
  %4251 = vmatprep.subr.mxu0 0.0
  %4252 = vmatpush2.xpose.msra.mxu0 0.0
  %4253 = vmatprep.subr.mxu0 0.0
  %4254 = vmatpush2.xpose.msra.mxu0 0.0
  %4255 = vmatprep.subr.mxu0 0.0
  %4256 = vmatpush2.xpose.msra.mxu0 0.0
  %4257 = vmatprep.subr.mxu0 0.0
  %4258 = vmatpush2.xpose.msra.mxu0 0.0
  %4259 = vmatprep.subr.mxu0 0.0
  %4260 = vmatpush2.xpose.msra.mxu0 0.0
  %4261 = vmatprep.subr.mxu0 0.0
  %4262 = vmatpush2.xpose.msra.mxu0 0.0
  %4263 = vmatprep.subr.mxu0 0.0
  %4264 = vmatpush2.xpose.msra.mxu0 0.0
  %4265 = vmatprep.subr.mxu0 0.0
  %4266 = vmatpush2.xpose.msra.mxu0 0.0
  %4267 = vmatprep.subr.mxu0 0.0
  %4268 = vmatpush2.xpose.msra.mxu0 0.0
  %4269 = vmatprep.subr.mxu0 0.0
  %4270 = vmatpush2.xpose.msra.mxu0 0.0
  %4271 = vmatprep.subr.mxu0 0.0
  %4272 = vmatpush2.xpose.msra.mxu0 0.0
  %4273 = vmatprep.subr.mxu0 0.0
  %4274 = vmatpush2.xpose.msra.mxu0 0.0
  %4275 = vmatprep.subr.mxu0 0.0
  %4276 = vmatpush2.xpose.msra.mxu0 0.0
  %4277 = vmatprep.mubr.f32.mxu0 0.0
  %4278 = vmatmul.mubr.f32.gmra.mxu0 %v4205
  %v4279 = vpop.f32.mrf.mxu0
  %v4280 = vadd.f32 0.0, %v4279
  %v4281 = vpop.f32.mrf.mxu0
  %4282 = vmatprep.mubr.f32.mxu0 0.0
  %4283 = vmatmul.mubr.f32.gmra.mxu0 %v4207
  %v4284 = vpop.f32.mrf.mxu0
  %v4285 = vadd.f32 0.0, %v4284
  %v4286 = vpop.f32.mrf.mxu0
  %4287 = vdwg.mxu0
  %4288 = vrot.lane.b32.xlu0 %v3223, 64
  %v4289 = vpop.permute.xlu0 %4288
  %4290 = vrot.lane.b32.xlu0 %v3225, 64
  %v4291 = vpop.permute.xlu0 %4290
  %v4292 = vsel %vm3334, %v3223, 0
  %v4294 = vsel %vm3334, %v3225, 0
  %v4296 = vsel %vm3334, %v4289, 0
  %v4298 = vsel %vm3334, %v4291, 0
  %4300 = vmatprep.subr.mxu0 0.0
  %4301 = vmatpush1.xpose.msra.mxu0 0.0
  %4302 = vmatprep.subr.mxu0 0.0
  %4303 = vmatpush1.xpose.msra.mxu0 0.0
  %4304 = vmatprep.subr.mxu0 0.0
  %4305 = vmatpush1.xpose.msra.mxu0 0.0
  %4306 = vmatprep.subr.mxu0 0.0
  %4307 = vmatpush1.xpose.msra.mxu0 0.0
  %4308 = vmatprep.subr.mxu0 0.0
  %4309 = vmatpush1.xpose.msra.mxu0 0.0
  %4310 = vmatprep.subr.mxu0 0.0
  %4311 = vmatpush1.xpose.msra.mxu0 0.0
  %4312 = vmatprep.subr.mxu0 0.0
  %4313 = vmatpush1.xpose.msra.mxu0 0.0
  %4314 = vmatprep.subr.mxu0 0.0
  %4315 = vmatpush1.xpose.msra.mxu0 0.0
  %4316 = vmatprep.subr.mxu0 0.0
  %4317 = vmatpush1.xpose.msra.mxu0 0.0
  %4318 = vmatprep.subr.mxu0 0.0
  %4319 = vmatpush1.xpose.msra.mxu0 0.0
  %4320 = vmatprep.subr.mxu0 0.0
  %4321 = vmatpush1.xpose.msra.mxu0 0.0
  %4322 = vmatprep.subr.mxu0 0.0
  %4323 = vmatpush1.xpose.msra.mxu0 0.0
  %4324 = vmatprep.subr.mxu0 0.0
  %4325 = vmatpush1.xpose.msra.mxu0 0.0
  %4326 = vmatprep.subr.mxu0 0.0
  %4327 = vmatpush1.xpose.msra.mxu0 0.0
  %4328 = vmatprep.subr.mxu0 0.0
  %4329 = vmatpush1.xpose.msra.mxu0 %v4298
  %4330 = vmatprep.subr.mxu0 0.0
  %4331 = vmatpush1.xpose.msra.mxu0 %v4296
  %4332 = vmatprep.subr.mxu0 0.0
  %4333 = vmatpush2.xpose.msra.mxu0 0.0
  %4334 = vmatprep.subr.mxu0 0.0
  %4335 = vmatpush2.xpose.msra.mxu0 0.0
  %4336 = vmatprep.subr.mxu0 0.0
  %4337 = vmatpush2.xpose.msra.mxu0 0.0
  %4338 = vmatprep.subr.mxu0 0.0
  %4339 = vmatpush2.xpose.msra.mxu0 0.0
  %4340 = vmatprep.subr.mxu0 0.0
  %4341 = vmatpush2.xpose.msra.mxu0 0.0
  %4342 = vmatprep.subr.mxu0 0.0
  %4343 = vmatpush2.xpose.msra.mxu0 0.0
  %4344 = vmatprep.subr.mxu0 0.0
  %4345 = vmatpush2.xpose.msra.mxu0 0.0
  %4346 = vmatprep.subr.mxu0 0.0
  %4347 = vmatpush2.xpose.msra.mxu0 0.0
  %4348 = vmatprep.subr.mxu0 0.0
  %4349 = vmatpush2.xpose.msra.mxu0 0.0
  %4350 = vmatprep.subr.mxu0 0.0
  %4351 = vmatpush2.xpose.msra.mxu0 0.0
  %4352 = vmatprep.subr.mxu0 0.0
  %4353 = vmatpush2.xpose.msra.mxu0 0.0
  %4354 = vmatprep.subr.mxu0 0.0
  %4355 = vmatpush2.xpose.msra.mxu0 0.0
  %4356 = vmatprep.subr.mxu0 0.0
  %4357 = vmatpush2.xpose.msra.mxu0 0.0
  %4358 = vmatprep.subr.mxu0 0.0
  %4359 = vmatpush2.xpose.msra.mxu0 0.0
  %4360 = vmatprep.subr.mxu0 0.0
  %4361 = vmatpush2.xpose.msra.mxu0 0.0
  %4362 = vmatprep.subr.mxu0 0.0
  %4363 = vmatpush2.xpose.msra.mxu0 0.0
  %4364 = vmatprep.mubr.f32.mxu0 0.0
  %4365 = vmatmul.mubr.f32.gmra.mxu0 %v4292
  %v4366 = vpop.f32.mrf.mxu0
  %v4367 = vadd.f32 0.0, %v4366
  %v4368 = vpop.f32.mrf.mxu0
  %4369 = vmatprep.mubr.f32.mxu0 0.0
  %4370 = vmatmul.mubr.f32.gmra.mxu0 %v4294
  %v4371 = vpop.f32.mrf.mxu0
  %v4372 = vadd.f32 0.0, %v4371
  %v4373 = vpop.f32.mrf.mxu0
  %4374 = vdwg.mxu0
  %4375 = vrot.lane.b32.xlu0 %v3227, 64
  %v4376 = vpop.permute.xlu0 %4375
  %4377 = vrot.lane.b32.xlu0 %v3229, 64
  %v4378 = vpop.permute.xlu0 %4377
  %v4379 = vsel %vm3334, %v3227, 0
  %v4381 = vsel %vm3334, %v3229, 0
  %v4383 = vsel %vm3334, %v4376, 0
  %v4385 = vsel %vm3334, %v4378, 0
  %4387 = vmatprep.subr.mxu0 0.0
  %4388 = vmatpush1.xpose.msra.mxu0 0.0
  %4389 = vmatprep.subr.mxu0 0.0
  %4390 = vmatpush1.xpose.msra.mxu0 0.0
  %4391 = vmatprep.subr.mxu0 0.0
  %4392 = vmatpush1.xpose.msra.mxu0 0.0
  %4393 = vmatprep.subr.mxu0 0.0
  %4394 = vmatpush1.xpose.msra.mxu0 0.0
  %4395 = vmatprep.subr.mxu0 0.0
  %4396 = vmatpush1.xpose.msra.mxu0 0.0
  %4397 = vmatprep.subr.mxu0 0.0
  %4398 = vmatpush1.xpose.msra.mxu0 0.0
  %4399 = vmatprep.subr.mxu0 0.0
  %4400 = vmatpush1.xpose.msra.mxu0 0.0
  %4401 = vmatprep.subr.mxu0 0.0
  %4402 = vmatpush1.xpose.msra.mxu0 0.0
  %4403 = vmatprep.subr.mxu0 0.0
  %4404 = vmatpush1.xpose.msra.mxu0 0.0
  %4405 = vmatprep.subr.mxu0 0.0
  %4406 = vmatpush1.xpose.msra.mxu0 0.0
  %4407 = vmatprep.subr.mxu0 0.0
  %4408 = vmatpush1.xpose.msra.mxu0 0.0
  %4409 = vmatprep.subr.mxu0 0.0
  %4410 = vmatpush1.xpose.msra.mxu0 0.0
  %4411 = vmatprep.subr.mxu0 0.0
  %4412 = vmatpush1.xpose.msra.mxu0 0.0
  %4413 = vmatprep.subr.mxu0 0.0
  %4414 = vmatpush1.xpose.msra.mxu0 0.0
  %4415 = vmatprep.subr.mxu0 0.0
  %4416 = vmatpush1.xpose.msra.mxu0 %v4385
  %4417 = vmatprep.subr.mxu0 0.0
  %4418 = vmatpush1.xpose.msra.mxu0 %v4383
  %4419 = vmatprep.subr.mxu0 0.0
  %4420 = vmatpush2.xpose.msra.mxu0 0.0
  %4421 = vmatprep.subr.mxu0 0.0
  %4422 = vmatpush2.xpose.msra.mxu0 0.0
  %4423 = vmatprep.subr.mxu0 0.0
  %4424 = vmatpush2.xpose.msra.mxu0 0.0
  %4425 = vmatprep.subr.mxu0 0.0
  %4426 = vmatpush2.xpose.msra.mxu0 0.0
  %4427 = vmatprep.subr.mxu0 0.0
  %4428 = vmatpush2.xpose.msra.mxu0 0.0
  %4429 = vmatprep.subr.mxu0 0.0
  %4430 = vmatpush2.xpose.msra.mxu0 0.0
  %4431 = vmatprep.subr.mxu0 0.0
  %4432 = vmatpush2.xpose.msra.mxu0 0.0
  %4433 = vmatprep.subr.mxu0 0.0
  %4434 = vmatpush2.xpose.msra.mxu0 0.0
  %4435 = vmatprep.subr.mxu0 0.0
  %4436 = vmatpush2.xpose.msra.mxu0 0.0
  %4437 = vmatprep.subr.mxu0 0.0
  %4438 = vmatpush2.xpose.msra.mxu0 0.0
  %4439 = vmatprep.subr.mxu0 0.0
  %4440 = vmatpush2.xpose.msra.mxu0 0.0
  %4441 = vmatprep.subr.mxu0 0.0
  %4442 = vmatpush2.xpose.msra.mxu0 0.0
  %4443 = vmatprep.subr.mxu0 0.0
  %4444 = vmatpush2.xpose.msra.mxu0 0.0
  %4445 = vmatprep.subr.mxu0 0.0
  %4446 = vmatpush2.xpose.msra.mxu0 0.0
  %4447 = vmatprep.subr.mxu0 0.0
  %4448 = vmatpush2.xpose.msra.mxu0 0.0
  %4449 = vmatprep.subr.mxu0 0.0
  %4450 = vmatpush2.xpose.msra.mxu0 0.0
  %4451 = vmatprep.mubr.f32.mxu0 0.0
  %4452 = vmatmul.mubr.f32.gmra.mxu0 %v4379
  %v4453 = vpop.f32.mrf.mxu0
  %v4454 = vadd.f32 0.0, %v4453
  %v4455 = vpop.f32.mrf.mxu0
  %4456 = vmatprep.mubr.f32.mxu0 0.0
  %4457 = vmatmul.mubr.f32.gmra.mxu0 %v4381
  %v4458 = vpop.f32.mrf.mxu0
  %v4459 = vadd.f32 0.0, %v4458
  %v4460 = vpop.f32.mrf.mxu0
  %4461 = vdwg.mxu0
  %4462 = vrot.lane.b32.xlu0 %v3231, 64
  %v4463 = vpop.permute.xlu0 %4462
  %4464 = vrot.lane.b32.xlu0 %v3233, 64
  %v4465 = vpop.permute.xlu0 %4464
  %v4466 = vsel %vm3334, %v3231, 0
  %v4468 = vsel %vm3334, %v3233, 0
  %v4470 = vsel %vm3334, %v4463, 0
  %v4472 = vsel %vm3334, %v4465, 0
  %4474 = vmatprep.subr.mxu0 0.0
  %4475 = vmatpush1.xpose.msra.mxu0 0.0
  %4476 = vmatprep.subr.mxu0 0.0
  %4477 = vmatpush1.xpose.msra.mxu0 0.0
  %4478 = vmatprep.subr.mxu0 0.0
  %4479 = vmatpush1.xpose.msra.mxu0 0.0
  %4480 = vmatprep.subr.mxu0 0.0
  %4481 = vmatpush1.xpose.msra.mxu0 0.0
  %4482 = vmatprep.subr.mxu0 0.0
  %4483 = vmatpush1.xpose.msra.mxu0 0.0
  %4484 = vmatprep.subr.mxu0 0.0
  %4485 = vmatpush1.xpose.msra.mxu0 0.0
  %4486 = vmatprep.subr.mxu0 0.0
  %4487 = vmatpush1.xpose.msra.mxu0 0.0
  %4488 = vmatprep.subr.mxu0 0.0
  %4489 = vmatpush1.xpose.msra.mxu0 0.0
  %4490 = vmatprep.subr.mxu0 0.0
  %4491 = vmatpush1.xpose.msra.mxu0 0.0
  %4492 = vmatprep.subr.mxu0 0.0
  %4493 = vmatpush1.xpose.msra.mxu0 0.0
  %4494 = vmatprep.subr.mxu0 0.0
  %4495 = vmatpush1.xpose.msra.mxu0 0.0
  %4496 = vmatprep.subr.mxu0 0.0
  %4497 = vmatpush1.xpose.msra.mxu0 0.0
  %4498 = vmatprep.subr.mxu0 0.0
  %4499 = vmatpush1.xpose.msra.mxu0 0.0
  %4500 = vmatprep.subr.mxu0 0.0
  %4501 = vmatpush1.xpose.msra.mxu0 0.0
  %4502 = vmatprep.subr.mxu0 0.0
  %4503 = vmatpush1.xpose.msra.mxu0 %v4472
  %4504 = vmatprep.subr.mxu0 0.0
  %4505 = vmatpush1.xpose.msra.mxu0 %v4470
  %4506 = vmatprep.subr.mxu0 0.0
  %4507 = vmatpush2.xpose.msra.mxu0 0.0
  %4508 = vmatprep.subr.mxu0 0.0
  %4509 = vmatpush2.xpose.msra.mxu0 0.0
  %4510 = vmatprep.subr.mxu0 0.0
  %4511 = vmatpush2.xpose.msra.mxu0 0.0
  %4512 = vmatprep.subr.mxu0 0.0
  %4513 = vmatpush2.xpose.msra.mxu0 0.0
  %4514 = vmatprep.subr.mxu0 0.0
  %4515 = vmatpush2.xpose.msra.mxu0 0.0
  %4516 = vmatprep.subr.mxu0 0.0
  %4517 = vmatpush2.xpose.msra.mxu0 0.0
  %4518 = vmatprep.subr.mxu0 0.0
  %4519 = vmatpush2.xpose.msra.mxu0 0.0
  %4520 = vmatprep.subr.mxu0 0.0
  %4521 = vmatpush2.xpose.msra.mxu0 0.0
  %4522 = vmatprep.subr.mxu0 0.0
  %4523 = vmatpush2.xpose.msra.mxu0 0.0
  %4524 = vmatprep.subr.mxu0 0.0
  %4525 = vmatpush2.xpose.msra.mxu0 0.0
  %4526 = vmatprep.subr.mxu0 0.0
  %4527 = vmatpush2.xpose.msra.mxu0 0.0
  %4528 = vmatprep.subr.mxu0 0.0
  %4529 = vmatpush2.xpose.msra.mxu0 0.0
  %4530 = vmatprep.subr.mxu0 0.0
  %4531 = vmatpush2.xpose.msra.mxu0 0.0
  %4532 = vmatprep.subr.mxu0 0.0
  %4533 = vmatpush2.xpose.msra.mxu0 0.0
  %4534 = vmatprep.subr.mxu0 0.0
  %4535 = vmatpush2.xpose.msra.mxu0 0.0
  %4536 = vmatprep.subr.mxu0 0.0
  %4537 = vmatpush2.xpose.msra.mxu0 0.0
  %4538 = vmatprep.mubr.f32.mxu0 0.0
  %4539 = vmatmul.mubr.f32.gmra.mxu0 %v4466
  %v4540 = vpop.f32.mrf.mxu0
  %v4541 = vadd.f32 0.0, %v4540
  %v4542 = vpop.f32.mrf.mxu0
  %4543 = vmatprep.mubr.f32.mxu0 0.0
  %4544 = vmatmul.mubr.f32.gmra.mxu0 %v4468
  %v4545 = vpop.f32.mrf.mxu0
  %v4546 = vadd.f32 0.0, %v4545
  %v4547 = vpop.f32.mrf.mxu0
  %4548 = vdwg.mxu0
  %4549 = vrot.lane.b32.xlu0 %v3235, 64
  %v4550 = vpop.permute.xlu0 %4549
  %4551 = vrot.lane.b32.xlu0 %v3237, 64
  %v4552 = vpop.permute.xlu0 %4551
  %v4553 = vsel %vm3334, %v3235, 0
  %v4555 = vsel %vm3334, %v3237, 0
  %v4557 = vsel %vm3334, %v4550, 0
  %v4559 = vsel %vm3334, %v4552, 0
  %4561 = vmatprep.subr.mxu0 0.0
  %4562 = vmatpush1.xpose.msra.mxu0 0.0
  %4563 = vmatprep.subr.mxu0 0.0
  %4564 = vmatpush1.xpose.msra.mxu0 0.0
  %4565 = vmatprep.subr.mxu0 0.0
  %4566 = vmatpush1.xpose.msra.mxu0 0.0
  %4567 = vmatprep.subr.mxu0 0.0
  %4568 = vmatpush1.xpose.msra.mxu0 0.0
  %4569 = vmatprep.subr.mxu0 0.0
  %4570 = vmatpush1.xpose.msra.mxu0 0.0
  %4571 = vmatprep.subr.mxu0 0.0
  %4572 = vmatpush1.xpose.msra.mxu0 0.0
  %4573 = vmatprep.subr.mxu0 0.0
  %4574 = vmatpush1.xpose.msra.mxu0 0.0
  %4575 = vmatprep.subr.mxu0 0.0
  %4576 = vmatpush1.xpose.msra.mxu0 0.0
  %4577 = vmatprep.subr.mxu0 0.0
  %4578 = vmatpush1.xpose.msra.mxu0 0.0
  %4579 = vmatprep.subr.mxu0 0.0
  %4580 = vmatpush1.xpose.msra.mxu0 0.0
  %4581 = vmatprep.subr.mxu0 0.0
  %4582 = vmatpush1.xpose.msra.mxu0 0.0
  %4583 = vmatprep.subr.mxu0 0.0
  %4584 = vmatpush1.xpose.msra.mxu0 0.0
  %4585 = vmatprep.subr.mxu0 0.0
  %4586 = vmatpush1.xpose.msra.mxu0 0.0
  %4587 = vmatprep.subr.mxu0 0.0
  %4588 = vmatpush1.xpose.msra.mxu0 0.0
  %4589 = vmatprep.subr.mxu0 0.0
  %4590 = vmatpush1.xpose.msra.mxu0 %v4559
  %4591 = vmatprep.subr.mxu0 0.0
  %4592 = vmatpush1.xpose.msra.mxu0 %v4557
  %4593 = vmatprep.subr.mxu0 0.0
  %4594 = vmatpush2.xpose.msra.mxu0 0.0
  %4595 = vmatprep.subr.mxu0 0.0
  %4596 = vmatpush2.xpose.msra.mxu0 0.0
  %4597 = vmatprep.subr.mxu0 0.0
  %4598 = vmatpush2.xpose.msra.mxu0 0.0
  %4599 = vmatprep.subr.mxu0 0.0
  %4600 = vmatpush2.xpose.msra.mxu0 0.0
  %4601 = vmatprep.subr.mxu0 0.0
  %4602 = vmatpush2.xpose.msra.mxu0 0.0
  %4603 = vmatprep.subr.mxu0 0.0
  %4604 = vmatpush2.xpose.msra.mxu0 0.0
  %4605 = vmatprep.subr.mxu0 0.0
  %4606 = vmatpush2.xpose.msra.mxu0 0.0
  %4607 = vmatprep.subr.mxu0 0.0
  %4608 = vmatpush2.xpose.msra.mxu0 0.0
  %4609 = vmatprep.subr.mxu0 0.0
  %4610 = vmatpush2.xpose.msra.mxu0 0.0
  %4611 = vmatprep.subr.mxu0 0.0
  %4612 = vmatpush2.xpose.msra.mxu0 0.0
  %4613 = vmatprep.subr.mxu0 0.0
  %4614 = vmatpush2.xpose.msra.mxu0 0.0
  %4615 = vmatprep.subr.mxu0 0.0
  %4616 = vmatpush2.xpose.msra.mxu0 0.0
  %4617 = vmatprep.subr.mxu0 0.0
  %4618 = vmatpush2.xpose.msra.mxu0 0.0
  %4619 = vmatprep.subr.mxu0 0.0
  %4620 = vmatpush2.xpose.msra.mxu0 0.0
  %4621 = vmatprep.subr.mxu0 0.0
  %4622 = vmatpush2.xpose.msra.mxu0 0.0
  %4623 = vmatprep.subr.mxu0 0.0
  %4624 = vmatpush2.xpose.msra.mxu0 0.0
  %4625 = vmatprep.mubr.f32.mxu0 0.0
  %4626 = vmatmul.mubr.f32.gmra.mxu0 %v4553
  %v4627 = vpop.f32.mrf.mxu0
  %v4628 = vadd.f32 0.0, %v4627
  %v4629 = vpop.f32.mrf.mxu0
  %4630 = vmatprep.mubr.f32.mxu0 0.0
  %4631 = vmatmul.mubr.f32.gmra.mxu0 %v4555
  %v4632 = vpop.f32.mrf.mxu0
  %v4633 = vadd.f32 0.0, %v4632
  %v4634 = vpop.f32.mrf.mxu0
  %4635 = vdwg.mxu0
  %4636 = vrot.lane.b32.xlu0 %v3239, 64
  %v4637 = vpop.permute.xlu0 %4636
  %4638 = vrot.lane.b32.xlu0 %v3241, 64
  %v4639 = vpop.permute.xlu0 %4638
  %v4640 = vsel %vm3334, %v3239, 0
  %v4642 = vsel %vm3334, %v3241, 0
  %v4644 = vsel %vm3334, %v4637, 0
  %v4646 = vsel %vm3334, %v4639, 0
  %4648 = vmatprep.subr.mxu0 0.0
  %4649 = vmatpush1.xpose.msra.mxu0 0.0
  %4650 = vmatprep.subr.mxu0 0.0
  %4651 = vmatpush1.xpose.msra.mxu0 0.0
  %4652 = vmatprep.subr.mxu0 0.0
  %4653 = vmatpush1.xpose.msra.mxu0 0.0
  %4654 = vmatprep.subr.mxu0 0.0
  %4655 = vmatpush1.xpose.msra.mxu0 0.0
  %4656 = vmatprep.subr.mxu0 0.0
  %4657 = vmatpush1.xpose.msra.mxu0 0.0
  %4658 = vmatprep.subr.mxu0 0.0
  %4659 = vmatpush1.xpose.msra.mxu0 0.0
  %4660 = vmatprep.subr.mxu0 0.0
  %4661 = vmatpush1.xpose.msra.mxu0 0.0
  %4662 = vmatprep.subr.mxu0 0.0
  %4663 = vmatpush1.xpose.msra.mxu0 0.0
  %4664 = vmatprep.subr.mxu0 0.0
  %4665 = vmatpush1.xpose.msra.mxu0 0.0
  %4666 = vmatprep.subr.mxu0 0.0
  %4667 = vmatpush1.xpose.msra.mxu0 0.0
  %4668 = vmatprep.subr.mxu0 0.0
  %4669 = vmatpush1.xpose.msra.mxu0 0.0
  %4670 = vmatprep.subr.mxu0 0.0
  %4671 = vmatpush1.xpose.msra.mxu0 0.0
  %4672 = vmatprep.subr.mxu0 0.0
  %4673 = vmatpush1.xpose.msra.mxu0 0.0
  %4674 = vmatprep.subr.mxu0 0.0
  %4675 = vmatpush1.xpose.msra.mxu0 0.0
  %4676 = vmatprep.subr.mxu0 0.0
  %4677 = vmatpush1.xpose.msra.mxu0 %v4646
  %4678 = vmatprep.subr.mxu0 0.0
  %4679 = vmatpush1.xpose.msra.mxu0 %v4644
  %4680 = vmatprep.subr.mxu0 0.0
  %4681 = vmatpush2.xpose.msra.mxu0 0.0
  %4682 = vmatprep.subr.mxu0 0.0
  %4683 = vmatpush2.xpose.msra.mxu0 0.0
  %4684 = vmatprep.subr.mxu0 0.0
  %4685 = vmatpush2.xpose.msra.mxu0 0.0
  %4686 = vmatprep.subr.mxu0 0.0
  %4687 = vmatpush2.xpose.msra.mxu0 0.0
  %4688 = vmatprep.subr.mxu0 0.0
  %4689 = vmatpush2.xpose.msra.mxu0 0.0
  %4690 = vmatprep.subr.mxu0 0.0
  %4691 = vmatpush2.xpose.msra.mxu0 0.0
  %4692 = vmatprep.subr.mxu0 0.0
  %4693 = vmatpush2.xpose.msra.mxu0 0.0
  %4694 = vmatprep.subr.mxu0 0.0
  %4695 = vmatpush2.xpose.msra.mxu0 0.0
  %4696 = vmatprep.subr.mxu0 0.0
  %4697 = vmatpush2.xpose.msra.mxu0 0.0
  %4698 = vmatprep.subr.mxu0 0.0
  %4699 = vmatpush2.xpose.msra.mxu0 0.0
  %4700 = vmatprep.subr.mxu0 0.0
  %4701 = vmatpush2.xpose.msra.mxu0 0.0
  %4702 = vmatprep.subr.mxu0 0.0
  %4703 = vmatpush2.xpose.msra.mxu0 0.0
  %4704 = vmatprep.subr.mxu0 0.0
  %4705 = vmatpush2.xpose.msra.mxu0 0.0
  %4706 = vmatprep.subr.mxu0 0.0
  %4707 = vmatpush2.xpose.msra.mxu0 0.0
  %4708 = vmatprep.subr.mxu0 0.0
  %4709 = vmatpush2.xpose.msra.mxu0 0.0
  %4710 = vmatprep.subr.mxu0 0.0
  %4711 = vmatpush2.xpose.msra.mxu0 0.0
  %4712 = vmatprep.mubr.f32.mxu0 0.0
  %4713 = vmatmul.mubr.f32.gmra.mxu0 %v4640
  %v4714 = vpop.f32.mrf.mxu0
  %v4715 = vadd.f32 0.0, %v4714
  %v4716 = vpop.f32.mrf.mxu0
  %4717 = vmatprep.mubr.f32.mxu0 0.0
  %4718 = vmatmul.mubr.f32.gmra.mxu0 %v4642
  %v4719 = vpop.f32.mrf.mxu0
  %v4720 = vadd.f32 0.0, %v4719
  %v4721 = vpop.f32.mrf.mxu0
  %4722 = vdwg.mxu0
  %v4723 = vmul.f32 %v3410, 0.35355338
  %v4724 = vmul.f32 %v3415, 0.35355338
  %v4725 = vmul.f32 %v3497, 0.35355338
  %v4726 = vmul.f32 %v3502, 0.35355338
  %v4727 = vmul.f32 %v3584, 0.35355338
  %v4728 = vmul.f32 %v3589, 0.35355338
  %v4729 = vmul.f32 %v3671, 0.35355338
  %v4730 = vmul.f32 %v3676, 0.35355338
  %v4731 = vmul.f32 %v3758, 0.35355338
  %v4732 = vmul.f32 %v3763, 0.35355338
  %v4733 = vmul.f32 %v3845, 0.35355338
  %v4734 = vmul.f32 %v3850, 0.35355338
  %v4735 = vmul.f32 %v3932, 0.35355338
  %v4736 = vmul.f32 %v3937, 0.35355338
  %v4737 = vmul.f32 %v4019, 0.35355338
  %v4738 = vmul.f32 %v4024, 0.35355338
  %v4739 = vmul.f32 %v4106, 0.35355338
  %v4740 = vmul.f32 %v4111, 0.35355338
  %v4741 = vmul.f32 %v4193, 0.35355338
  %v4742 = vmul.f32 %v4198, 0.35355338
  %v4743 = vmul.f32 %v4280, 0.35355338
  %v4744 = vmul.f32 %v4285, 0.35355338
  %v4745 = vmul.f32 %v4367, 0.35355338
  %v4746 = vmul.f32 %v4372, 0.35355338
  %v4747 = vmul.f32 %v4454, 0.35355338
  %v4748 = vmul.f32 %v4459, 0.35355338
  %v4749 = vmul.f32 %v4541, 0.35355338
  %v4750 = vmul.f32 %v4546, 0.35355338
  %v4751 = vmul.f32 %v4628, 0.35355338
  %v4752 = vmul.f32 %v4633, 0.35355338
  %v4753 = vmul.f32 %v4715, 0.35355338
  %v4754 = vmul.f32 %v4720, 0.35355338
  %vm4755 = vcmask 130048
  %v4756 = vsel %vm4755, %v4723, -inf
  %4757 = vmax.xlane.f32.xlu0 %v4756
  %v4758 = vpop.xlane.xlu0 %4757
  %v4759 = vsel %vm4755, %v4724, -inf
  %4760 = vmax.xlane.f32.xlu0 %v4759
  %v4761 = vpop.xlane.xlu0 %4760
  %v4762 = vsel %vm4755, %v4725, -inf
  %4763 = vmax.xlane.f32.xlu0 %v4762
  %v4764 = vpop.xlane.xlu0 %4763
  %v4765 = vsel %vm4755, %v4726, -inf
  %4766 = vmax.xlane.f32.xlu0 %v4765
  %v4767 = vpop.xlane.xlu0 %4766
  %v4768 = vsel %vm4755, %v4727, -inf
  %4769 = vmax.xlane.f32.xlu0 %v4768
  %v4770 = vpop.xlane.xlu0 %4769
  %v4771 = vsel %vm4755, %v4728, -inf
  %4772 = vmax.xlane.f32.xlu0 %v4771
  %v4773 = vpop.xlane.xlu0 %4772
  %v4774 = vsel %vm4755, %v4729, -inf
  %4775 = vmax.xlane.f32.xlu0 %v4774
  %v4776 = vpop.xlane.xlu0 %4775
  %v4777 = vsel %vm4755, %v4730, -inf
  %4778 = vmax.xlane.f32.xlu0 %v4777
  %v4779 = vpop.xlane.xlu0 %4778
  %v4780 = vsel %vm4755, %v4731, -inf
  %4781 = vmax.xlane.f32.xlu0 %v4780
  %v4782 = vpop.xlane.xlu0 %4781
  %v4783 = vsel %vm4755, %v4732, -inf
  %4784 = vmax.xlane.f32.xlu0 %v4783
  %v4785 = vpop.xlane.xlu0 %4784
  %v4786 = vsel %vm4755, %v4733, -inf
  %4787 = vmax.xlane.f32.xlu0 %v4786
  %v4788 = vpop.xlane.xlu0 %4787
  %v4789 = vsel %vm4755, %v4734, -inf
  %4790 = vmax.xlane.f32.xlu0 %v4789
  %v4791 = vpop.xlane.xlu0 %4790
  %v4792 = vsel %vm4755, %v4735, -inf
  %4793 = vmax.xlane.f32.xlu0 %v4792
  %v4794 = vpop.xlane.xlu0 %4793
  %v4795 = vsel %vm4755, %v4736, -inf
  %4796 = vmax.xlane.f32.xlu0 %v4795
  %v4797 = vpop.xlane.xlu0 %4796
  %v4798 = vsel %vm4755, %v4737, -inf
  %4799 = vmax.xlane.f32.xlu0 %v4798
  %v4800 = vpop.xlane.xlu0 %4799
  %v4801 = vsel %vm4755, %v4738, -inf
  %4802 = vmax.xlane.f32.xlu0 %v4801
  %v4803 = vpop.xlane.xlu0 %4802
  %v4804 = vsel %vm4755, %v4739, -inf
  %4805 = vmax.xlane.f32.xlu0 %v4804
  %v4806 = vpop.xlane.xlu0 %4805
  %v4807 = vsel %vm4755, %v4740, -inf
  %4808 = vmax.xlane.f32.xlu0 %v4807
  %v4809 = vpop.xlane.xlu0 %4808
  %v4810 = vsel %vm4755, %v4741, -inf
  %4811 = vmax.xlane.f32.xlu0 %v4810
  %v4812 = vpop.xlane.xlu0 %4811
  %v4813 = vsel %vm4755, %v4742, -inf
  %4814 = vmax.xlane.f32.xlu0 %v4813
  %v4815 = vpop.xlane.xlu0 %4814
  %v4816 = vsel %vm4755, %v4743, -inf
  %4817 = vmax.xlane.f32.xlu0 %v4816
  %v4818 = vpop.xlane.xlu0 %4817
  %v4819 = vsel %vm4755, %v4744, -inf
  %4820 = vmax.xlane.f32.xlu0 %v4819
  %v4821 = vpop.xlane.xlu0 %4820
  %v4822 = vsel %vm4755, %v4745, -inf
  %4823 = vmax.xlane.f32.xlu0 %v4822
  %v4824 = vpop.xlane.xlu0 %4823
  %v4825 = vsel %vm4755, %v4746, -inf
  %4826 = vmax.xlane.f32.xlu0 %v4825
  %v4827 = vpop.xlane.xlu0 %4826
  %v4828 = vsel %vm4755, %v4747, -inf
  %4829 = vmax.xlane.f32.xlu0 %v4828
  %v4830 = vpop.xlane.xlu0 %4829
  %v4831 = vsel %vm4755, %v4748, -inf
  %4832 = vmax.xlane.f32.xlu0 %v4831
  %v4833 = vpop.xlane.xlu0 %4832
  %v4834 = vsel %vm4755, %v4749, -inf
  %4835 = vmax.xlane.f32.xlu0 %v4834
  %v4836 = vpop.xlane.xlu0 %4835
  %v4837 = vsel %vm4755, %v4750, -inf
  %4838 = vmax.xlane.f32.xlu0 %v4837
  %v4839 = vpop.xlane.xlu0 %4838
  %v4840 = vsel %vm4755, %v4751, -inf
  %4841 = vmax.xlane.f32.xlu0 %v4840
  %v4842 = vpop.xlane.xlu0 %4841
  %v4843 = vsel %vm4755, %v4752, -inf
  %4844 = vmax.xlane.f32.xlu0 %v4843
  %v4845 = vpop.xlane.xlu0 %4844
  %v4846 = vsel %vm4755, %v4753, -inf
  %4847 = vmax.xlane.f32.xlu0 %v4846
  %v4848 = vpop.xlane.xlu0 %4847
  %v4849 = vsel %vm4755, %v4754, -inf
  %4850 = vmax.xlane.f32.xlu0 %v4849
  %v4851 = vpop.xlane.xlu0 %4850
  %v4852 = vsub.f32 %v4723, %v4758
  %v4853 = vsub.f32 %v4724, %v4761
  %v4854 = vsub.f32 %v4725, %v4764
  %v4855 = vsub.f32 %v4726, %v4767
  %v4856 = vsub.f32 %v4727, %v4770
  %v4857 = vsub.f32 %v4728, %v4773
  %v4858 = vsub.f32 %v4729, %v4776
  %v4859 = vsub.f32 %v4730, %v4779
  %v4860 = vsub.f32 %v4731, %v4782
  %v4861 = vsub.f32 %v4732, %v4785
  %v4862 = vsub.f32 %v4733, %v4788
  %v4863 = vsub.f32 %v4734, %v4791
  %v4864 = vsub.f32 %v4735, %v4794
  %v4865 = vsub.f32 %v4736, %v4797
  %v4866 = vsub.f32 %v4737, %v4800
  %v4867 = vsub.f32 %v4738, %v4803
  %v4868 = vsub.f32 %v4739, %v4806
  %v4869 = vsub.f32 %v4740, %v4809
  %v4870 = vsub.f32 %v4741, %v4812
  %v4871 = vsub.f32 %v4742, %v4815
  %v4872 = vsub.f32 %v4743, %v4818
  %v4873 = vsub.f32 %v4744, %v4821
  %v4874 = vsub.f32 %v4745, %v4824
  %v4875 = vsub.f32 %v4746, %v4827
  %v4876 = vsub.f32 %v4747, %v4830
  %v4877 = vsub.f32 %v4748, %v4833
  %v4878 = vsub.f32 %v4749, %v4836
  %v4879 = vsub.f32 %v4750, %v4839
  %v4880 = vsub.f32 %v4751, %v4842
  %v4881 = vsub.f32 %v4752, %v4845
  %v4882 = vsub.f32 %v4753, %v4848
  %v4883 = vsub.f32 %v4754, %v4851
  %v4884 = vmul.f32 %v4852, 1.442695
  %v4885 = vpow.pop %v4884
  %v4886 = vmul.f32 %v4853, 1.442695
  %v4887 = vpow.pop %v4886
  %v4888 = vmul.f32 %v4854, 1.442695
  %v4889 = vpow.pop %v4888
  %v4890 = vmul.f32 %v4855, 1.442695
  %v4891 = vpow.pop %v4890
  %v4892 = vmul.f32 %v4856, 1.442695
  %v4893 = vpow.pop %v4892
  %v4894 = vmul.f32 %v4857, 1.442695
  %v4895 = vpow.pop %v4894
  %v4896 = vmul.f32 %v4858, 1.442695
  %v4897 = vpow.pop %v4896
  %v4898 = vmul.f32 %v4859, 1.442695
  %v4899 = vpow.pop %v4898
  %v4900 = vmul.f32 %v4860, 1.442695
  %v4901 = vpow.pop %v4900
  %v4902 = vmul.f32 %v4861, 1.442695
  %v4903 = vpow.pop %v4902
  %v4904 = vmul.f32 %v4862, 1.442695
  %v4905 = vpow.pop %v4904
  %v4906 = vmul.f32 %v4863, 1.442695
  %v4907 = vpow.pop %v4906
  %v4908 = vmul.f32 %v4864, 1.442695
  %v4909 = vpow.pop %v4908
  %v4910 = vmul.f32 %v4865, 1.442695
  %v4911 = vpow.pop %v4910
  %v4912 = vmul.f32 %v4866, 1.442695
  %v4913 = vpow.pop %v4912
  %v4914 = vmul.f32 %v4867, 1.442695
  %v4915 = vpow.pop %v4914
  %v4916 = vmul.f32 %v4868, 1.442695
  %v4917 = vpow.pop %v4916
  %v4918 = vmul.f32 %v4869, 1.442695
  %v4919 = vpow.pop %v4918
  %v4920 = vmul.f32 %v4870, 1.442695
  %v4921 = vpow.pop %v4920
  %v4922 = vmul.f32 %v4871, 1.442695
  %v4923 = vpow.pop %v4922
  %v4924 = vmul.f32 %v4872, 1.442695
  %v4925 = vpow.pop %v4924
  %v4926 = vmul.f32 %v4873, 1.442695
  %v4927 = vpow.pop %v4926
  %v4928 = vmul.f32 %v4874, 1.442695
  %v4929 = vpow.pop %v4928
  %v4930 = vmul.f32 %v4875, 1.442695
  %v4931 = vpow.pop %v4930
  %v4932 = vmul.f32 %v4876, 1.442695
  %v4933 = vpow.pop %v4932
  %v4934 = vmul.f32 %v4877, 1.442695
  %v4935 = vpow.pop %v4934
  %v4936 = vmul.f32 %v4878, 1.442695
  %v4937 = vpow.pop %v4936
  %v4938 = vmul.f32 %v4879, 1.442695
  %v4939 = vpow.pop %v4938
  %v4940 = vmul.f32 %v4880, 1.442695
  %v4941 = vpow.pop %v4940
  %v4942 = vmul.f32 %v4881, 1.442695
  %v4943 = vpow.pop %v4942
  %v4944 = vmul.f32 %v4882, 1.442695
  %v4945 = vpow.pop %v4944
  %v4946 = vmul.f32 %v4883, 1.442695
  %v4947 = vpow.pop %v4946
  %v4948 = vsel %vm4755, %v4885, 0.0
  %4949 = vadd.xlane.f32.xlu0 %v4948
  %v4950 = vpop.xlane.xlu0 %4949
  %v4951 = vsel %vm4755, %v4887, 0.0
  %4952 = vadd.xlane.f32.xlu0 %v4951
  %v4953 = vpop.xlane.xlu0 %4952
  %v4954 = vsel %vm4755, %v4889, 0.0
  %4955 = vadd.xlane.f32.xlu0 %v4954
  %v4956 = vpop.xlane.xlu0 %4955
  %v4957 = vsel %vm4755, %v4891, 0.0
  %4958 = vadd.xlane.f32.xlu0 %v4957
  %v4959 = vpop.xlane.xlu0 %4958
  %v4960 = vsel %vm4755, %v4893, 0.0
  %4961 = vadd.xlane.f32.xlu0 %v4960
  %v4962 = vpop.xlane.xlu0 %4961
  %v4963 = vsel %vm4755, %v4895, 0.0
  %4964 = vadd.xlane.f32.xlu0 %v4963
  %v4965 = vpop.xlane.xlu0 %4964
  %v4966 = vsel %vm4755, %v4897, 0.0
  %4967 = vadd.xlane.f32.xlu0 %v4966
  %v4968 = vpop.xlane.xlu0 %4967
  %v4969 = vsel %vm4755, %v4899, 0.0
  %4970 = vadd.xlane.f32.xlu0 %v4969
  %v4971 = vpop.xlane.xlu0 %4970
  %v4972 = vsel %vm4755, %v4901, 0.0
  %4973 = vadd.xlane.f32.xlu0 %v4972
  %v4974 = vpop.xlane.xlu0 %4973
  %v4975 = vsel %vm4755, %v4903, 0.0
  %4976 = vadd.xlane.f32.xlu0 %v4975
  %v4977 = vpop.xlane.xlu0 %4976
  %v4978 = vsel %vm4755, %v4905, 0.0
  %4979 = vadd.xlane.f32.xlu0 %v4978
  %v4980 = vpop.xlane.xlu0 %4979
  %v4981 = vsel %vm4755, %v4907, 0.0
  %4982 = vadd.xlane.f32.xlu0 %v4981
  %v4983 = vpop.xlane.xlu0 %4982
  %v4984 = vsel %vm4755, %v4909, 0.0
  %4985 = vadd.xlane.f32.xlu0 %v4984
  %v4986 = vpop.xlane.xlu0 %4985
  %v4987 = vsel %vm4755, %v4911, 0.0
  %4988 = vadd.xlane.f32.xlu0 %v4987
  %v4989 = vpop.xlane.xlu0 %4988
  %v4990 = vsel %vm4755, %v4913, 0.0
  %4991 = vadd.xlane.f32.xlu0 %v4990
  %v4992 = vpop.xlane.xlu0 %4991
  %v4993 = vsel %vm4755, %v4915, 0.0
  %4994 = vadd.xlane.f32.xlu0 %v4993
  %v4995 = vpop.xlane.xlu0 %4994
  %v4996 = vsel %vm4755, %v4917, 0.0
  %4997 = vadd.xlane.f32.xlu0 %v4996
  %v4998 = vpop.xlane.xlu0 %4997
  %v4999 = vsel %vm4755, %v4919, 0.0
  %5000 = vadd.xlane.f32.xlu0 %v4999
  %v5001 = vpop.xlane.xlu0 %5000
  %v5002 = vsel %vm4755, %v4921, 0.0
  %5003 = vadd.xlane.f32.xlu0 %v5002
  %v5004 = vpop.xlane.xlu0 %5003
  %v5005 = vsel %vm4755, %v4923, 0.0
  %5006 = vadd.xlane.f32.xlu0 %v5005
  %v5007 = vpop.xlane.xlu0 %5006
  %v5008 = vsel %vm4755, %v4925, 0.0
  %5009 = vadd.xlane.f32.xlu0 %v5008
  %v5010 = vpop.xlane.xlu0 %5009
  %v5011 = vsel %vm4755, %v4927, 0.0
  %5012 = vadd.xlane.f32.xlu0 %v5011
  %v5013 = vpop.xlane.xlu0 %5012
  %v5014 = vsel %vm4755, %v4929, 0.0
  %5015 = vadd.xlane.f32.xlu0 %v5014
  %v5016 = vpop.xlane.xlu0 %5015
  %v5017 = vsel %vm4755, %v4931, 0.0
  %5018 = vadd.xlane.f32.xlu0 %v5017
  %v5019 = vpop.xlane.xlu0 %5018
  %v5020 = vsel %vm4755, %v4933, 0.0
  %5021 = vadd.xlane.f32.xlu0 %v5020
  %v5022 = vpop.xlane.xlu0 %5021
  %v5023 = vsel %vm4755, %v4935, 0.0
  %5024 = vadd.xlane.f32.xlu0 %v5023
  %v5025 = vpop.xlane.xlu0 %5024
  %v5026 = vsel %vm4755, %v4937, 0.0
  %5027 = vadd.xlane.f32.xlu0 %v5026
  %v5028 = vpop.xlane.xlu0 %5027
  %v5029 = vsel %vm4755, %v4939, 0.0
  %5030 = vadd.xlane.f32.xlu0 %v5029
  %v5031 = vpop.xlane.xlu0 %5030
  %v5032 = vsel %vm4755, %v4941, 0.0
  %5033 = vadd.xlane.f32.xlu0 %v5032
  %v5034 = vpop.xlane.xlu0 %5033
  %v5035 = vsel %vm4755, %v4943, 0.0
  %5036 = vadd.xlane.f32.xlu0 %v5035
  %v5037 = vpop.xlane.xlu0 %5036
  %v5038 = vsel %vm4755, %v4945, 0.0
  %5039 = vadd.xlane.f32.xlu0 %v5038
  %v5040 = vpop.xlane.xlu0 %5039
  %v5041 = vsel %vm4755, %v4947, 0.0
  %5042 = vadd.xlane.f32.xlu0 %v5041
  %v5043 = vpop.xlane.xlu0 %5042
  %v5044 = vrcp.pop %v4950
  %v5045 = vrcp.pop %v4953
  %v5046 = vrcp.pop %v4956
  %v5047 = vrcp.pop %v4959
  %v5048 = vrcp.pop %v4962
  %v5049 = vrcp.pop %v4965
  %v5050 = vrcp.pop %v4968
  %v5051 = vrcp.pop %v4971
  %v5052 = vrcp.pop %v4974
  %v5053 = vrcp.pop %v4977
  %v5054 = vrcp.pop %v4980
  %v5055 = vrcp.pop %v4983
  %v5056 = vrcp.pop %v4986
  %v5057 = vrcp.pop %v4989
  %v5058 = vrcp.pop %v4992
  %v5059 = vrcp.pop %v4995
  %v5060 = vrcp.pop %v4998
  %v5061 = vrcp.pop %v5001
  %v5062 = vrcp.pop %v5004
  %v5063 = vrcp.pop %v5007
  %v5064 = vrcp.pop %v5010
  %v5065 = vrcp.pop %v5013
  %v5066 = vrcp.pop %v5016
  %v5067 = vrcp.pop %v5019
  %v5068 = vrcp.pop %v5022
  %v5069 = vrcp.pop %v5025
  %v5070 = vrcp.pop %v5028
  %v5071 = vrcp.pop %v5031
  %v5072 = vrcp.pop %v5034
  %v5073 = vrcp.pop %v5037
  %v5074 = vrcp.pop %v5040
  %v5075 = vrcp.pop %v5043
  %v5076 = vmul.f32 %v4885, %v5044
  %v5077 = vmul.f32 %v4887, %v5045
  %v5078 = vmul.f32 %v4889, %v5046
  %v5079 = vmul.f32 %v4891, %v5047
  %v5080 = vmul.f32 %v4893, %v5048
  %v5081 = vmul.f32 %v4895, %v5049
  %v5082 = vmul.f32 %v4897, %v5050
  %v5083 = vmul.f32 %v4899, %v5051
  %v5084 = vmul.f32 %v4901, %v5052
  %v5085 = vmul.f32 %v4903, %v5053
  %v5086 = vmul.f32 %v4905, %v5054
  %v5087 = vmul.f32 %v4907, %v5055
  %v5088 = vmul.f32 %v4909, %v5056
  %v5089 = vmul.f32 %v4911, %v5057
  %v5090 = vmul.f32 %v4913, %v5058
  %v5091 = vmul.f32 %v4915, %v5059
  %v5092 = vmul.f32 %v4917, %v5060
  %v5093 = vmul.f32 %v4919, %v5061
  %v5094 = vmul.f32 %v4921, %v5062
  %v5095 = vmul.f32 %v4923, %v5063
  %v5096 = vmul.f32 %v4925, %v5064
  %v5097 = vmul.f32 %v4927, %v5065
  %v5098 = vmul.f32 %v4929, %v5066
  %v5099 = vmul.f32 %v4931, %v5067
  %v5100 = vmul.f32 %v4933, %v5068
  %v5101 = vmul.f32 %v4935, %v5069
  %v5102 = vmul.f32 %v4937, %v5070
  %v5103 = vmul.f32 %v4939, %v5071
  %v5104 = vmul.f32 %v4941, %v5072
  %v5105 = vmul.f32 %v4943, %v5073
  %v5106 = vmul.f32 %v4945, %v5074
  %v5107 = vmul.f32 %v4947, %v5075
  %v5109 = vsel %vm4755, %v5076, 0
  %v5112 = vsel %vm4755, %v5077, 0
  %5114 = vmatprep.subr.mxu0 0.0
  %5115 = vmatpush1.msra.mxu0 0.0
  %5116 = vmatprep.subr.mxu0 0.0
  %5117 = vmatpush1.msra.mxu0 0.0
  %5118 = vmatprep.subr.mxu0 0.0
  %5119 = vmatpush1.msra.mxu0 0.0
  %5120 = vmatprep.subr.mxu0 0.0
  %5121 = vmatpush1.msra.mxu0 0.0
  %5122 = vmatprep.subr.mxu0 0.0
  %5123 = vmatpush1.msra.mxu0 0.0
  %5124 = vmatprep.subr.mxu0 0.0
  %5125 = vmatpush1.msra.mxu0 0.0
  %5126 = vmatprep.subr.mxu0 0.0
  %5127 = vmatpush1.msra.mxu0 0.0
  %5128 = vmatprep.subr.mxu0 0.0
  %5129 = vmatpush1.msra.mxu0 0.0
  %5130 = vmatprep.subr.mxu0 0.0
  %5131 = vmatpush1.msra.mxu0 0.0
  %5132 = vmatprep.subr.mxu0 0.0
  %5133 = vmatpush1.msra.mxu0 0.0
  %5134 = vmatprep.subr.mxu0 0.0
  %5135 = vmatpush1.msra.mxu0 0.0
  %5136 = vmatprep.subr.mxu0 0.0
  %5137 = vmatpush1.msra.mxu0 0.0
  %5138 = vmatprep.subr.mxu0 0.0
  %5139 = vmatpush1.msra.mxu0 0.0
  %5140 = vmatprep.subr.mxu0 0.0
  %5141 = vmatpush1.msra.mxu0 0.0
  %5142 = vmatprep.subr.mxu0 0.0
  %5143 = vmatpush1.msra.mxu0 %v3168
  %5144 = vmatprep.subr.mxu0 0.0
  %5145 = vmatpush1.msra.mxu0 %v3162
  %5146 = vmatprep.subr.mxu0 0.0
  %5147 = vmatpush2.msra.mxu0 0.0
  %5148 = vmatprep.subr.mxu0 0.0
  %5149 = vmatpush2.msra.mxu0 0.0
  %5150 = vmatprep.subr.mxu0 0.0
  %5151 = vmatpush2.msra.mxu0 0.0
  %5152 = vmatprep.subr.mxu0 0.0
  %5153 = vmatpush2.msra.mxu0 0.0
  %5154 = vmatprep.subr.mxu0 0.0
  %5155 = vmatpush2.msra.mxu0 0.0
  %5156 = vmatprep.subr.mxu0 0.0
  %5157 = vmatpush2.msra.mxu0 0.0
  %5158 = vmatprep.subr.mxu0 0.0
  %5159 = vmatpush2.msra.mxu0 0.0
  %5160 = vmatprep.subr.mxu0 0.0
  %5161 = vmatpush2.msra.mxu0 0.0
  %5162 = vmatprep.subr.mxu0 0.0
  %5163 = vmatpush2.msra.mxu0 0.0
  %5164 = vmatprep.subr.mxu0 0.0
  %5165 = vmatpush2.msra.mxu0 0.0
  %5166 = vmatprep.subr.mxu0 0.0
  %5167 = vmatpush2.msra.mxu0 0.0
  %5168 = vmatprep.subr.mxu0 0.0
  %5169 = vmatpush2.msra.mxu0 0.0
  %5170 = vmatprep.subr.mxu0 0.0
  %5171 = vmatpush2.msra.mxu0 0.0
  %5172 = vmatprep.subr.mxu0 0.0
  %5173 = vmatpush2.msra.mxu0 0.0
  %5174 = vmatprep.subr.mxu0 0.0
  %5175 = vmatpush2.msra.mxu0 0.0
  %5176 = vmatprep.subr.mxu0 0.0
  %5177 = vmatpush2.msra.mxu0 0.0
  %5178 = vmatprep.mubr.f32.mxu0 0.0
  %5179 = vmatmul.mubr.f32.gmra.mxu0 %v5109
  %v5180 = vpop.f32.mrf.mxu0
  %v5181 = vadd.f32 0.0, %v5180
  %v5182 = vpop.f32.mrf.mxu0
  %5183 = vmatprep.mubr.f32.mxu0 0.0
  %5184 = vmatmul.mubr.f32.gmra.mxu0 %v5112
  %v5185 = vpop.f32.mrf.mxu0
  %v5186 = vadd.f32 0.0, %v5185
  %v5187 = vpop.f32.mrf.mxu0
  %5188 = vdwg.mxu0
  %v5190 = vsel %vm4755, %v5078, 0
  %v5193 = vsel %vm4755, %v5079, 0
  %5195 = vmatprep.subr.mxu0 0.0
  %5196 = vmatpush1.msra.mxu0 0.0
  %5197 = vmatprep.subr.mxu0 0.0
  %5198 = vmatpush1.msra.mxu0 0.0
  %5199 = vmatprep.subr.mxu0 0.0
  %5200 = vmatpush1.msra.mxu0 0.0
  %5201 = vmatprep.subr.mxu0 0.0
  %5202 = vmatpush1.msra.mxu0 0.0
  %5203 = vmatprep.subr.mxu0 0.0
  %5204 = vmatpush1.msra.mxu0 0.0
  %5205 = vmatprep.subr.mxu0 0.0
  %5206 = vmatpush1.msra.mxu0 0.0
  %5207 = vmatprep.subr.mxu0 0.0
  %5208 = vmatpush1.msra.mxu0 0.0
  %5209 = vmatprep.subr.mxu0 0.0
  %5210 = vmatpush1.msra.mxu0 0.0
  %5211 = vmatprep.subr.mxu0 0.0
  %5212 = vmatpush1.msra.mxu0 0.0
  %5213 = vmatprep.subr.mxu0 0.0
  %5214 = vmatpush1.msra.mxu0 0.0
  %5215 = vmatprep.subr.mxu0 0.0
  %5216 = vmatpush1.msra.mxu0 0.0
  %5217 = vmatprep.subr.mxu0 0.0
  %5218 = vmatpush1.msra.mxu0 0.0
  %5219 = vmatprep.subr.mxu0 0.0
  %5220 = vmatpush1.msra.mxu0 0.0
  %5221 = vmatprep.subr.mxu0 0.0
  %5222 = vmatpush1.msra.mxu0 0.0
  %5223 = vmatprep.subr.mxu0 0.0
  %5224 = vmatpush1.msra.mxu0 %v3180
  %5225 = vmatprep.subr.mxu0 0.0
  %5226 = vmatpush1.msra.mxu0 %v3174
  %5227 = vmatprep.subr.mxu0 0.0
  %5228 = vmatpush2.msra.mxu0 0.0
  %5229 = vmatprep.subr.mxu0 0.0
  %5230 = vmatpush2.msra.mxu0 0.0
  %5231 = vmatprep.subr.mxu0 0.0
  %5232 = vmatpush2.msra.mxu0 0.0
  %5233 = vmatprep.subr.mxu0 0.0
  %5234 = vmatpush2.msra.mxu0 0.0
  %5235 = vmatprep.subr.mxu0 0.0
  %5236 = vmatpush2.msra.mxu0 0.0
  %5237 = vmatprep.subr.mxu0 0.0
  %5238 = vmatpush2.msra.mxu0 0.0
  %5239 = vmatprep.subr.mxu0 0.0
  %5240 = vmatpush2.msra.mxu0 0.0
  %5241 = vmatprep.subr.mxu0 0.0
  %5242 = vmatpush2.msra.mxu0 0.0
  %5243 = vmatprep.subr.mxu0 0.0
  %5244 = vmatpush2.msra.mxu0 0.0
  %5245 = vmatprep.subr.mxu0 0.0
  %5246 = vmatpush2.msra.mxu0 0.0
  %5247 = vmatprep.subr.mxu0 0.0
  %5248 = vmatpush2.msra.mxu0 0.0
  %5249 = vmatprep.subr.mxu0 0.0
  %5250 = vmatpush2.msra.mxu0 0.0
  %5251 = vmatprep.subr.mxu0 0.0
  %5252 = vmatpush2.msra.mxu0 0.0
  %5253 = vmatprep.subr.mxu0 0.0
  %5254 = vmatpush2.msra.mxu0 0.0
  %5255 = vmatprep.subr.mxu0 0.0
  %5256 = vmatpush2.msra.mxu0 0.0
  %5257 = vmatprep.subr.mxu0 0.0
  %5258 = vmatpush2.msra.mxu0 0.0
  %5259 = vmatprep.mubr.f32.mxu0 0.0
  %5260 = vmatmul.mubr.f32.gmra.mxu0 %v5190
  %v5261 = vpop.f32.mrf.mxu0
  %v5262 = vadd.f32 0.0, %v5261
  %v5263 = vpop.f32.mrf.mxu0
  %5264 = vmatprep.mubr.f32.mxu0 0.0
  %5265 = vmatmul.mubr.f32.gmra.mxu0 %v5193
  %v5266 = vpop.f32.mrf.mxu0
  %v5267 = vadd.f32 0.0, %v5266
  %v5268 = vpop.f32.mrf.mxu0
  %5269 = vdwg.mxu0
  %v5271 = vsel %vm4755, %v5080, 0
  %v5274 = vsel %vm4755, %v5081, 0
  %5276 = vmatprep.subr.mxu0 0.0
  %5277 = vmatpush1.msra.mxu0 0.0
  %5278 = vmatprep.subr.mxu0 0.0
  %5279 = vmatpush1.msra.mxu0 0.0
  %5280 = vmatprep.subr.mxu0 0.0
  %5281 = vmatpush1.msra.mxu0 0.0
  %5282 = vmatprep.subr.mxu0 0.0
  %5283 = vmatpush1.msra.mxu0 0.0
  %5284 = vmatprep.subr.mxu0 0.0
  %5285 = vmatpush1.msra.mxu0 0.0
  %5286 = vmatprep.subr.mxu0 0.0
  %5287 = vmatpush1.msra.mxu0 0.0
  %5288 = vmatprep.subr.mxu0 0.0
  %5289 = vmatpush1.msra.mxu0 0.0
  %5290 = vmatprep.subr.mxu0 0.0
  %5291 = vmatpush1.msra.mxu0 0.0
  %5292 = vmatprep.subr.mxu0 0.0
  %5293 = vmatpush1.msra.mxu0 0.0
  %5294 = vmatprep.subr.mxu0 0.0
  %5295 = vmatpush1.msra.mxu0 0.0
  %5296 = vmatprep.subr.mxu0 0.0
  %5297 = vmatpush1.msra.mxu0 0.0
  %5298 = vmatprep.subr.mxu0 0.0
  %5299 = vmatpush1.msra.mxu0 0.0
  %5300 = vmatprep.subr.mxu0 0.0
  %5301 = vmatpush1.msra.mxu0 0.0
  %5302 = vmatprep.subr.mxu0 0.0
  %5303 = vmatpush1.msra.mxu0 0.0
  %5304 = vmatprep.subr.mxu0 0.0
  %5305 = vmatpush1.msra.mxu0 %v3249
  %5306 = vmatprep.subr.mxu0 0.0
  %5307 = vmatpush1.msra.mxu0 %v3247
  %5308 = vmatprep.subr.mxu0 0.0
  %5309 = vmatpush2.msra.mxu0 0.0
  %5310 = vmatprep.subr.mxu0 0.0
  %5311 = vmatpush2.msra.mxu0 0.0
  %5312 = vmatprep.subr.mxu0 0.0
  %5313 = vmatpush2.msra.mxu0 0.0
  %5314 = vmatprep.subr.mxu0 0.0
  %5315 = vmatpush2.msra.mxu0 0.0
  %5316 = vmatprep.subr.mxu0 0.0
  %5317 = vmatpush2.msra.mxu0 0.0
  %5318 = vmatprep.subr.mxu0 0.0
  %5319 = vmatpush2.msra.mxu0 0.0
  %5320 = vmatprep.subr.mxu0 0.0
  %5321 = vmatpush2.msra.mxu0 0.0
  %5322 = vmatprep.subr.mxu0 0.0
  %5323 = vmatpush2.msra.mxu0 0.0
  %5324 = vmatprep.subr.mxu0 0.0
  %5325 = vmatpush2.msra.mxu0 0.0
  %5326 = vmatprep.subr.mxu0 0.0
  %5327 = vmatpush2.msra.mxu0 0.0
  %5328 = vmatprep.subr.mxu0 0.0
  %5329 = vmatpush2.msra.mxu0 0.0
  %5330 = vmatprep.subr.mxu0 0.0
  %5331 = vmatpush2.msra.mxu0 0.0
  %5332 = vmatprep.subr.mxu0 0.0
  %5333 = vmatpush2.msra.mxu0 0.0
  %5334 = vmatprep.subr.mxu0 0.0
  %5335 = vmatpush2.msra.mxu0 0.0
  %5336 = vmatprep.subr.mxu0 0.0
  %5337 = vmatpush2.msra.mxu0 0.0
  %5338 = vmatprep.subr.mxu0 0.0
  %5339 = vmatpush2.msra.mxu0 0.0
  %5340 = vmatprep.mubr.f32.mxu0 0.0
  %5341 = vmatmul.mubr.f32.gmra.mxu0 %v5271
  %v5342 = vpop.f32.mrf.mxu0
  %v5343 = vadd.f32 0.0, %v5342
  %v5344 = vpop.f32.mrf.mxu0
  %5345 = vmatprep.mubr.f32.mxu0 0.0
  %5346 = vmatmul.mubr.f32.gmra.mxu0 %v5274
  %v5347 = vpop.f32.mrf.mxu0
  %v5348 = vadd.f32 0.0, %v5347
  %v5349 = vpop.f32.mrf.mxu0
  %5350 = vdwg.mxu0
  %v5352 = vsel %vm4755, %v5082, 0
  %v5355 = vsel %vm4755, %v5083, 0
  %5357 = vmatprep.subr.mxu0 0.0
  %5358 = vmatpush1.msra.mxu0 0.0
  %5359 = vmatprep.subr.mxu0 0.0
  %5360 = vmatpush1.msra.mxu0 0.0
  %5361 = vmatprep.subr.mxu0 0.0
  %5362 = vmatpush1.msra.mxu0 0.0
  %5363 = vmatprep.subr.mxu0 0.0
  %5364 = vmatpush1.msra.mxu0 0.0
  %5365 = vmatprep.subr.mxu0 0.0
  %5366 = vmatpush1.msra.mxu0 0.0
  %5367 = vmatprep.subr.mxu0 0.0
  %5368 = vmatpush1.msra.mxu0 0.0
  %5369 = vmatprep.subr.mxu0 0.0
  %5370 = vmatpush1.msra.mxu0 0.0
  %5371 = vmatprep.subr.mxu0 0.0
  %5372 = vmatpush1.msra.mxu0 0.0
  %5373 = vmatprep.subr.mxu0 0.0
  %5374 = vmatpush1.msra.mxu0 0.0
  %5375 = vmatprep.subr.mxu0 0.0
  %5376 = vmatpush1.msra.mxu0 0.0
  %5377 = vmatprep.subr.mxu0 0.0
  %5378 = vmatpush1.msra.mxu0 0.0
  %5379 = vmatprep.subr.mxu0 0.0
  %5380 = vmatpush1.msra.mxu0 0.0
  %5381 = vmatprep.subr.mxu0 0.0
  %5382 = vmatpush1.msra.mxu0 0.0
  %5383 = vmatprep.subr.mxu0 0.0
  %5384 = vmatpush1.msra.mxu0 0.0
  %5385 = vmatprep.subr.mxu0 0.0
  %5386 = vmatpush1.msra.mxu0 %v3253
  %5387 = vmatprep.subr.mxu0 0.0
  %5388 = vmatpush1.msra.mxu0 %v3251
  %5389 = vmatprep.subr.mxu0 0.0
  %5390 = vmatpush2.msra.mxu0 0.0
  %5391 = vmatprep.subr.mxu0 0.0
  %5392 = vmatpush2.msra.mxu0 0.0
  %5393 = vmatprep.subr.mxu0 0.0
  %5394 = vmatpush2.msra.mxu0 0.0
  %5395 = vmatprep.subr.mxu0 0.0
  %5396 = vmatpush2.msra.mxu0 0.0
  %5397 = vmatprep.subr.mxu0 0.0
  %5398 = vmatpush2.msra.mxu0 0.0
  %5399 = vmatprep.subr.mxu0 0.0
  %5400 = vmatpush2.msra.mxu0 0.0
  %5401 = vmatprep.subr.mxu0 0.0
  %5402 = vmatpush2.msra.mxu0 0.0
  %5403 = vmatprep.subr.mxu0 0.0
  %5404 = vmatpush2.msra.mxu0 0.0
  %5405 = vmatprep.subr.mxu0 0.0
  %5406 = vmatpush2.msra.mxu0 0.0
  %5407 = vmatprep.subr.mxu0 0.0
  %5408 = vmatpush2.msra.mxu0 0.0
  %5409 = vmatprep.subr.mxu0 0.0
  %5410 = vmatpush2.msra.mxu0 0.0
  %5411 = vmatprep.subr.mxu0 0.0
  %5412 = vmatpush2.msra.mxu0 0.0
  %5413 = vmatprep.subr.mxu0 0.0
  %5414 = vmatpush2.msra.mxu0 0.0
  %5415 = vmatprep.subr.mxu0 0.0
  %5416 = vmatpush2.msra.mxu0 0.0
  %5417 = vmatprep.subr.mxu0 0.0
  %5418 = vmatpush2.msra.mxu0 0.0
  %5419 = vmatprep.subr.mxu0 0.0
  %5420 = vmatpush2.msra.mxu0 0.0
  %5421 = vmatprep.mubr.f32.mxu0 0.0
  %5422 = vmatmul.mubr.f32.gmra.mxu0 %v5352
  %v5423 = vpop.f32.mrf.mxu0
  %v5424 = vadd.f32 0.0, %v5423
  %v5425 = vpop.f32.mrf.mxu0
  %5426 = vmatprep.mubr.f32.mxu0 0.0
  %5427 = vmatmul.mubr.f32.gmra.mxu0 %v5355
  %v5428 = vpop.f32.mrf.mxu0
  %v5429 = vadd.f32 0.0, %v5428
  %v5430 = vpop.f32.mrf.mxu0
  %5431 = vdwg.mxu0
  %v5433 = vsel %vm4755, %v5084, 0
  %v5436 = vsel %vm4755, %v5085, 0
  %5438 = vmatprep.subr.mxu0 0.0
  %5439 = vmatpush1.msra.mxu0 0.0
  %5440 = vmatprep.subr.mxu0 0.0
  %5441 = vmatpush1.msra.mxu0 0.0
  %5442 = vmatprep.subr.mxu0 0.0
  %5443 = vmatpush1.msra.mxu0 0.0
  %5444 = vmatprep.subr.mxu0 0.0
  %5445 = vmatpush1.msra.mxu0 0.0
  %5446 = vmatprep.subr.mxu0 0.0
  %5447 = vmatpush1.msra.mxu0 0.0
  %5448 = vmatprep.subr.mxu0 0.0
  %5449 = vmatpush1.msra.mxu0 0.0
  %5450 = vmatprep.subr.mxu0 0.0
  %5451 = vmatpush1.msra.mxu0 0.0
  %5452 = vmatprep.subr.mxu0 0.0
  %5453 = vmatpush1.msra.mxu0 0.0
  %5454 = vmatprep.subr.mxu0 0.0
  %5455 = vmatpush1.msra.mxu0 0.0
  %5456 = vmatprep.subr.mxu0 0.0
  %5457 = vmatpush1.msra.mxu0 0.0
  %5458 = vmatprep.subr.mxu0 0.0
  %5459 = vmatpush1.msra.mxu0 0.0
  %5460 = vmatprep.subr.mxu0 0.0
  %5461 = vmatpush1.msra.mxu0 0.0
  %5462 = vmatprep.subr.mxu0 0.0
  %5463 = vmatpush1.msra.mxu0 0.0
  %5464 = vmatprep.subr.mxu0 0.0
  %5465 = vmatpush1.msra.mxu0 0.0
  %5466 = vmatprep.subr.mxu0 0.0
  %5467 = vmatpush1.msra.mxu0 %v3261
  %5468 = vmatprep.subr.mxu0 0.0
  %5469 = vmatpush1.msra.mxu0 %v3259
  %5470 = vmatprep.subr.mxu0 0.0
  %5471 = vmatpush2.msra.mxu0 0.0
  %5472 = vmatprep.subr.mxu0 0.0
  %5473 = vmatpush2.msra.mxu0 0.0
  %5474 = vmatprep.subr.mxu0 0.0
  %5475 = vmatpush2.msra.mxu0 0.0
  %5476 = vmatprep.subr.mxu0 0.0
  %5477 = vmatpush2.msra.mxu0 0.0
  %5478 = vmatprep.subr.mxu0 0.0
  %5479 = vmatpush2.msra.mxu0 0.0
  %5480 = vmatprep.subr.mxu0 0.0
  %5481 = vmatpush2.msra.mxu0 0.0
  %5482 = vmatprep.subr.mxu0 0.0
  %5483 = vmatpush2.msra.mxu0 0.0
  %5484 = vmatprep.subr.mxu0 0.0
  %5485 = vmatpush2.msra.mxu0 0.0
  %5486 = vmatprep.subr.mxu0 0.0
  %5487 = vmatpush2.msra.mxu0 0.0
  %5488 = vmatprep.subr.mxu0 0.0
  %5489 = vmatpush2.msra.mxu0 0.0
  %5490 = vmatprep.subr.mxu0 0.0
  %5491 = vmatpush2.msra.mxu0 0.0
  %5492 = vmatprep.subr.mxu0 0.0
  %5493 = vmatpush2.msra.mxu0 0.0
  %5494 = vmatprep.subr.mxu0 0.0
  %5495 = vmatpush2.msra.mxu0 0.0
  %5496 = vmatprep.subr.mxu0 0.0
  %5497 = vmatpush2.msra.mxu0 0.0
  %5498 = vmatprep.subr.mxu0 0.0
  %5499 = vmatpush2.msra.mxu0 0.0
  %5500 = vmatprep.subr.mxu0 0.0
  %5501 = vmatpush2.msra.mxu0 0.0
  %5502 = vmatprep.mubr.f32.mxu0 0.0
  %5503 = vmatmul.mubr.f32.gmra.mxu0 %v5433
  %v5504 = vpop.f32.mrf.mxu0
  %v5505 = vadd.f32 0.0, %v5504
  %v5506 = vpop.f32.mrf.mxu0
  %5507 = vmatprep.mubr.f32.mxu0 0.0
  %5508 = vmatmul.mubr.f32.gmra.mxu0 %v5436
  %v5509 = vpop.f32.mrf.mxu0
  %v5510 = vadd.f32 0.0, %v5509
  %v5511 = vpop.f32.mrf.mxu0
  %5512 = vdwg.mxu0
  %v5514 = vsel %vm4755, %v5086, 0
  %v5517 = vsel %vm4755, %v5087, 0
  %5519 = vmatprep.subr.mxu0 0.0
  %5520 = vmatpush1.msra.mxu0 0.0
  %5521 = vmatprep.subr.mxu0 0.0
  %5522 = vmatpush1.msra.mxu0 0.0
  %5523 = vmatprep.subr.mxu0 0.0
  %5524 = vmatpush1.msra.mxu0 0.0
  %5525 = vmatprep.subr.mxu0 0.0
  %5526 = vmatpush1.msra.mxu0 0.0
  %5527 = vmatprep.subr.mxu0 0.0
  %5528 = vmatpush1.msra.mxu0 0.0
  %5529 = vmatprep.subr.mxu0 0.0
  %5530 = vmatpush1.msra.mxu0 0.0
  %5531 = vmatprep.subr.mxu0 0.0
  %5532 = vmatpush1.msra.mxu0 0.0
  %5533 = vmatprep.subr.mxu0 0.0
  %5534 = vmatpush1.msra.mxu0 0.0
  %5535 = vmatprep.subr.mxu0 0.0
  %5536 = vmatpush1.msra.mxu0 0.0
  %5537 = vmatprep.subr.mxu0 0.0
  %5538 = vmatpush1.msra.mxu0 0.0
  %5539 = vmatprep.subr.mxu0 0.0
  %5540 = vmatpush1.msra.mxu0 0.0
  %5541 = vmatprep.subr.mxu0 0.0
  %5542 = vmatpush1.msra.mxu0 0.0
  %5543 = vmatprep.subr.mxu0 0.0
  %5544 = vmatpush1.msra.mxu0 0.0
  %5545 = vmatprep.subr.mxu0 0.0
  %5546 = vmatpush1.msra.mxu0 0.0
  %5547 = vmatprep.subr.mxu0 0.0
  %5548 = vmatpush1.msra.mxu0 %v3265
  %5549 = vmatprep.subr.mxu0 0.0
  %5550 = vmatpush1.msra.mxu0 %v3263
  %5551 = vmatprep.subr.mxu0 0.0
  %5552 = vmatpush2.msra.mxu0 0.0
  %5553 = vmatprep.subr.mxu0 0.0
  %5554 = vmatpush2.msra.mxu0 0.0
  %5555 = vmatprep.subr.mxu0 0.0
  %5556 = vmatpush2.msra.mxu0 0.0
  %5557 = vmatprep.subr.mxu0 0.0
  %5558 = vmatpush2.msra.mxu0 0.0
  %5559 = vmatprep.subr.mxu0 0.0
  %5560 = vmatpush2.msra.mxu0 0.0
  %5561 = vmatprep.subr.mxu0 0.0
  %5562 = vmatpush2.msra.mxu0 0.0
  %5563 = vmatprep.subr.mxu0 0.0
  %5564 = vmatpush2.msra.mxu0 0.0
  %5565 = vmatprep.subr.mxu0 0.0
  %5566 = vmatpush2.msra.mxu0 0.0
  %5567 = vmatprep.subr.mxu0 0.0
  %5568 = vmatpush2.msra.mxu0 0.0
  %5569 = vmatprep.subr.mxu0 0.0
  %5570 = vmatpush2.msra.mxu0 0.0
  %5571 = vmatprep.subr.mxu0 0.0
  %5572 = vmatpush2.msra.mxu0 0.0
  %5573 = vmatprep.subr.mxu0 0.0
  %5574 = vmatpush2.msra.mxu0 0.0
  %5575 = vmatprep.subr.mxu0 0.0
  %5576 = vmatpush2.msra.mxu0 0.0
  %5577 = vmatprep.subr.mxu0 0.0
  %5578 = vmatpush2.msra.mxu0 0.0
  %5579 = vmatprep.subr.mxu0 0.0
  %5580 = vmatpush2.msra.mxu0 0.0
  %5581 = vmatprep.subr.mxu0 0.0
  %5582 = vmatpush2.msra.mxu0 0.0
  %5583 = vmatprep.mubr.f32.mxu0 0.0
  %5584 = vmatmul.mubr.f32.gmra.mxu0 %v5514
  %v5585 = vpop.f32.mrf.mxu0
  %v5586 = vadd.f32 0.0, %v5585
  %v5587 = vpop.f32.mrf.mxu0
  %5588 = vmatprep.mubr.f32.mxu0 0.0
  %5589 = vmatmul.mubr.f32.gmra.mxu0 %v5517
  %v5590 = vpop.f32.mrf.mxu0
  %v5591 = vadd.f32 0.0, %v5590
  %v5592 = vpop.f32.mrf.mxu0
  %5593 = vdwg.mxu0
  %v5595 = vsel %vm4755, %v5088, 0
  %v5598 = vsel %vm4755, %v5089, 0
  %5600 = vmatprep.subr.mxu0 0.0
  %5601 = vmatpush1.msra.mxu0 0.0
  %5602 = vmatprep.subr.mxu0 0.0
  %5603 = vmatpush1.msra.mxu0 0.0
  %5604 = vmatprep.subr.mxu0 0.0
  %5605 = vmatpush1.msra.mxu0 0.0
  %5606 = vmatprep.subr.mxu0 0.0
  %5607 = vmatpush1.msra.mxu0 0.0
  %5608 = vmatprep.subr.mxu0 0.0
  %5609 = vmatpush1.msra.mxu0 0.0
  %5610 = vmatprep.subr.mxu0 0.0
  %5611 = vmatpush1.msra.mxu0 0.0
  %5612 = vmatprep.subr.mxu0 0.0
  %5613 = vmatpush1.msra.mxu0 0.0
  %5614 = vmatprep.subr.mxu0 0.0
  %5615 = vmatpush1.msra.mxu0 0.0
  %5616 = vmatprep.subr.mxu0 0.0
  %5617 = vmatpush1.msra.mxu0 0.0
  %5618 = vmatprep.subr.mxu0 0.0
  %5619 = vmatpush1.msra.mxu0 0.0
  %5620 = vmatprep.subr.mxu0 0.0
  %5621 = vmatpush1.msra.mxu0 0.0
  %5622 = vmatprep.subr.mxu0 0.0
  %5623 = vmatpush1.msra.mxu0 0.0
  %5624 = vmatprep.subr.mxu0 0.0
  %5625 = vmatpush1.msra.mxu0 0.0
  %5626 = vmatprep.subr.mxu0 0.0
  %5627 = vmatpush1.msra.mxu0 0.0
  %5628 = vmatprep.subr.mxu0 0.0
  %5629 = vmatpush1.msra.mxu0 %v3273
  %5630 = vmatprep.subr.mxu0 0.0
  %5631 = vmatpush1.msra.mxu0 %v3271
  %5632 = vmatprep.subr.mxu0 0.0
  %5633 = vmatpush2.msra.mxu0 0.0
  %5634 = vmatprep.subr.mxu0 0.0
  %5635 = vmatpush2.msra.mxu0 0.0
  %5636 = vmatprep.subr.mxu0 0.0
  %5637 = vmatpush2.msra.mxu0 0.0
  %5638 = vmatprep.subr.mxu0 0.0
  %5639 = vmatpush2.msra.mxu0 0.0
  %5640 = vmatprep.subr.mxu0 0.0
  %5641 = vmatpush2.msra.mxu0 0.0
  %5642 = vmatprep.subr.mxu0 0.0
  %5643 = vmatpush2.msra.mxu0 0.0
  %5644 = vmatprep.subr.mxu0 0.0
  %5645 = vmatpush2.msra.mxu0 0.0
  %5646 = vmatprep.subr.mxu0 0.0
  %5647 = vmatpush2.msra.mxu0 0.0
  %5648 = vmatprep.subr.mxu0 0.0
  %5649 = vmatpush2.msra.mxu0 0.0
  %5650 = vmatprep.subr.mxu0 0.0
  %5651 = vmatpush2.msra.mxu0 0.0
  %5652 = vmatprep.subr.mxu0 0.0
  %5653 = vmatpush2.msra.mxu0 0.0
  %5654 = vmatprep.subr.mxu0 0.0
  %5655 = vmatpush2.msra.mxu0 0.0
  %5656 = vmatprep.subr.mxu0 0.0
  %5657 = vmatpush2.msra.mxu0 0.0
  %5658 = vmatprep.subr.mxu0 0.0
  %5659 = vmatpush2.msra.mxu0 0.0
  %5660 = vmatprep.subr.mxu0 0.0
  %5661 = vmatpush2.msra.mxu0 0.0
  %5662 = vmatprep.subr.mxu0 0.0
  %5663 = vmatpush2.msra.mxu0 0.0
  %5664 = vmatprep.mubr.f32.mxu0 0.0
  %5665 = vmatmul.mubr.f32.gmra.mxu0 %v5595
  %v5666 = vpop.f32.mrf.mxu0
  %v5667 = vadd.f32 0.0, %v5666
  %v5668 = vpop.f32.mrf.mxu0
  %5669 = vmatprep.mubr.f32.mxu0 0.0
  %5670 = vmatmul.mubr.f32.gmra.mxu0 %v5598
  %v5671 = vpop.f32.mrf.mxu0
  %v5672 = vadd.f32 0.0, %v5671
  %v5673 = vpop.f32.mrf.mxu0
  %5674 = vdwg.mxu0
  %v5676 = vsel %vm4755, %v5090, 0
  %v5679 = vsel %vm4755, %v5091, 0
  %5681 = vmatprep.subr.mxu0 0.0
  %5682 = vmatpush1.msra.mxu0 0.0
  %5683 = vmatprep.subr.mxu0 0.0
  %5684 = vmatpush1.msra.mxu0 0.0
  %5685 = vmatprep.subr.mxu0 0.0
  %5686 = vmatpush1.msra.mxu0 0.0
  %5687 = vmatprep.subr.mxu0 0.0
  %5688 = vmatpush1.msra.mxu0 0.0
  %5689 = vmatprep.subr.mxu0 0.0
  %5690 = vmatpush1.msra.mxu0 0.0
  %5691 = vmatprep.subr.mxu0 0.0
  %5692 = vmatpush1.msra.mxu0 0.0
  %5693 = vmatprep.subr.mxu0 0.0
  %5694 = vmatpush1.msra.mxu0 0.0
  %5695 = vmatprep.subr.mxu0 0.0
  %5696 = vmatpush1.msra.mxu0 0.0
  %5697 = vmatprep.subr.mxu0 0.0
  %5698 = vmatpush1.msra.mxu0 0.0
  %5699 = vmatprep.subr.mxu0 0.0
  %5700 = vmatpush1.msra.mxu0 0.0
  %5701 = vmatprep.subr.mxu0 0.0
  %5702 = vmatpush1.msra.mxu0 0.0
  %5703 = vmatprep.subr.mxu0 0.0
  %5704 = vmatpush1.msra.mxu0 0.0
  %5705 = vmatprep.subr.mxu0 0.0
  %5706 = vmatpush1.msra.mxu0 0.0
  %5707 = vmatprep.subr.mxu0 0.0
  %5708 = vmatpush1.msra.mxu0 0.0
  %5709 = vmatprep.subr.mxu0 0.0
  %5710 = vmatpush1.msra.mxu0 %v3277
  %5711 = vmatprep.subr.mxu0 0.0
  %5712 = vmatpush1.msra.mxu0 %v3275
  %5713 = vmatprep.subr.mxu0 0.0
  %5714 = vmatpush2.msra.mxu0 0.0
  %5715 = vmatprep.subr.mxu0 0.0
  %5716 = vmatpush2.msra.mxu0 0.0
  %5717 = vmatprep.subr.mxu0 0.0
  %5718 = vmatpush2.msra.mxu0 0.0
  %5719 = vmatprep.subr.mxu0 0.0
  %5720 = vmatpush2.msra.mxu0 0.0
  %5721 = vmatprep.subr.mxu0 0.0
  %5722 = vmatpush2.msra.mxu0 0.0
  %5723 = vmatprep.subr.mxu0 0.0
  %5724 = vmatpush2.msra.mxu0 0.0
  %5725 = vmatprep.subr.mxu0 0.0
  %5726 = vmatpush2.msra.mxu0 0.0
  %5727 = vmatprep.subr.mxu0 0.0
  %5728 = vmatpush2.msra.mxu0 0.0
  %5729 = vmatprep.subr.mxu0 0.0
  %5730 = vmatpush2.msra.mxu0 0.0
  %5731 = vmatprep.subr.mxu0 0.0
  %5732 = vmatpush2.msra.mxu0 0.0
  %5733 = vmatprep.subr.mxu0 0.0
  %5734 = vmatpush2.msra.mxu0 0.0
  %5735 = vmatprep.subr.mxu0 0.0
  %5736 = vmatpush2.msra.mxu0 0.0
  %5737 = vmatprep.subr.mxu0 0.0
  %5738 = vmatpush2.msra.mxu0 0.0
  %5739 = vmatprep.subr.mxu0 0.0
  %5740 = vmatpush2.msra.mxu0 0.0
  %5741 = vmatprep.subr.mxu0 0.0
  %5742 = vmatpush2.msra.mxu0 0.0
  %5743 = vmatprep.subr.mxu0 0.0
  %5744 = vmatpush2.msra.mxu0 0.0
  %5745 = vmatprep.mubr.f32.mxu0 0.0
  %5746 = vmatmul.mubr.f32.gmra.mxu0 %v5676
  %v5747 = vpop.f32.mrf.mxu0
  %v5748 = vadd.f32 0.0, %v5747
  %v5749 = vpop.f32.mrf.mxu0
  %5750 = vmatprep.mubr.f32.mxu0 0.0
  %5751 = vmatmul.mubr.f32.gmra.mxu0 %v5679
  %v5752 = vpop.f32.mrf.mxu0
  %v5753 = vadd.f32 0.0, %v5752
  %v5754 = vpop.f32.mrf.mxu0
  %5755 = vdwg.mxu0
  %v5757 = vsel %vm4755, %v5092, 0
  %v5760 = vsel %vm4755, %v5093, 0
  %5762 = vmatprep.subr.mxu0 0.0
  %5763 = vmatpush1.msra.mxu0 0.0
  %5764 = vmatprep.subr.mxu0 0.0
  %5765 = vmatpush1.msra.mxu0 0.0
  %5766 = vmatprep.subr.mxu0 0.0
  %5767 = vmatpush1.msra.mxu0 0.0
  %5768 = vmatprep.subr.mxu0 0.0
  %5769 = vmatpush1.msra.mxu0 0.0
  %5770 = vmatprep.subr.mxu0 0.0
  %5771 = vmatpush1.msra.mxu0 0.0
  %5772 = vmatprep.subr.mxu0 0.0
  %5773 = vmatpush1.msra.mxu0 0.0
  %5774 = vmatprep.subr.mxu0 0.0
  %5775 = vmatpush1.msra.mxu0 0.0
  %5776 = vmatprep.subr.mxu0 0.0
  %5777 = vmatpush1.msra.mxu0 0.0
  %5778 = vmatprep.subr.mxu0 0.0
  %5779 = vmatpush1.msra.mxu0 0.0
  %5780 = vmatprep.subr.mxu0 0.0
  %5781 = vmatpush1.msra.mxu0 0.0
  %5782 = vmatprep.subr.mxu0 0.0
  %5783 = vmatpush1.msra.mxu0 0.0
  %5784 = vmatprep.subr.mxu0 0.0
  %5785 = vmatpush1.msra.mxu0 0.0
  %5786 = vmatprep.subr.mxu0 0.0
  %5787 = vmatpush1.msra.mxu0 0.0
  %5788 = vmatprep.subr.mxu0 0.0
  %5789 = vmatpush1.msra.mxu0 0.0
  %5790 = vmatprep.subr.mxu0 0.0
  %5791 = vmatpush1.msra.mxu0 %v3285
  %5792 = vmatprep.subr.mxu0 0.0
  %5793 = vmatpush1.msra.mxu0 %v3283
  %5794 = vmatprep.subr.mxu0 0.0
  %5795 = vmatpush2.msra.mxu0 0.0
  %5796 = vmatprep.subr.mxu0 0.0
  %5797 = vmatpush2.msra.mxu0 0.0
  %5798 = vmatprep.subr.mxu0 0.0
  %5799 = vmatpush2.msra.mxu0 0.0
  %5800 = vmatprep.subr.mxu0 0.0
  %5801 = vmatpush2.msra.mxu0 0.0
  %5802 = vmatprep.subr.mxu0 0.0
  %5803 = vmatpush2.msra.mxu0 0.0
  %5804 = vmatprep.subr.mxu0 0.0
  %5805 = vmatpush2.msra.mxu0 0.0
  %5806 = vmatprep.subr.mxu0 0.0
  %5807 = vmatpush2.msra.mxu0 0.0
  %5808 = vmatprep.subr.mxu0 0.0
  %5809 = vmatpush2.msra.mxu0 0.0
  %5810 = vmatprep.subr.mxu0 0.0
  %5811 = vmatpush2.msra.mxu0 0.0
  %5812 = vmatprep.subr.mxu0 0.0
  %5813 = vmatpush2.msra.mxu0 0.0
  %5814 = vmatprep.subr.mxu0 0.0
  %5815 = vmatpush2.msra.mxu0 0.0
  %5816 = vmatprep.subr.mxu0 0.0
  %5817 = vmatpush2.msra.mxu0 0.0
  %5818 = vmatprep.subr.mxu0 0.0
  %5819 = vmatpush2.msra.mxu0 0.0
  %5820 = vmatprep.subr.mxu0 0.0
  %5821 = vmatpush2.msra.mxu0 0.0
  %5822 = vmatprep.subr.mxu0 0.0
  %5823 = vmatpush2.msra.mxu0 0.0
  %5824 = vmatprep.subr.mxu0 0.0
  %5825 = vmatpush2.msra.mxu0 0.0
  %5826 = vmatprep.mubr.f32.mxu0 0.0
  %5827 = vmatmul.mubr.f32.gmra.mxu0 %v5757
  %v5828 = vpop.f32.mrf.mxu0
  %v5829 = vadd.f32 0.0, %v5828
  %v5830 = vpop.f32.mrf.mxu0
  %5831 = vmatprep.mubr.f32.mxu0 0.0
  %5832 = vmatmul.mubr.f32.gmra.mxu0 %v5760
  %v5833 = vpop.f32.mrf.mxu0
  %v5834 = vadd.f32 0.0, %v5833
  %v5835 = vpop.f32.mrf.mxu0
  %5836 = vdwg.mxu0
  %v5838 = vsel %vm4755, %v5094, 0
  %v5841 = vsel %vm4755, %v5095, 0
  %5843 = vmatprep.subr.mxu0 0.0
  %5844 = vmatpush1.msra.mxu0 0.0
  %5845 = vmatprep.subr.mxu0 0.0
  %5846 = vmatpush1.msra.mxu0 0.0
  %5847 = vmatprep.subr.mxu0 0.0
  %5848 = vmatpush1.msra.mxu0 0.0
  %5849 = vmatprep.subr.mxu0 0.0
  %5850 = vmatpush1.msra.mxu0 0.0
  %5851 = vmatprep.subr.mxu0 0.0
  %5852 = vmatpush1.msra.mxu0 0.0
  %5853 = vmatprep.subr.mxu0 0.0
  %5854 = vmatpush1.msra.mxu0 0.0
  %5855 = vmatprep.subr.mxu0 0.0
  %5856 = vmatpush1.msra.mxu0 0.0
  %5857 = vmatprep.subr.mxu0 0.0
  %5858 = vmatpush1.msra.mxu0 0.0
  %5859 = vmatprep.subr.mxu0 0.0
  %5860 = vmatpush1.msra.mxu0 0.0
  %5861 = vmatprep.subr.mxu0 0.0
  %5862 = vmatpush1.msra.mxu0 0.0
  %5863 = vmatprep.subr.mxu0 0.0
  %5864 = vmatpush1.msra.mxu0 0.0
  %5865 = vmatprep.subr.mxu0 0.0
  %5866 = vmatpush1.msra.mxu0 0.0
  %5867 = vmatprep.subr.mxu0 0.0
  %5868 = vmatpush1.msra.mxu0 0.0
  %5869 = vmatprep.subr.mxu0 0.0
  %5870 = vmatpush1.msra.mxu0 0.0
  %5871 = vmatprep.subr.mxu0 0.0
  %5872 = vmatpush1.msra.mxu0 %v3289
  %5873 = vmatprep.subr.mxu0 0.0
  %5874 = vmatpush1.msra.mxu0 %v3287
  %5875 = vmatprep.subr.mxu0 0.0
  %5876 = vmatpush2.msra.mxu0 0.0
  %5877 = vmatprep.subr.mxu0 0.0
  %5878 = vmatpush2.msra.mxu0 0.0
  %5879 = vmatprep.subr.mxu0 0.0
  %5880 = vmatpush2.msra.mxu0 0.0
  %5881 = vmatprep.subr.mxu0 0.0
  %5882 = vmatpush2.msra.mxu0 0.0
  %5883 = vmatprep.subr.mxu0 0.0
  %5884 = vmatpush2.msra.mxu0 0.0
  %5885 = vmatprep.subr.mxu0 0.0
  %5886 = vmatpush2.msra.mxu0 0.0
  %5887 = vmatprep.subr.mxu0 0.0
  %5888 = vmatpush2.msra.mxu0 0.0
  %5889 = vmatprep.subr.mxu0 0.0
  %5890 = vmatpush2.msra.mxu0 0.0
  %5891 = vmatprep.subr.mxu0 0.0
  %5892 = vmatpush2.msra.mxu0 0.0
  %5893 = vmatprep.subr.mxu0 0.0
  %5894 = vmatpush2.msra.mxu0 0.0
  %5895 = vmatprep.subr.mxu0 0.0
  %5896 = vmatpush2.msra.mxu0 0.0
  %5897 = vmatprep.subr.mxu0 0.0
  %5898 = vmatpush2.msra.mxu0 0.0
  %5899 = vmatprep.subr.mxu0 0.0
  %5900 = vmatpush2.msra.mxu0 0.0
  %5901 = vmatprep.subr.mxu0 0.0
  %5902 = vmatpush2.msra.mxu0 0.0
  %5903 = vmatprep.subr.mxu0 0.0
  %5904 = vmatpush2.msra.mxu0 0.0
  %5905 = vmatprep.subr.mxu0 0.0
  %5906 = vmatpush2.msra.mxu0 0.0
  %5907 = vmatprep.mubr.f32.mxu0 0.0
  %5908 = vmatmul.mubr.f32.gmra.mxu0 %v5838
  %v5909 = vpop.f32.mrf.mxu0
  %v5910 = vadd.f32 0.0, %v5909
  %v5911 = vpop.f32.mrf.mxu0
  %5912 = vmatprep.mubr.f32.mxu0 0.0
  %5913 = vmatmul.mubr.f32.gmra.mxu0 %v5841
  %v5914 = vpop.f32.mrf.mxu0
  %v5915 = vadd.f32 0.0, %v5914
  %v5916 = vpop.f32.mrf.mxu0
  %5917 = vdwg.mxu0
  %v5919 = vsel %vm4755, %v5096, 0
  %v5922 = vsel %vm4755, %v5097, 0
  %5924 = vmatprep.subr.mxu0 0.0
  %5925 = vmatpush1.msra.mxu0 0.0
  %5926 = vmatprep.subr.mxu0 0.0
  %5927 = vmatpush1.msra.mxu0 0.0
  %5928 = vmatprep.subr.mxu0 0.0
  %5929 = vmatpush1.msra.mxu0 0.0
  %5930 = vmatprep.subr.mxu0 0.0
  %5931 = vmatpush1.msra.mxu0 0.0
  %5932 = vmatprep.subr.mxu0 0.0
  %5933 = vmatpush1.msra.mxu0 0.0
  %5934 = vmatprep.subr.mxu0 0.0
  %5935 = vmatpush1.msra.mxu0 0.0
  %5936 = vmatprep.subr.mxu0 0.0
  %5937 = vmatpush1.msra.mxu0 0.0
  %5938 = vmatprep.subr.mxu0 0.0
  %5939 = vmatpush1.msra.mxu0 0.0
  %5940 = vmatprep.subr.mxu0 0.0
  %5941 = vmatpush1.msra.mxu0 0.0
  %5942 = vmatprep.subr.mxu0 0.0
  %5943 = vmatpush1.msra.mxu0 0.0
  %5944 = vmatprep.subr.mxu0 0.0
  %5945 = vmatpush1.msra.mxu0 0.0
  %5946 = vmatprep.subr.mxu0 0.0
  %5947 = vmatpush1.msra.mxu0 0.0
  %5948 = vmatprep.subr.mxu0 0.0
  %5949 = vmatpush1.msra.mxu0 0.0
  %5950 = vmatprep.subr.mxu0 0.0
  %5951 = vmatpush1.msra.mxu0 0.0
  %5952 = vmatprep.subr.mxu0 0.0
  %5953 = vmatpush1.msra.mxu0 %v3297
  %5954 = vmatprep.subr.mxu0 0.0
  %5955 = vmatpush1.msra.mxu0 %v3295
  %5956 = vmatprep.subr.mxu0 0.0
  %5957 = vmatpush2.msra.mxu0 0.0
  %5958 = vmatprep.subr.mxu0 0.0
  %5959 = vmatpush2.msra.mxu0 0.0
  %5960 = vmatprep.subr.mxu0 0.0
  %5961 = vmatpush2.msra.mxu0 0.0
  %5962 = vmatprep.subr.mxu0 0.0
  %5963 = vmatpush2.msra.mxu0 0.0
  %5964 = vmatprep.subr.mxu0 0.0
  %5965 = vmatpush2.msra.mxu0 0.0
  %5966 = vmatprep.subr.mxu0 0.0
  %5967 = vmatpush2.msra.mxu0 0.0
  %5968 = vmatprep.subr.mxu0 0.0
  %5969 = vmatpush2.msra.mxu0 0.0
  %5970 = vmatprep.subr.mxu0 0.0
  %5971 = vmatpush2.msra.mxu0 0.0
  %5972 = vmatprep.subr.mxu0 0.0
  %5973 = vmatpush2.msra.mxu0 0.0
  %5974 = vmatprep.subr.mxu0 0.0
  %5975 = vmatpush2.msra.mxu0 0.0
  %5976 = vmatprep.subr.mxu0 0.0
  %5977 = vmatpush2.msra.mxu0 0.0
  %5978 = vmatprep.subr.mxu0 0.0
  %5979 = vmatpush2.msra.mxu0 0.0
  %5980 = vmatprep.subr.mxu0 0.0
  %5981 = vmatpush2.msra.mxu0 0.0
  %5982 = vmatprep.subr.mxu0 0.0
  %5983 = vmatpush2.msra.mxu0 0.0
  %5984 = vmatprep.subr.mxu0 0.0
  %5985 = vmatpush2.msra.mxu0 0.0
  %5986 = vmatprep.subr.mxu0 0.0
  %5987 = vmatpush2.msra.mxu0 0.0
  %5988 = vmatprep.mubr.f32.mxu0 0.0
  %5989 = vmatmul.mubr.f32.gmra.mxu0 %v5919
  %v5990 = vpop.f32.mrf.mxu0
  %v5991 = vadd.f32 0.0, %v5990
  %v5992 = vpop.f32.mrf.mxu0
  %5993 = vmatprep.mubr.f32.mxu0 0.0
  %5994 = vmatmul.mubr.f32.gmra.mxu0 %v5922
  %v5995 = vpop.f32.mrf.mxu0
  %v5996 = vadd.f32 0.0, %v5995
  %v5997 = vpop.f32.mrf.mxu0
  %5998 = vdwg.mxu0
  %v6000 = vsel %vm4755, %v5098, 0
  %v6003 = vsel %vm4755, %v5099, 0
  %6005 = vmatprep.subr.mxu0 0.0
  %6006 = vmatpush1.msra.mxu0 0.0
  %6007 = vmatprep.subr.mxu0 0.0
  %6008 = vmatpush1.msra.mxu0 0.0
  %6009 = vmatprep.subr.mxu0 0.0
  %6010 = vmatpush1.msra.mxu0 0.0
  %6011 = vmatprep.subr.mxu0 0.0
  %6012 = vmatpush1.msra.mxu0 0.0
  %6013 = vmatprep.subr.mxu0 0.0
  %6014 = vmatpush1.msra.mxu0 0.0
  %6015 = vmatprep.subr.mxu0 0.0
  %6016 = vmatpush1.msra.mxu0 0.0
  %6017 = vmatprep.subr.mxu0 0.0
  %6018 = vmatpush1.msra.mxu0 0.0
  %6019 = vmatprep.subr.mxu0 0.0
  %6020 = vmatpush1.msra.mxu0 0.0
  %6021 = vmatprep.subr.mxu0 0.0
  %6022 = vmatpush1.msra.mxu0 0.0
  %6023 = vmatprep.subr.mxu0 0.0
  %6024 = vmatpush1.msra.mxu0 0.0
  %6025 = vmatprep.subr.mxu0 0.0
  %6026 = vmatpush1.msra.mxu0 0.0
  %6027 = vmatprep.subr.mxu0 0.0
  %6028 = vmatpush1.msra.mxu0 0.0
  %6029 = vmatprep.subr.mxu0 0.0
  %6030 = vmatpush1.msra.mxu0 0.0
  %6031 = vmatprep.subr.mxu0 0.0
  %6032 = vmatpush1.msra.mxu0 0.0
  %6033 = vmatprep.subr.mxu0 0.0
  %6034 = vmatpush1.msra.mxu0 %v3301
  %6035 = vmatprep.subr.mxu0 0.0
  %6036 = vmatpush1.msra.mxu0 %v3299
  %6037 = vmatprep.subr.mxu0 0.0
  %6038 = vmatpush2.msra.mxu0 0.0
  %6039 = vmatprep.subr.mxu0 0.0
  %6040 = vmatpush2.msra.mxu0 0.0
  %6041 = vmatprep.subr.mxu0 0.0
  %6042 = vmatpush2.msra.mxu0 0.0
  %6043 = vmatprep.subr.mxu0 0.0
  %6044 = vmatpush2.msra.mxu0 0.0
  %6045 = vmatprep.subr.mxu0 0.0
  %6046 = vmatpush2.msra.mxu0 0.0
  %6047 = vmatprep.subr.mxu0 0.0
  %6048 = vmatpush2.msra.mxu0 0.0
  %6049 = vmatprep.subr.mxu0 0.0
  %6050 = vmatpush2.msra.mxu0 0.0
  %6051 = vmatprep.subr.mxu0 0.0
  %6052 = vmatpush2.msra.mxu0 0.0
  %6053 = vmatprep.subr.mxu0 0.0
  %6054 = vmatpush2.msra.mxu0 0.0
  %6055 = vmatprep.subr.mxu0 0.0
  %6056 = vmatpush2.msra.mxu0 0.0
  %6057 = vmatprep.subr.mxu0 0.0
  %6058 = vmatpush2.msra.mxu0 0.0
  %6059 = vmatprep.subr.mxu0 0.0
  %6060 = vmatpush2.msra.mxu0 0.0
  %6061 = vmatprep.subr.mxu0 0.0
  %6062 = vmatpush2.msra.mxu0 0.0
  %6063 = vmatprep.subr.mxu0 0.0
  %6064 = vmatpush2.msra.mxu0 0.0
  %6065 = vmatprep.subr.mxu0 0.0
  %6066 = vmatpush2.msra.mxu0 0.0
  %6067 = vmatprep.subr.mxu0 0.0
  %6068 = vmatpush2.msra.mxu0 0.0
  %6069 = vmatprep.mubr.f32.mxu0 0.0
  %6070 = vmatmul.mubr.f32.gmra.mxu0 %v6000
  %v6071 = vpop.f32.mrf.mxu0
  %v6072 = vadd.f32 0.0, %v6071
  %v6073 = vpop.f32.mrf.mxu0
  %6074 = vmatprep.mubr.f32.mxu0 0.0
  %6075 = vmatmul.mubr.f32.gmra.mxu0 %v6003
  %v6076 = vpop.f32.mrf.mxu0
  %v6077 = vadd.f32 0.0, %v6076
  %v6078 = vpop.f32.mrf.mxu0
  %6079 = vdwg.mxu0
  %v6081 = vsel %vm4755, %v5100, 0
  %v6084 = vsel %vm4755, %v5101, 0
  %6086 = vmatprep.subr.mxu0 0.0
  %6087 = vmatpush1.msra.mxu0 0.0
  %6088 = vmatprep.subr.mxu0 0.0
  %6089 = vmatpush1.msra.mxu0 0.0
  %6090 = vmatprep.subr.mxu0 0.0
  %6091 = vmatpush1.msra.mxu0 0.0
  %6092 = vmatprep.subr.mxu0 0.0
  %6093 = vmatpush1.msra.mxu0 0.0
  %6094 = vmatprep.subr.mxu0 0.0
  %6095 = vmatpush1.msra.mxu0 0.0
  %6096 = vmatprep.subr.mxu0 0.0
  %6097 = vmatpush1.msra.mxu0 0.0
  %6098 = vmatprep.subr.mxu0 0.0
  %6099 = vmatpush1.msra.mxu0 0.0
  %6100 = vmatprep.subr.mxu0 0.0
  %6101 = vmatpush1.msra.mxu0 0.0
  %6102 = vmatprep.subr.mxu0 0.0
  %6103 = vmatpush1.msra.mxu0 0.0
  %6104 = vmatprep.subr.mxu0 0.0
  %6105 = vmatpush1.msra.mxu0 0.0
  %6106 = vmatprep.subr.mxu0 0.0
  %6107 = vmatpush1.msra.mxu0 0.0
  %6108 = vmatprep.subr.mxu0 0.0
  %6109 = vmatpush1.msra.mxu0 0.0
  %6110 = vmatprep.subr.mxu0 0.0
  %6111 = vmatpush1.msra.mxu0 0.0
  %6112 = vmatprep.subr.mxu0 0.0
  %6113 = vmatpush1.msra.mxu0 0.0
  %6114 = vmatprep.subr.mxu0 0.0
  %6115 = vmatpush1.msra.mxu0 %v3309
  %6116 = vmatprep.subr.mxu0 0.0
  %6117 = vmatpush1.msra.mxu0 %v3307
  %6118 = vmatprep.subr.mxu0 0.0
  %6119 = vmatpush2.msra.mxu0 0.0
  %6120 = vmatprep.subr.mxu0 0.0
  %6121 = vmatpush2.msra.mxu0 0.0
  %6122 = vmatprep.subr.mxu0 0.0
  %6123 = vmatpush2.msra.mxu0 0.0
  %6124 = vmatprep.subr.mxu0 0.0
  %6125 = vmatpush2.msra.mxu0 0.0
  %6126 = vmatprep.subr.mxu0 0.0
  %6127 = vmatpush2.msra.mxu0 0.0
  %6128 = vmatprep.subr.mxu0 0.0
  %6129 = vmatpush2.msra.mxu0 0.0
  %6130 = vmatprep.subr.mxu0 0.0
  %6131 = vmatpush2.msra.mxu0 0.0
  %6132 = vmatprep.subr.mxu0 0.0
  %6133 = vmatpush2.msra.mxu0 0.0
  %6134 = vmatprep.subr.mxu0 0.0
  %6135 = vmatpush2.msra.mxu0 0.0
  %6136 = vmatprep.subr.mxu0 0.0
  %6137 = vmatpush2.msra.mxu0 0.0
  %6138 = vmatprep.subr.mxu0 0.0
  %6139 = vmatpush2.msra.mxu0 0.0
  %6140 = vmatprep.subr.mxu0 0.0
  %6141 = vmatpush2.msra.mxu0 0.0
  %6142 = vmatprep.subr.mxu0 0.0
  %6143 = vmatpush2.msra.mxu0 0.0
  %6144 = vmatprep.subr.mxu0 0.0
  %6145 = vmatpush2.msra.mxu0 0.0
  %6146 = vmatprep.subr.mxu0 0.0
  %6147 = vmatpush2.msra.mxu0 0.0
  %6148 = vmatprep.subr.mxu0 0.0
  %6149 = vmatpush2.msra.mxu0 0.0
  %6150 = vmatprep.mubr.f32.mxu0 0.0
  %6151 = vmatmul.mubr.f32.gmra.mxu0 %v6081
  %v6152 = vpop.f32.mrf.mxu0
  %v6153 = vadd.f32 0.0, %v6152
  %v6154 = vpop.f32.mrf.mxu0
  %6155 = vmatprep.mubr.f32.mxu0 0.0
  %6156 = vmatmul.mubr.f32.gmra.mxu0 %v6084
  %v6157 = vpop.f32.mrf.mxu0
  %v6158 = vadd.f32 0.0, %v6157
  %v6159 = vpop.f32.mrf.mxu0
  %6160 = vdwg.mxu0
  %v6162 = vsel %vm4755, %v5102, 0
  %v6165 = vsel %vm4755, %v5103, 0
  %6167 = vmatprep.subr.mxu0 0.0
  %6168 = vmatpush1.msra.mxu0 0.0
  %6169 = vmatprep.subr.mxu0 0.0
  %6170 = vmatpush1.msra.mxu0 0.0
  %6171 = vmatprep.subr.mxu0 0.0
  %6172 = vmatpush1.msra.mxu0 0.0
  %6173 = vmatprep.subr.mxu0 0.0
  %6174 = vmatpush1.msra.mxu0 0.0
  %6175 = vmatprep.subr.mxu0 0.0
  %6176 = vmatpush1.msra.mxu0 0.0
  %6177 = vmatprep.subr.mxu0 0.0
  %6178 = vmatpush1.msra.mxu0 0.0
  %6179 = vmatprep.subr.mxu0 0.0
  %6180 = vmatpush1.msra.mxu0 0.0
  %6181 = vmatprep.subr.mxu0 0.0
  %6182 = vmatpush1.msra.mxu0 0.0
  %6183 = vmatprep.subr.mxu0 0.0
  %6184 = vmatpush1.msra.mxu0 0.0
  %6185 = vmatprep.subr.mxu0 0.0
  %6186 = vmatpush1.msra.mxu0 0.0
  %6187 = vmatprep.subr.mxu0 0.0
  %6188 = vmatpush1.msra.mxu0 0.0
  %6189 = vmatprep.subr.mxu0 0.0
  %6190 = vmatpush1.msra.mxu0 0.0
  %6191 = vmatprep.subr.mxu0 0.0
  %6192 = vmatpush1.msra.mxu0 0.0
  %6193 = vmatprep.subr.mxu0 0.0
  %6194 = vmatpush1.msra.mxu0 0.0
  %6195 = vmatprep.subr.mxu0 0.0
  %6196 = vmatpush1.msra.mxu0 %v3313
  %6197 = vmatprep.subr.mxu0 0.0
  %6198 = vmatpush1.msra.mxu0 %v3311
  %6199 = vmatprep.subr.mxu0 0.0
  %6200 = vmatpush2.msra.mxu0 0.0
  %6201 = vmatprep.subr.mxu0 0.0
  %6202 = vmatpush2.msra.mxu0 0.0
  %6203 = vmatprep.subr.mxu0 0.0
  %6204 = vmatpush2.msra.mxu0 0.0
  %6205 = vmatprep.subr.mxu0 0.0
  %6206 = vmatpush2.msra.mxu0 0.0
  %6207 = vmatprep.subr.mxu0 0.0
  %6208 = vmatpush2.msra.mxu0 0.0
  %6209 = vmatprep.subr.mxu0 0.0
  %6210 = vmatpush2.msra.mxu0 0.0
  %6211 = vmatprep.subr.mxu0 0.0
  %6212 = vmatpush2.msra.mxu0 0.0
  %6213 = vmatprep.subr.mxu0 0.0
  %6214 = vmatpush2.msra.mxu0 0.0
  %6215 = vmatprep.subr.mxu0 0.0
  %6216 = vmatpush2.msra.mxu0 0.0
  %6217 = vmatprep.subr.mxu0 0.0
  %6218 = vmatpush2.msra.mxu0 0.0
  %6219 = vmatprep.subr.mxu0 0.0
  %6220 = vmatpush2.msra.mxu0 0.0
  %6221 = vmatprep.subr.mxu0 0.0
  %6222 = vmatpush2.msra.mxu0 0.0
  %6223 = vmatprep.subr.mxu0 0.0
  %6224 = vmatpush2.msra.mxu0 0.0
  %6225 = vmatprep.subr.mxu0 0.0
  %6226 = vmatpush2.msra.mxu0 0.0
  %6227 = vmatprep.subr.mxu0 0.0
  %6228 = vmatpush2.msra.mxu0 0.0
  %6229 = vmatprep.subr.mxu0 0.0
  %6230 = vmatpush2.msra.mxu0 0.0
  %6231 = vmatprep.mubr.f32.mxu0 0.0
  %6232 = vmatmul.mubr.f32.gmra.mxu0 %v6162
  %v6233 = vpop.f32.mrf.mxu0
  %v6234 = vadd.f32 0.0, %v6233
  %v6235 = vpop.f32.mrf.mxu0
  %6236 = vmatprep.mubr.f32.mxu0 0.0
  %6237 = vmatmul.mubr.f32.gmra.mxu0 %v6165
  %v6238 = vpop.f32.mrf.mxu0
  %v6239 = vadd.f32 0.0, %v6238
  %v6240 = vpop.f32.mrf.mxu0
  %6241 = vdwg.mxu0
  %v6243 = vsel %vm4755, %v5104, 0
  %v6246 = vsel %vm4755, %v5105, 0
  %6248 = vmatprep.subr.mxu0 0.0
  %6249 = vmatpush1.msra.mxu0 0.0
  %6250 = vmatprep.subr.mxu0 0.0
  %6251 = vmatpush1.msra.mxu0 0.0
  %6252 = vmatprep.subr.mxu0 0.0
  %6253 = vmatpush1.msra.mxu0 0.0
  %6254 = vmatprep.subr.mxu0 0.0
  %6255 = vmatpush1.msra.mxu0 0.0
  %6256 = vmatprep.subr.mxu0 0.0
  %6257 = vmatpush1.msra.mxu0 0.0
  %6258 = vmatprep.subr.mxu0 0.0
  %6259 = vmatpush1.msra.mxu0 0.0
  %6260 = vmatprep.subr.mxu0 0.0
  %6261 = vmatpush1.msra.mxu0 0.0
  %6262 = vmatprep.subr.mxu0 0.0
  %6263 = vmatpush1.msra.mxu0 0.0
  %6264 = vmatprep.subr.mxu0 0.0
  %6265 = vmatpush1.msra.mxu0 0.0
  %6266 = vmatprep.subr.mxu0 0.0
  %6267 = vmatpush1.msra.mxu0 0.0
  %6268 = vmatprep.subr.mxu0 0.0
  %6269 = vmatpush1.msra.mxu0 0.0
  %6270 = vmatprep.subr.mxu0 0.0
  %6271 = vmatpush1.msra.mxu0 0.0
  %6272 = vmatprep.subr.mxu0 0.0
  %6273 = vmatpush1.msra.mxu0 0.0
  %6274 = vmatprep.subr.mxu0 0.0
  %6275 = vmatpush1.msra.mxu0 0.0
  %6276 = vmatprep.subr.mxu0 0.0
  %6277 = vmatpush1.msra.mxu0 %v3321
  %6278 = vmatprep.subr.mxu0 0.0
  %6279 = vmatpush1.msra.mxu0 %v3319
  %6280 = vmatprep.subr.mxu0 0.0
  %6281 = vmatpush2.msra.mxu0 0.0
  %6282 = vmatprep.subr.mxu0 0.0
  %6283 = vmatpush2.msra.mxu0 0.0
  %6284 = vmatprep.subr.mxu0 0.0
  %6285 = vmatpush2.msra.mxu0 0.0
  %6286 = vmatprep.subr.mxu0 0.0
  %6287 = vmatpush2.msra.mxu0 0.0
  %6288 = vmatprep.subr.mxu0 0.0
  %6289 = vmatpush2.msra.mxu0 0.0
  %6290 = vmatprep.subr.mxu0 0.0
  %6291 = vmatpush2.msra.mxu0 0.0
  %6292 = vmatprep.subr.mxu0 0.0
  %6293 = vmatpush2.msra.mxu0 0.0
  %6294 = vmatprep.subr.mxu0 0.0
  %6295 = vmatpush2.msra.mxu0 0.0
  %6296 = vmatprep.subr.mxu0 0.0
  %6297 = vmatpush2.msra.mxu0 0.0
  %6298 = vmatprep.subr.mxu0 0.0
  %6299 = vmatpush2.msra.mxu0 0.0
  %6300 = vmatprep.subr.mxu0 0.0
  %6301 = vmatpush2.msra.mxu0 0.0
  %6302 = vmatprep.subr.mxu0 0.0
  %6303 = vmatpush2.msra.mxu0 0.0
  %6304 = vmatprep.subr.mxu0 0.0
  %6305 = vmatpush2.msra.mxu0 0.0
  %6306 = vmatprep.subr.mxu0 0.0
  %6307 = vmatpush2.msra.mxu0 0.0
  %6308 = vmatprep.subr.mxu0 0.0
  %6309 = vmatpush2.msra.mxu0 0.0
  %6310 = vmatprep.subr.mxu0 0.0
  %6311 = vmatpush2.msra.mxu0 0.0
  %6312 = vmatprep.mubr.f32.mxu0 0.0
  %6313 = vmatmul.mubr.f32.gmra.mxu0 %v6243
  %v6314 = vpop.f32.mrf.mxu0
  %v6315 = vadd.f32 0.0, %v6314
  %v6316 = vpop.f32.mrf.mxu0
  %6317 = vmatprep.mubr.f32.mxu0 0.0
  %6318 = vmatmul.mubr.f32.gmra.mxu0 %v6246
  %v6319 = vpop.f32.mrf.mxu0
  %v6320 = vadd.f32 0.0, %v6319
  %v6321 = vpop.f32.mrf.mxu0
  %6322 = vdwg.mxu0
  %v6324 = vsel %vm4755, %v5106, 0
  %v6327 = vsel %vm4755, %v5107, 0
  %6329 = vmatprep.subr.mxu0 0.0
  %6330 = vmatpush1.msra.mxu0 0.0
  %6331 = vmatprep.subr.mxu0 0.0
  %6332 = vmatpush1.msra.mxu0 0.0
  %6333 = vmatprep.subr.mxu0 0.0
  %6334 = vmatpush1.msra.mxu0 0.0
  %6335 = vmatprep.subr.mxu0 0.0
  %6336 = vmatpush1.msra.mxu0 0.0
  %6337 = vmatprep.subr.mxu0 0.0
  %6338 = vmatpush1.msra.mxu0 0.0
  %6339 = vmatprep.subr.mxu0 0.0
  %6340 = vmatpush1.msra.mxu0 0.0
  %6341 = vmatprep.subr.mxu0 0.0
  %6342 = vmatpush1.msra.mxu0 0.0
  %6343 = vmatprep.subr.mxu0 0.0
  %6344 = vmatpush1.msra.mxu0 0.0
  %6345 = vmatprep.subr.mxu0 0.0
  %6346 = vmatpush1.msra.mxu0 0.0
  %6347 = vmatprep.subr.mxu0 0.0
  %6348 = vmatpush1.msra.mxu0 0.0
  %6349 = vmatprep.subr.mxu0 0.0
  %6350 = vmatpush1.msra.mxu0 0.0
  %6351 = vmatprep.subr.mxu0 0.0
  %6352 = vmatpush1.msra.mxu0 0.0
  %6353 = vmatprep.subr.mxu0 0.0
  %6354 = vmatpush1.msra.mxu0 0.0
  %6355 = vmatprep.subr.mxu0 0.0
  %6356 = vmatpush1.msra.mxu0 0.0
  %6357 = vmatprep.subr.mxu0 0.0
  %6358 = vmatpush1.msra.mxu0 %v3325
  %6359 = vmatprep.subr.mxu0 0.0
  %6360 = vmatpush1.msra.mxu0 %v3323
  %6361 = vmatprep.subr.mxu0 0.0
  %6362 = vmatpush2.msra.mxu0 0.0
  %6363 = vmatprep.subr.mxu0 0.0
  %6364 = vmatpush2.msra.mxu0 0.0
  %6365 = vmatprep.subr.mxu0 0.0
  %6366 = vmatpush2.msra.mxu0 0.0
  %6367 = vmatprep.subr.mxu0 0.0
  %6368 = vmatpush2.msra.mxu0 0.0
  %6369 = vmatprep.subr.mxu0 0.0
  %6370 = vmatpush2.msra.mxu0 0.0
  %6371 = vmatprep.subr.mxu0 0.0
  %6372 = vmatpush2.msra.mxu0 0.0
  %6373 = vmatprep.subr.mxu0 0.0
  %6374 = vmatpush2.msra.mxu0 0.0
  %6375 = vmatprep.subr.mxu0 0.0
  %6376 = vmatpush2.msra.mxu0 0.0
  %6377 = vmatprep.subr.mxu0 0.0
  %6378 = vmatpush2.msra.mxu0 0.0
  %6379 = vmatprep.subr.mxu0 0.0
  %6380 = vmatpush2.msra.mxu0 0.0
  %6381 = vmatprep.subr.mxu0 0.0
  %6382 = vmatpush2.msra.mxu0 0.0
  %6383 = vmatprep.subr.mxu0 0.0
  %6384 = vmatpush2.msra.mxu0 0.0
  %6385 = vmatprep.subr.mxu0 0.0
  %6386 = vmatpush2.msra.mxu0 0.0
  %6387 = vmatprep.subr.mxu0 0.0
  %6388 = vmatpush2.msra.mxu0 0.0
  %6389 = vmatprep.subr.mxu0 0.0
  %6390 = vmatpush2.msra.mxu0 0.0
  %6391 = vmatprep.subr.mxu0 0.0
  %6392 = vmatpush2.msra.mxu0 0.0
  %6393 = vmatprep.mubr.f32.mxu0 0.0
  %6394 = vmatmul.mubr.f32.gmra.mxu0 %v6324
  %v6395 = vpop.f32.mrf.mxu0
  %v6396 = vadd.f32 0.0, %v6395
  %v6397 = vpop.f32.mrf.mxu0
  %6398 = vmatprep.mubr.f32.mxu0 0.0
  %6399 = vmatmul.mubr.f32.gmra.mxu0 %v6327
  %v6400 = vpop.f32.mrf.mxu0
  %v6401 = vadd.f32 0.0, %v6400
  %v6402 = vpop.f32.mrf.mxu0
  %6403 = vdwg.mxu0
  %6408 = vrot.lane.b32.xlu0 %v5343, 8
  %v6409 = vpop.permute.xlu0 %6408
  %6410 = vrot.lane.b32.xlu0 %v5348, 8
  %v6411 = vpop.permute.xlu0 %6410
  %6412 = vrot.lane.b32.xlu0 %v5424, 8
  %v6413 = vpop.permute.xlu0 %6412
  %6414 = vrot.lane.b32.xlu0 %v5429, 8
  %v6415 = vpop.permute.xlu0 %6414
  %6424 = vrot.lane.b32.xlu0 %v5505, 16
  %v6425 = vpop.permute.xlu0 %6424
  %6426 = vrot.lane.b32.xlu0 %v5510, 16
  %v6427 = vpop.permute.xlu0 %6426
  %6428 = vrot.lane.b32.xlu0 %v5586, 16
  %v6429 = vpop.permute.xlu0 %6428
  %6430 = vrot.lane.b32.xlu0 %v5591, 16
  %v6431 = vpop.permute.xlu0 %6430
  %6440 = vrot.lane.b32.xlu0 %v5667, 24
  %v6441 = vpop.permute.xlu0 %6440
  %6442 = vrot.lane.b32.xlu0 %v5672, 24
  %v6443 = vpop.permute.xlu0 %6442
  %6444 = vrot.lane.b32.xlu0 %v5748, 24
  %v6445 = vpop.permute.xlu0 %6444
  %6446 = vrot.lane.b32.xlu0 %v5753, 24
  %v6447 = vpop.permute.xlu0 %6446
  %6456 = vrot.lane.b32.xlu0 %v5829, 32
  %v6457 = vpop.permute.xlu0 %6456
  %6458 = vrot.lane.b32.xlu0 %v5834, 32
  %v6459 = vpop.permute.xlu0 %6458
  %6460 = vrot.lane.b32.xlu0 %v5910, 32
  %v6461 = vpop.permute.xlu0 %6460
  %6462 = vrot.lane.b32.xlu0 %v5915, 32
  %v6463 = vpop.permute.xlu0 %6462
  %6472 = vrot.lane.b32.xlu0 %v5991, 40
  %v6473 = vpop.permute.xlu0 %6472
  %6474 = vrot.lane.b32.xlu0 %v5996, 40
  %v6475 = vpop.permute.xlu0 %6474
  %6476 = vrot.lane.b32.xlu0 %v6072, 40
  %v6477 = vpop.permute.xlu0 %6476
  %6478 = vrot.lane.b32.xlu0 %v6077, 40
  %v6479 = vpop.permute.xlu0 %6478
  %6488 = vrot.lane.b32.xlu0 %v6153, 48
  %v6489 = vpop.permute.xlu0 %6488
  %6490 = vrot.lane.b32.xlu0 %v6158, 48
  %v6491 = vpop.permute.xlu0 %6490
  %6492 = vrot.lane.b32.xlu0 %v6234, 48
  %v6493 = vpop.permute.xlu0 %6492
  %6494 = vrot.lane.b32.xlu0 %v6239, 48
  %v6495 = vpop.permute.xlu0 %6494
  %6504 = vrot.lane.b32.xlu0 %v6315, 56
  %v6505 = vpop.permute.xlu0 %6504
  %6506 = vrot.lane.b32.xlu0 %v6320, 56
  %v6507 = vpop.permute.xlu0 %6506
  %6508 = vrot.lane.b32.xlu0 %v6396, 56
  %v6509 = vpop.permute.xlu0 %6508
  %6510 = vrot.lane.b32.xlu0 %v6401, 56
  %v6511 = vpop.permute.xlu0 %6510
  %v6516 = vsel %vm3334, %v5181, %v6409
  %v6517 = vsel %vm3334, %v5186, %v6411
  %v6518 = vsel %vm3334, %v5262, %v6413
  %v6519 = vsel %vm3334, %v5267, %v6415
  %v6520 = vsel %vm4755, %v6516, %v6425
  %v6521 = vsel %vm4755, %v6517, %v6427
  %v6522 = vsel %vm4755, %v6518, %v6429
  %v6523 = vsel %vm4755, %v6519, %v6431
  %vm6524 = vcmask 195584
  %v6525 = vsel %vm6524, %v6520, %v6441
  %v6526 = vsel %vm6524, %v6521, %v6443
  %v6527 = vsel %vm6524, %v6522, %v6445
  %v6528 = vsel %vm6524, %v6523, %v6447
  %v6529 = vsel %vm2039, %v6525, %v6457
  %v6530 = vsel %vm2039, %v6526, %v6459
  %v6531 = vsel %vm2039, %v6527, %v6461
  %v6532 = vsel %vm2039, %v6528, %v6463
  %vm6533 = vcmask 326656
  %v6534 = vsel %vm6533, %v6529, %v6473
  %v6535 = vsel %vm6533, %v6530, %v6475
  %v6536 = vsel %vm6533, %v6531, %v6477
  %v6537 = vsel %vm6533, %v6532, %v6479
  %vm6538 = vcmask 392192
  %v6539 = vsel %vm6538, %v6534, %v6489
  %v6540 = vsel %vm6538, %v6535, %v6491
  %v6541 = vsel %vm6538, %v6536, %v6493
  %v6542 = vsel %vm6538, %v6537, %v6495
  %vm6543 = vcmask 457728
  %v6544 = vsel %vm6543, %v6539, %v6505
  %v6545 = vsel %vm6543, %v6540, %v6507
  %v6546 = vsel %vm6543, %v6541, %v6509
  %v6547 = vsel %vm6543, %v6542, %v6511
  %v6548 = vld [vmem:[%s5] sm:$0xff]
  %v6549 = vld [vmem:[%s5 + $0x8] sm:$0xff]
  %v6550 = vld [vmem:[%s5 + $0x10] sm:$0xff]
  %v6551 = vld [vmem:[%s5 + $0x18] sm:$0xff]
  %v6552 = vld [vmem:[%s5 + $0x20] sm:$0xff]
  %v6553 = vld [vmem:[%s5 + $0x28] sm:$0xff]
  %v6554 = vld [vmem:[%s5 + $0x30] sm:$0xff]
  %v6555 = vld [vmem:[%s5 + $0x38] sm:$0xff]
  %v6556 = vld [vmem:[%s6] sm:$0x1]
  %v6558 = vlaneseq
  %v6559 = vshrl.u32 %v6558, 7
  %v6560 = vsub.s32 0, %v6559
  %v6561 = vrot.slane %v6556, %v6560
  %v6564 = vsel %vm3080, %v6544, 0
  %v6567 = vsel %vm3080, %v6545, 0
  %v6570 = vsel %vm3080, %v6546, 0
  %v6573 = vsel %vm3080, %v6547, 0
  %6575 = vmatprep.subr.mxu0 0.0
  %6576 = vmatpush1.msra.mxu0 0.0
  %6577 = vmatprep.subr.mxu0 0.0
  %6578 = vmatpush1.msra.mxu0 0.0
  %6579 = vmatprep.subr.mxu0 0.0
  %6580 = vmatpush1.msra.mxu0 0.0
  %6581 = vmatprep.subr.mxu0 0.0
  %6582 = vmatpush1.msra.mxu0 0.0
  %6583 = vmatprep.subr.mxu0 0.0
  %6584 = vmatpush1.msra.mxu0 0.0
  %6585 = vmatprep.subr.mxu0 0.0
  %6586 = vmatpush1.msra.mxu0 0.0
  %6587 = vmatprep.subr.mxu0 0.0
  %6588 = vmatpush1.msra.mxu0 0.0
  %6589 = vmatprep.subr.mxu0 0.0
  %6590 = vmatpush1.msra.mxu0 0.0
  %6591 = vmatprep.subr.mxu0 0.0
  %6592 = vmatpush1.msra.mxu0 %v6555
  %6593 = vmatprep.subr.mxu0 0.0
  %6594 = vmatpush1.msra.mxu0 %v6554
  %6595 = vmatprep.subr.mxu0 0.0
  %6596 = vmatpush1.msra.mxu0 %v6553
  %6597 = vmatprep.subr.mxu0 0.0
  %6598 = vmatpush1.msra.mxu0 %v6552
  %6599 = vmatprep.subr.mxu0 0.0
  %6600 = vmatpush1.msra.mxu0 %v6551
  %6601 = vmatprep.subr.mxu0 0.0
  %6602 = vmatpush1.msra.mxu0 %v6550
  %6603 = vmatprep.subr.mxu0 0.0
  %6604 = vmatpush1.msra.mxu0 %v6549
  %6605 = vmatprep.subr.mxu0 0.0
  %6606 = vmatpush1.msra.mxu0 %v6548
  %6607 = vmatprep.subr.mxu0 0.0
  %6608 = vmatpush2.msra.mxu0 0.0
  %6609 = vmatprep.subr.mxu0 0.0
  %6610 = vmatpush2.msra.mxu0 0.0
  %6611 = vmatprep.subr.mxu0 0.0
  %6612 = vmatpush2.msra.mxu0 0.0
  %6613 = vmatprep.subr.mxu0 0.0
  %6614 = vmatpush2.msra.mxu0 0.0
  %6615 = vmatprep.subr.mxu0 0.0
  %6616 = vmatpush2.msra.mxu0 0.0
  %6617 = vmatprep.subr.mxu0 0.0
  %6618 = vmatpush2.msra.mxu0 0.0
  %6619 = vmatprep.subr.mxu0 0.0
  %6620 = vmatpush2.msra.mxu0 0.0
  %6621 = vmatprep.subr.mxu0 0.0
  %6622 = vmatpush2.msra.mxu0 0.0
  %6623 = vmatprep.subr.mxu0 0.0
  %6624 = vmatpush2.msra.mxu0 0.0
  %6625 = vmatprep.subr.mxu0 0.0
  %6626 = vmatpush2.msra.mxu0 0.0
  %6627 = vmatprep.subr.mxu0 0.0
  %6628 = vmatpush2.msra.mxu0 0.0
  %6629 = vmatprep.subr.mxu0 0.0
  %6630 = vmatpush2.msra.mxu0 0.0
  %6631 = vmatprep.subr.mxu0 0.0
  %6632 = vmatpush2.msra.mxu0 0.0
  %6633 = vmatprep.subr.mxu0 0.0
  %6634 = vmatpush2.msra.mxu0 0.0
  %6635 = vmatprep.subr.mxu0 0.0
  %6636 = vmatpush2.msra.mxu0 0.0
  %6637 = vmatprep.subr.mxu0 0.0
  %6638 = vmatpush2.msra.mxu0 0.0
  %6639 = vmatprep.mubr.f32.mxu0 0.0
  %6640 = vmatmul.mubr.f32.gmra.mxu0 %v6564
  %v6641 = vpop.f32.mrf.mxu0
  %v6642 = vadd.f32 %v6561, %v6641
  %v6643 = vpop.f32.mrf.mxu0
  %6644 = vmatprep.mubr.f32.mxu0 0.0
  %6645 = vmatmul.mubr.f32.gmra.mxu0 %v6567
  %v6646 = vpop.f32.mrf.mxu0
  %v6647 = vadd.f32 %v6561, %v6646
  %v6648 = vpop.f32.mrf.mxu0
  %6649 = vmatprep.mubr.f32.mxu0 0.0
  %6650 = vmatmul.mubr.f32.gmra.mxu0 %v6570
  %v6651 = vpop.f32.mrf.mxu0
  %v6652 = vadd.f32 %v6561, %v6651
  %v6653 = vpop.f32.mrf.mxu0
  %6654 = vmatprep.mubr.f32.mxu0 0.0
  %6655 = vmatmul.mubr.f32.gmra.mxu0 %v6573
  %v6656 = vpop.f32.mrf.mxu0
  %v6657 = vadd.f32 %v6561, %v6656
  %v6658 = vpop.f32.mrf.mxu0
  %6659 = vdwg.mxu0
  %v6660 = vsel %vm3080, %v6642, 0.0
  %v6661 = vsel %vm3080, %v6647, 0.0
  %v6662 = vadd.f32 %v6660, %v6661
  %v6663 = vrot.slane %v6662, 4
  %v6664 = vadd.f32 %v6662, %v6663
  %v6665 = vrot.slane %v6664, 2
  %v6666 = vadd.f32 %v6664, %v6665
  %v6667 = vrot.slane %v6666, 1
  %v6668 = vadd.f32 %v6666, %v6667
  %v6669 = vsel %vm3080, %v6652, 0.0
  %v6670 = vsel %vm3080, %v6657, 0.0
  %v6671 = vadd.f32 %v6669, %v6670
  %v6672 = vrot.slane %v6671, 4
  %v6673 = vadd.f32 %v6671, %v6672
  %v6674 = vrot.slane %v6673, 2
  %v6675 = vadd.f32 %v6673, %v6674
  %v6676 = vrot.slane %v6675, 1
  %v6677 = vadd.f32 %v6675, %v6676
  %v6678 = vrcp.pop 16.0
  %v6679 = vmul.f32 %v6668, %v6678
  %v6680 = vmul.f32 %v6677, %v6678
  %v6681 = vsel %vm3080, %v3048, -inf
  %v6682 = vsel %vm3080, %v3049, -inf
  %v6683 = vmax.f32 %v6681, %v6682
  %v6684 = vrot.slane %v6683, 4
  %v6685 = vmax.f32 %v6683, %v6684
  %v6686 = vrot.slane %v6685, 2
  %v6687 = vmax.f32 %v6685, %v6686
  %v6688 = vrot.slane %v6687, 1
  %v6689 = vmax.f32 %v6687, %v6688
  %v6690 = vsel %vm3080, %v3050, -inf
  %v6691 = vsel %vm3080, %v3051, -inf
  %v6692 = vmax.f32 %v6690, %v6691
  %v6693 = vrot.slane %v6692, 4
  %v6694 = vmax.f32 %v6692, %v6693
  %v6695 = vrot.slane %v6694, 2
  %v6696 = vmax.f32 %v6694, %v6695
  %v6697 = vrot.slane %v6696, 1
  %v6698 = vmax.f32 %v6696, %v6697
  %v6699 = vld [vmem:[%s7] sm:$0x3]
  %v6702 = vsel %vm2937, %v6680, %v6679
  %v6706 = vsel %vm2937, %v6698, %v6689
  %6707 = vrot.lane.b32.xlu0 %v6706, 64
  %v6708 = vpop.permute.xlu0 %6707
  %v6710 = vsel %vm3080, %v6702, %v6708
  %v6711 = vld [vmem:[%s8] sm:$0x3]
  %v6713 = vlaneseq
  %v6714 = vshrl.u32 %v6713, 7
  %v6715 = vsub.s32 0, %v6714
  %v6716 = vrot.slane %v6711, %v6715
  %v6717 = vlaneseq
  %v6718 = vshrl.u32 %v6717, 7
  %v6719 = vsub.s32 1, %v6718
  %v6720 = vrot.slane %v6711, %v6719
  %v6723 = vmul.f32 %v6710, %v6716
  %v6724 = vmul.f32 %v6699, %v6720
  %vm6725 = vcmask 1041408
  %v6726 = vsel %vm6725, %v6723, 0.0
  %vm6727 = vcmask 25600
  %v6728 = vsel %vm6727, %v6724, 0.0
  %v6729 = vadd.f32 %v6726, %v6728
  %6730 = vadd.xlane.f32.xlu0 %v6729
  %v6731 = vpop.xlane.xlu0 %6730
  %v6732 = vld [vmem:[#allocation2] sm:$0x1]
  %v6734 = vlaneseq
  %v6735 = vshrl.u32 %v6734, 7
  %v6736 = vsub.s32 0, %v6735
  %v6737 = vrot.slane %v6732, %v6736
  %v6739 = vadd.f32 %v6731, %v6737
  %vm6740 = vcmask 1024
  %6741 = vst.msk [vmem:[%s10] sm:$0x3] %vm6740, %v6739
  // Predicated region
  $region42: #{multi_spec_ext_forward.1} parent=0 // pred_check
    _
  $region43: #{multi_spec_ext_forward.1} parent=0 // pred_check_branch
    %6743 = sbr.rel (0) target = $region45
  $region44: #{multi_spec_ext_forward.1} parent=0 // pred_region
    _
  $region45: #{multi_spec_ext_forward.1} parent=0 // pred_fallthru
    _
  // Predicated region
  $region46: #{multi_spec_ext_forward.1} parent=0 // pred_check
    _
  $region47: #{multi_spec_ext_forward.1} parent=0 // pred_check_branch
    %6745 = sbr.rel (0) target = $region49
  $region48: #{multi_spec_ext_forward.1} parent=0 // pred_region
    _
  $region49: #{multi_spec_ext_forward.1} parent=0 // pred_fallthru
    _

</llo_original>
